<compile_context>
chip_gen: v7x
topology: tpu7x:2x2x1
jax: 0.10.0
libtpu: 0.0.40
codegen_flags: <defaults>
</compile_context>

<pallas_src>
import functools

import jax
import jax.numpy as jnp
import numpy as np
from jax.experimental import pallas as pl
from jax.experimental.pallas import tpu as pltpu

# ----------------------------- model dimensions ------------------------------
N_BATCH = 2
C_IN = 64          # scaled-down stand-in for ResNet-50 layer3 output (=1024)
WIDTH = 32         # bottleneck width          (stand-in for 512)
COUT = WIDTH * 4   # block output channels     (stand-in for 2048)
H_IN = W_IN = 8
NUM_CLASSES = 8
BN_EPS = 1e-5

# derived flattened row counts
RIN0 = N_BATCH * H_IN * W_IN                 # 128 rows entering block 0
H_OUT = W_OUT = (H_IN + 2 - 3) // 2 + 1      # 4
ROUT = N_BATCH * H_OUT * W_OUT               # 32 rows after the stride-2 block

# BN-slab row offsets (rows of the packed (21, 128) f32 gamma/beta slab)
_B0_BN1, _B0_BN2, _B0_BN3, _B0_DOWN = 0, 2, 4, 6
_B1_BASE, _B2_BASE, _FCB_ROW = 8, 14, 20


# --------------------- static selection / pooling matrices --------------------
@functools.lru_cache(maxsize=None)
def _tap_selector_hcat(n, h, w, stride):
    """Horizontally-stacked 0/1 selector for a 3x3 / pad=1 conv:
    S[r, t*rows_in + c] = 1 iff flattened input row c feeds tap t of
    flattened output row r (rows falling into padding stay zero)."""
    ho = (h + 2 - 3) // stride + 1
    wo = (w + 2 - 3) // stride + 1
    rin, rout = n * h * w, n * ho * wo
    s = np.zeros((rout, 9 * rin), np.float32)
    for dh in range(3):
        for dw in range(3):
            t = dh * 3 + dw
            for ni in range(n):
                for oh in range(ho):
                    ih = oh * stride + dh - 1
                    if not 0 <= ih < h:
                        continue
                    for ow in range(wo):
                        iw = ow * stride + dw - 1
                        if 0 <= iw < w:
                            r = (ni * ho + oh) * wo + ow
                            c = (ni * h + ih) * w + iw
                            s[r, t * rin + c] = 1.0
    return s


@functools.lru_cache(maxsize=None)
def _stride_selector(n, h, w, stride):
    """0/1 matrix realizing x[:, ::stride, ::stride, :] on flattened rows."""
    ho = -(-h // stride)
    wo = -(-w // stride)
    s = np.zeros((n * ho * wo, n * h * w), np.float32)
    for ni in range(n):
        for oh in range(ho):
            for ow in range(wo):
                r = (ni * ho + oh) * wo + ow
                c = (ni * h + oh * stride) * w + ow * stride
                s[r, c] = 1.0
    return s


@functools.lru_cache(maxsize=None)
def _pool_matrix(n, hw):
    """Averaging matrix implementing AdaptiveAvgPool2d((1,1)) on flat rows."""
    p = np.zeros((n, n * hw), np.float32)
    for ni in range(n):
        p[ni, ni * hw:(ni + 1) * hw] = 1.0 / hw
    return p


# ------------------------------ fused kernel ----------------------------------
def _mm(a, b):
    # bf16 operands (MXU-native on v5e/v6e/v7x), f32 accumulation.
    return jnp.dot(a.astype(jnp.bfloat16), b.astype(jnp.bfloat16),
                   preferred_element_type=jnp.float32)


def _bn_act(y, g, b, relu, residual=None):
    # Training-mode BatchNorm over all rows (N*H*W positions), biased variance,
    # single pass (E[y^2] - mean^2, clamped at 0), gamma/beta folded into one
    # scale/bias FMA per element.  All statistics math in f32.
    inv_m = 1.0 / y.shape[0]
    s1 = jnp.sum(y, axis=0, keepdims=True)
    s2 = jnp.sum(y * y, axis=0, keepdims=True)
    mean = s1 * inv_m
    var = jnp.maximum(s2 * inv_m - mean * mean, 0.0)   # guard cancellation
    scale = g * jax.lax.rsqrt(var + BN_EPS)            # rsqrt -> EUP slot
    bias = b - mean * scale
    y = y * scale + bias
    if residual is not None:
        y = y + residual
    if relu:
        y = jnp.maximum(y, 0.0)
    return y


def _conv3x3(y, sel, w_cat):
    """Weight-first im2col 3x3 conv (2 matmuls total):
         yw  = y @ [W_0 | ... | W_8]          (rows_in, 9*WIDTH)
         z   = vstack_t yw[:, t*W:(t+1)*W]    (9*rows_in, WIDTH)
         out = S_hcat @ z                     (rows_out, WIDTH),  K = 9*rows_in
    The restack is 9 static lane slices + one sublane concatenate (cheap XLU
    work at these sizes; no dependent MXU add chain)."""
    yw = _mm(y, w_cat)
    z = jnp.concatenate([yw[:, t * WIDTH:(t + 1) * WIDTH] for t in range(9)],
                        axis=0)
    return _mm(sel, z)


def _fused_tail_kernel(x_ref, sel0_ref, sel1_ref, pool_ref, w1d0_ref,
                       w1_12_ref, w2_ref, w3_ref, fcw_ref, bn_ref, o_ref):
    bn = bn_ref[...]                                   # (21, COUT) f32 slab

    def gb(row, width):
        return bn[row:row + 1, :width], bn[row + 1:row + 2, :width]

    x = x_ref[...]                                     # (RIN0, C_IN) bf16
    sel0 = sel0_ref[...]                               # (ROUT, 9*RIN0 + RIN0)
    s_conv0 = sel0[:, :9 * RIN0]                       # block-0 conv selector
    s_down = sel0[:, 9 * RIN0:]                        # stride-2 row selector
    s_conv1 = sel1_ref[...]                            # (ROUT, 9*ROUT)

    # ---- block 0: stride-2 bottleneck with projection shortcut ----
    # fused 1x1: columns [0:COUT] = downsample proj, [COUT:COUT+WIDTH] = conv1
    xw = _mm(x, w1d0_ref[...])                         # (RIN0, COUT + WIDTH)
    g, b = gb(_B0_DOWN, COUT)
    identity = _bn_act(_mm(s_down, xw[:, :COUT]), g, b, relu=False)
    g, b = gb(_B0_BN1, WIDTH)
    y = _bn_act(xw[:, COUT:COUT + WIDTH], g, b, relu=True)           # (RIN0, W)
    g, b = gb(_B0_BN2, WIDTH)
    y = _bn_act(_conv3x3(y, s_conv0, w2_ref[0]), g, b, relu=True)    # (ROUT, W)
    g, b = gb(_B0_BN3, COUT)
    y = _bn_act(_mm(y, w3_ref[0]), g, b, relu=True, residual=identity)

    # ---- blocks 1, 2: stride-1 bottlenecks, identity shortcut ----
    for blk, base in ((1, _B1_BASE), (2, _B2_BASE)):
        identity = y
        g, b = gb(base, WIDTH)
        a = _bn_act(_mm(y, w1_12_ref[blk - 1]), g, b, relu=True)
        g, b = gb(base + 2, WIDTH)
        a = _bn_act(_conv3x3(a, s_conv1, w2_ref[blk]), g, b, relu=True)
        g, b = gb(base + 4, COUT)
        y = _bn_act(_mm(a, w3_ref[blk]), g, b, relu=True, residual=identity)

    # ---- avgpool (averaging-matrix matmul) + flatten + fc ----
    pooled = _mm(pool_ref[...], y)                     # (N, COUT)
    o_ref[...] = (_mm(pooled, fcw_ref[...])
                  + bn[_FCB_ROW:_FCB_ROW + 1, :NUM_CLASSES])


# ------------------------------- pallas wrapper --------------------------------
def _pack_inputs(x_nchw, params):
    """Pack activations, selectors and weights into 10 VMEM slabs."""
    n, c, h, w = x_nchw.shape
    bf = jnp.bfloat16
    x2d = jnp.transpose(x_nchw, (0, 2, 3, 1)).reshape(n * h * w, c).astype(bf)

    # numpy constants -> baked into the jitted executable (no per-call H2D).
    s0 = _tap_selector_hcat(n, h, w, 2)                # (ROUT, 9*RIN0)
    sd = _stride_selector(n, h, w, 2)                  # (ROUT, RIN0)
    s1 = _tap_selector_hcat(n, H_OUT, W_OUT, 1)        # (ROUT, 9*ROUT)
    pm = _pool_matrix(n, H_OUT * W_OUT)                # (N, ROUT)
    sel0 = jnp.asarray(np.concatenate([s0, sd], axis=1), bf)
    sel1 = jnp.asarray(s1, bf)
    pool = jnp.asarray(pm, bf)

    b0, b1, b2 = params["blocks"]
    # fused block-0 1x1 weights: [down_w (64,128) | conv1_w (64,32)]
    w1d0 = jnp.concatenate([b0["down_w"], b0["conv1_w"]], axis=1).astype(bf)
    w1_12 = jnp.stack([b1["conv1_w"], b2["conv1_w"]]).astype(bf)   # (2,128,32)

    def wcat(p):   # (9, WIDTH, WIDTH) tap-major -> (WIDTH, 9*WIDTH)
        return jnp.transpose(p["conv2_w"], (1, 0, 2)).reshape(WIDTH, 9 * WIDTH)

    w2 = jnp.stack([wcat(b0), wcat(b1), wcat(b2)]).astype(bf)      # (3,32,288)
    w3 = jnp.stack([b0["conv3_w"], b1["conv3_w"], b2["conv3_w"]]).astype(bf)
    fcw = params["fc_w"].astype(bf)                                # (128,8)

    def row(v):
        v = v.astype(jnp.float32)
        return jnp.pad(v, (0, COUT - v.shape[0]))

    rows = [row(b0["bn1_g"]), row(b0["bn1_b"]), row(b0["bn2_g"]), row(b0["bn2_b"]),
            row(b0["bn3_g"]), row(b0["bn3_b"]),
            row(b0["down_bn_g"]), row(b0["down_bn_b"])]
    for p in (b1, b2):
        rows += [row(p["bn1_g"]), row(p["bn1_b"]), row(p["bn2_g"]), row(p["bn2_b"]),
                 row(p["bn3_g"]), row(p["bn3_b"])]
    rows.append(row(params["fc_b"]))
    bn = jnp.stack(rows)                                           # (21,128) f32

    return (x2d, sel0, sel1, pool, w1d0, w1_12, w2, w3, fcw, bn)


@jax.jit
def small_resnet50_cutted_forward(x_nchw, params):
    inputs = _pack_inputs(x_nchw, params)
    n = x_nchw.shape[0]

    def mmf(m, k, nn):
        return 2 * m * k * nn

    flops = (mmf(RIN0, C_IN, COUT + WIDTH) + mmf(ROUT, RIN0, COUT)
             + mmf(RIN0, WIDTH, 9 * WIDTH) + mmf(ROUT, 9 * RIN0, WIDTH)
             + mmf(ROUT, WIDTH, COUT)
             + 2 * (mmf(ROUT, COUT, WIDTH) + mmf(ROUT, WIDTH, 9 * WIDTH)
                    + mmf(ROUT, 9 * ROUT, WIDTH) + mmf(ROUT, WIDTH, COUT))
             + mmf(n, ROUT, COUT) + mmf(n, COUT, NUM_CLASSES))
    transcendentals = 2 * (COUT + WIDTH) + 2 * (2 * WIDTH + COUT)   # rsqrt lanes
    bytes_accessed = int(sum(a.size * a.dtype.itemsize for a in inputs)
                         + n * NUM_CLASSES * 4)
    cost = pl.CostEstimate(flops=int(flops), transcendentals=int(transcendentals),
                           bytes_accessed=bytes_accessed)

    vmem = pl.BlockSpec(memory_space=pltpu.MemorySpace.VMEM)
    return pl.pallas_call(
        _fused_tail_kernel,
        out_shape=jax.ShapeDtypeStruct((n, NUM_CLASSES), jnp.float32),
        in_specs=[vmem] * len(inputs),
        out_specs=vmem,
        cost_estimate=cost,
    )(*inputs)


# ----------------------------- pure-JAX reference ------------------------------
def _ref_conv_bn(x2d, wt, gamma, beta, relu, residual=None):
    y = jnp.dot(x2d, wt, preferred_element_type=jnp.float32)
    mean = jnp.mean(y, axis=0, keepdims=True)
    var = jnp.mean((y - mean) ** 2, axis=0, keepdims=True)
    y = ((y - mean) * jax.lax.rsqrt(var + BN_EPS) * gamma.reshape(1, -1)
         + beta.reshape(1, -1))
    if residual is not None:
        y = y + residual
    if relu:
        y = jnp.maximum(y, 0.0)
    return y


def _ref_im2col_3x3(x_nhwc, stride):
    n, h, w, c = x_nhwc.shape
    xp = jnp.pad(x_nhwc, ((0, 0), (1, 1), (1, 1), (0, 0)))
    ho = (h + 2 - 3) // stride + 1
    wo = (w + 2 - 3) // stride + 1
    cols = []
    for dh in range(3):
        for dw in range(3):
            cols.append(
                xp[:, dh:dh + stride * ho:stride, dw:dw + stride * wo:stride, :])
    return jnp.concatenate(cols, axis=-1).reshape(n * ho * wo, 9 * c), ho, wo


def reference_forward(x_nchw, params):
    x = jnp.transpose(x_nchw, (0, 2, 3, 1))              # NCHW -> NHWC
    for i, p in enumerate(params["blocks"]):             # 'layer4'
        stride = 2 if i == 0 else 1
        n, h, w, cin = x.shape
        width = p["conv1_w"].shape[1]
        cout = p["conv3_w"].shape[1]
        y = _ref_conv_bn(x.reshape(n * h * w, cin), p["conv1_w"],
                         p["bn1_g"], p["bn1_b"], relu=True)
        patches, ho, wo = _ref_im2col_3x3(y.reshape(n, h, w, width), stride)
        y = _ref_conv_bn(patches, p["conv2_w"].reshape(9 * width, width),
                         p["bn2_g"], p["bn2_b"], relu=True)
        if i == 0:
            xd = x[:, ::stride, ::stride, :].reshape(n * ho * wo, cin)
            identity = _ref_conv_bn(xd, p["down_w"], p["down_bn_g"],
                                    p["down_bn_b"], relu=False)
        else:
            identity = x.reshape(n * ho * wo, cout)
        y = _ref_conv_bn(y, p["conv3_w"], p["bn3_g"], p["bn3_b"],
                         relu=True, residual=identity)
        x = y.reshape(n, ho, wo, cout)
    n, h, w, c = x.shape
    pooled = jnp.mean(x.reshape(n, h * w, c), axis=1)
    return jnp.dot(pooled, params["fc_w"]) + params["fc_b"].reshape(1, -1)


# --------------------------- deterministic params ------------------------------
def init_params(key):
    def nrm(k, shape, scale):
        return jax.random.normal(k, shape, dtype=jnp.float32) * scale

    blocks = []
    cin = C_IN
    for bidx in range(3):
        k = jax.random.fold_in(key, bidx)
        ks = jax.random.split(k, 12)
        p = {
            "conv1_w": nrm(ks[0], (cin, WIDTH), 1.0 / np.sqrt(cin)),
            "bn1_g": 1.0 + nrm(ks[1], (WIDTH,), 0.1),
            "bn1_b": nrm(ks[2], (WIDTH,), 0.1),
            # 3x3 conv weight stored tap-major: (9, cin=WIDTH, cout=WIDTH)
            "conv2_w": nrm(ks[3], (9, WIDTH, WIDTH), 1.0 / np.sqrt(9 * WIDTH)),
            "bn2_g": 1.0 + nrm(ks[4], (WIDTH,), 0.1),
            "bn2_b": nrm(ks[5], (WIDTH,), 0.1),
            "conv3_w": nrm(ks[6], (WIDTH, COUT), 1.0 / np.sqrt(WIDTH)),
            "bn3_g": 1.0 + nrm(ks[7], (COUT,), 0.1),
            "bn3_b": nrm(ks[8], (COUT,), 0.1),
        }
        if bidx == 0:
            p["down_w"] = nrm(ks[9], (cin, COUT), 1.0 / np.sqrt(cin))
            p["down_bn_g"] = 1.0 + nrm(ks[10], (COUT,), 0.1)
            p["down_bn_b"] = nrm(ks[11], (COUT,), 0.1)
        blocks.append(p)
        cin = COUT

    kw, kb = jax.random.split(jax.random.fold_in(key, 100))
    return {
        "blocks": blocks,
        "fc_w": nrm(kw, (COUT, NUM_CLASSES), 1.0 / np.sqrt(COUT)),
        "fc_b": nrm(kb, (NUM_CLASSES,), 0.1),
    }


# ----------------------------------- main --------------------------------------
if __name__ == "__main__":
    x = jax.random.normal(jax.random.PRNGKey(0),
                          (N_BATCH, C_IN, H_IN, W_IN), dtype=jnp.float32)
    params = init_params(jax.random.PRNGKey(1))

    out = jax.block_until_ready(small_resnet50_cutted_forward(x, params))
    ref = jax.block_until_ready(reference_forward(x, params))

    assert out.shape == (N_BATCH, NUM_CLASSES), out.shape
    assert bool(jnp.all(jnp.isfinite(out)))
    assert np.allclose(np.asarray(out), np.asarray(ref), rtol=5e-2, atol=5e-2)
    print("KERNEL_OK")
</pallas_src>

<mosaic_0001>
module attributes {stable_mosaic.version = 11 : i64} {
  func.func @_fused_tail_kernel(%arg0: memref<128x64xbf16, #tpu.memory_space<vmem>>, %arg1: memref<32x1280xbf16, #tpu.memory_space<vmem>>, %arg2: memref<32x288xbf16, #tpu.memory_space<vmem>>, %arg3: memref<2x32xbf16, #tpu.memory_space<vmem>>, %arg4: memref<64x160xbf16, #tpu.memory_space<vmem>>, %arg5: memref<2x128x32xbf16, #tpu.memory_space<vmem>>, %arg6: memref<3x32x288xbf16, #tpu.memory_space<vmem>>, %arg7: memref<3x32x128xbf16, #tpu.memory_space<vmem>>, %arg8: memref<128x8xbf16, #tpu.memory_space<vmem>>, %arg9: memref<21x128xf32, #tpu.memory_space<vmem>>, %arg10: memref<2x8xf32, #tpu.memory_space<vmem>>) attributes {dimension_semantics = [], scalar_prefetch = 0 : i64, scratch_operands = 0 : i64, tpu.core_type = #tpu.core_type<tc>} {
    %c0 = arith.constant 0 : index
    %c0_0 = arith.constant 0 : index
    %0 = vector.load %arg9[%c0, %c0_0] : memref<21x128xf32, #tpu.memory_space<vmem>>, vector<21x128xf32>
    %c0_1 = arith.constant 0 : index
    %c0_2 = arith.constant 0 : index
    %1 = vector.load %arg0[%c0_1, %c0_2] : memref<128x64xbf16, #tpu.memory_space<vmem>>, vector<128x64xbf16>
    %c0_3 = arith.constant 0 : index
    %c0_4 = arith.constant 0 : index
    %2 = vector.load %arg1[%c0_3, %c0_4] : memref<32x1280xbf16, #tpu.memory_space<vmem>>, vector<32x1280xbf16>
    %3 = vector.extract_strided_slice %2 {offsets = [0, 0], sizes = [32, 1152], strides = [1, 1]} : vector<32x1280xbf16> to vector<32x1152xbf16>
    %4 = vector.extract_strided_slice %2 {offsets = [0, 1152], sizes = [32, 128], strides = [1, 1]} : vector<32x1280xbf16> to vector<32x128xbf16>
    %c0_5 = arith.constant 0 : index
    %c0_6 = arith.constant 0 : index
    %5 = vector.load %arg2[%c0_5, %c0_6] : memref<32x288xbf16, #tpu.memory_space<vmem>>, vector<32x288xbf16>
    %c0_7 = arith.constant 0 : index
    %c0_8 = arith.constant 0 : index
    %6 = vector.load %arg4[%c0_7, %c0_8] : memref<64x160xbf16, #tpu.memory_space<vmem>>, vector<64x160xbf16>
    %cst = arith.constant dense<0.000000e+00> : vector<128x160xf32>
    %7 = tpu.matmul %1, %6, %cst {dimension_numbers = #tpu.dot_dimension_numbers<[1], [0], [0], [1], [0, 0, 1, 1], [], []>} : vector<128x64xbf16>, vector<64x160xbf16>, vector<128x160xf32> -> vector<128x160xf32>
    %8 = vector.extract_strided_slice %0 {offsets = [6, 0], sizes = [1, 128], strides = [1, 1]} : vector<21x128xf32> to vector<1x128xf32>
    %9 = vector.extract_strided_slice %0 {offsets = [7, 0], sizes = [1, 128], strides = [1, 1]} : vector<21x128xf32> to vector<1x128xf32>
    %10 = vector.extract_strided_slice %7 {offsets = [0, 0], sizes = [128, 128], strides = [1, 1]} : vector<128x160xf32> to vector<128x128xf32>
    %11 = arith.truncf %10 : vector<128x128xf32> to vector<128x128xbf16>
    %cst_9 = arith.constant dense<0.000000e+00> : vector<32x128xf32>
    %12 = tpu.matmul %4, %11, %cst_9 {dimension_numbers = #tpu.dot_dimension_numbers<[1], [0], [0], [1], [0, 0, 1, 1], [], []>} : vector<32x128xbf16>, vector<128x128xbf16>, vector<32x128xf32> -> vector<32x128xf32>
    %cst_10 = arith.constant dense<0.000000e+00> : vector<128xf32>
    %13 = vector.multi_reduction <add>, %12, %cst_10 [0] : vector<32x128xf32> to vector<128xf32>
    %14 = vector.shape_cast %13 : vector<128xf32> to vector<1x128xf32>
    %15 = arith.mulf %12, %12 : vector<32x128xf32>
    %cst_11 = arith.constant dense<0.000000e+00> : vector<128xf32>
    %16 = vector.multi_reduction <add>, %15, %cst_11 [0] : vector<32x128xf32> to vector<128xf32>
    %17 = vector.shape_cast %16 : vector<128xf32> to vector<1x128xf32>
    %cst_12 = arith.constant 3.125000e-02 : f32
    %18 = vector.broadcast %cst_12 : f32 to vector<1x128xf32>
    %19 = arith.mulf %14, %18 : vector<1x128xf32>
    %cst_13 = arith.constant 3.125000e-02 : f32
    %20 = vector.broadcast %cst_13 : f32 to vector<1x128xf32>
    %21 = arith.mulf %17, %20 : vector<1x128xf32>
    %22 = arith.mulf %19, %19 : vector<1x128xf32>
    %23 = arith.subf %21, %22 : vector<1x128xf32>
    %cst_14 = arith.constant 0.000000e+00 : f32
    %24 = vector.broadcast %cst_14 : f32 to vector<1x128xf32>
    %25 = arith.maximumf %23, %24 : vector<1x128xf32>
    %cst_15 = arith.constant 9.99999974E-6 : f32
    %26 = vector.broadcast %cst_15 : f32 to vector<1x128xf32>
    %27 = arith.addf %25, %26 : vector<1x128xf32>
    %28 = math.rsqrt %27 : vector<1x128xf32>
    %29 = arith.mulf %8, %28 : vector<1x128xf32>
    %30 = arith.mulf %19, %29 : vector<1x128xf32>
    %31 = arith.subf %9, %30 : vector<1x128xf32>
    %32 = vector.broadcast %29 : vector<1x128xf32> to vector<32x128xf32>
    %33 = arith.mulf %12, %32 : vector<32x128xf32>
    %34 = vector.broadcast %31 : vector<1x128xf32> to vector<32x128xf32>
    %35 = arith.addf %33, %34 : vector<32x128xf32>
    %36 = vector.extract_strided_slice %0 {offsets = [0, 0], sizes = [1, 32], strides = [1, 1]} : vector<21x128xf32> to vector<1x32xf32>
    %37 = vector.extract_strided_slice %0 {offsets = [1, 0], sizes = [1, 32], strides = [1, 1]} : vector<21x128xf32> to vector<1x32xf32>
    %38 = vector.extract_strided_slice %7 {offsets = [0, 128], sizes = [128, 32], strides = [1, 1]} : vector<128x160xf32> to vector<128x32xf32>
    %cst_16 = arith.constant dense<0.000000e+00> : vector<32xf32>
    %39 = vector.multi_reduction <add>, %38, %cst_16 [0] : vector<128x32xf32> to vector<32xf32>
    %40 = vector.shape_cast %39 : vector<32xf32> to vector<1x32xf32>
    %41 = arith.mulf %38, %38 : vector<128x32xf32>
    %cst_17 = arith.constant dense<0.000000e+00> : vector<32xf32>
    %42 = vector.multi_reduction <add>, %41, %cst_17 [0] : vector<128x32xf32> to vector<32xf32>
    %43 = vector.shape_cast %42 : vector<32xf32> to vector<1x32xf32>
    %cst_18 = arith.constant 7.812500e-03 : f32
    %44 = vector.broadcast %cst_18 : f32 to vector<1x32xf32>
    %45 = arith.mulf %40, %44 : vector<1x32xf32>
    %cst_19 = arith.constant 7.812500e-03 : f32
    %46 = vector.broadcast %cst_19 : f32 to vector<1x32xf32>
    %47 = arith.mulf %43, %46 : vector<1x32xf32>
    %48 = arith.mulf %45, %45 : vector<1x32xf32>
    %49 = arith.subf %47, %48 : vector<1x32xf32>
    %cst_20 = arith.constant 0.000000e+00 : f32
    %50 = vector.broadcast %cst_20 : f32 to vector<1x32xf32>
    %51 = arith.maximumf %49, %50 : vector<1x32xf32>
    %cst_21 = arith.constant 9.99999974E-6 : f32
    %52 = vector.broadcast %cst_21 : f32 to vector<1x32xf32>
    %53 = arith.addf %51, %52 : vector<1x32xf32>
    %54 = math.rsqrt %53 : vector<1x32xf32>
    %55 = arith.mulf %36, %54 : vector<1x32xf32>
    %56 = arith.mulf %45, %55 : vector<1x32xf32>
    %57 = arith.subf %37, %56 : vector<1x32xf32>
    %58 = vector.broadcast %55 : vector<1x32xf32> to vector<128x32xf32>
    %59 = arith.mulf %38, %58 : vector<128x32xf32>
    %60 = vector.broadcast %57 : vector<1x32xf32> to vector<128x32xf32>
    %61 = arith.addf %59, %60 : vector<128x32xf32>
    %cst_22 = arith.constant 0.000000e+00 : f32
    %62 = vector.broadcast %cst_22 : f32 to vector<128x32xf32>
    %63 = arith.maximumf %61, %62 : vector<128x32xf32>
    %64 = vector.extract_strided_slice %0 {offsets = [2, 0], sizes = [1, 32], strides = [1, 1]} : vector<21x128xf32> to vector<1x32xf32>
    %65 = vector.extract_strided_slice %0 {offsets = [3, 0], sizes = [1, 32], strides = [1, 1]} : vector<21x128xf32> to vector<1x32xf32>
    %c0_23 = arith.constant 0 : index
    %c0_24 = arith.constant 0 : index
    %c0_25 = arith.constant 0 : index
    %66 = vector.load %arg6[%c0_23, %c0_24, %c0_25] : memref<3x32x288xbf16, #tpu.memory_space<vmem>>, vector<1x32x288xbf16>
    %67 = vector.shape_cast %66 : vector<1x32x288xbf16> to vector<32x288xbf16>
    %68 = arith.truncf %63 : vector<128x32xf32> to vector<128x32xbf16>
    %cst_26 = arith.constant dense<0.000000e+00> : vector<128x288xf32>
    %69 = tpu.matmul %68, %67, %cst_26 {dimension_numbers = #tpu.dot_dimension_numbers<[1], [0], [0], [1], [0, 0, 1, 1], [], []>} : vector<128x32xbf16>, vector<32x288xbf16>, vector<128x288xf32> -> vector<128x288xf32>
    %70 = vector.extract_strided_slice %69 {offsets = [0, 0], sizes = [128, 32], strides = [1, 1]} : vector<128x288xf32> to vector<128x32xf32>
    %71 = vector.extract_strided_slice %69 {offsets = [0, 32], sizes = [128, 32], strides = [1, 1]} : vector<128x288xf32> to vector<128x32xf32>
    %72 = vector.extract_strided_slice %69 {offsets = [0, 64], sizes = [128, 32], strides = [1, 1]} : vector<128x288xf32> to vector<128x32xf32>
    %73 = vector.extract_strided_slice %69 {offsets = [0, 96], sizes = [128, 32], strides = [1, 1]} : vector<128x288xf32> to vector<128x32xf32>
    %74 = vector.extract_strided_slice %69 {offsets = [0, 128], sizes = [128, 32], strides = [1, 1]} : vector<128x288xf32> to vector<128x32xf32>
    %75 = vector.extract_strided_slice %69 {offsets = [0, 160], sizes = [128, 32], strides = [1, 1]} : vector<128x288xf32> to vector<128x32xf32>
    %76 = vector.extract_strided_slice %69 {offsets = [0, 192], sizes = [128, 32], strides = [1, 1]} : vector<128x288xf32> to vector<128x32xf32>
    %77 = vector.extract_strided_slice %69 {offsets = [0, 224], sizes = [128, 32], strides = [1, 1]} : vector<128x288xf32> to vector<128x32xf32>
    %78 = vector.extract_strided_slice %69 {offsets = [0, 256], sizes = [128, 32], strides = [1, 1]} : vector<128x288xf32> to vector<128x32xf32>
    %79 = tpu.concatenate %70, %71, %72, %73, %74, %75, %76, %77, %78 in 0 : vector<128x32xf32>, vector<128x32xf32>, vector<128x32xf32>, vector<128x32xf32>, vector<128x32xf32>, vector<128x32xf32>, vector<128x32xf32>, vector<128x32xf32>, vector<128x32xf32> -> vector<1152x32xf32>
    %80 = arith.truncf %79 : vector<1152x32xf32> to vector<1152x32xbf16>
    %cst_27 = arith.constant dense<0.000000e+00> : vector<32x32xf32>
    %81 = tpu.matmul %3, %80, %cst_27 {dimension_numbers = #tpu.dot_dimension_numbers<[1], [0], [0], [1], [0, 0, 1, 1], [], []>} : vector<32x1152xbf16>, vector<1152x32xbf16>, vector<32x32xf32> -> vector<32x32xf32>
    %cst_28 = arith.constant dense<0.000000e+00> : vector<32xf32>
    %82 = vector.multi_reduction <add>, %81, %cst_28 [0] : vector<32x32xf32> to vector<32xf32>
    %83 = vector.shape_cast %82 : vector<32xf32> to vector<1x32xf32>
    %84 = arith.mulf %81, %81 : vector<32x32xf32>
    %cst_29 = arith.constant dense<0.000000e+00> : vector<32xf32>
    %85 = vector.multi_reduction <add>, %84, %cst_29 [0] : vector<32x32xf32> to vector<32xf32>
    %86 = vector.shape_cast %85 : vector<32xf32> to vector<1x32xf32>
    %cst_30 = arith.constant 3.125000e-02 : f32
    %87 = vector.broadcast %cst_30 : f32 to vector<1x32xf32>
    %88 = arith.mulf %83, %87 : vector<1x32xf32>
    %cst_31 = arith.constant 3.125000e-02 : f32
    %89 = vector.broadcast %cst_31 : f32 to vector<1x32xf32>
    %90 = arith.mulf %86, %89 : vector<1x32xf32>
    %91 = arith.mulf %88, %88 : vector<1x32xf32>
    %92 = arith.subf %90, %91 : vector<1x32xf32>
    %cst_32 = arith.constant 0.000000e+00 : f32
    %93 = vector.broadcast %cst_32 : f32 to vector<1x32xf32>
    %94 = arith.maximumf %92, %93 : vector<1x32xf32>
    %cst_33 = arith.constant 9.99999974E-6 : f32
    %95 = vector.broadcast %cst_33 : f32 to vector<1x32xf32>
    %96 = arith.addf %94, %95 : vector<1x32xf32>
    %97 = math.rsqrt %96 : vector<1x32xf32>
    %98 = arith.mulf %64, %97 : vector<1x32xf32>
    %99 = arith.mulf %88, %98 : vector<1x32xf32>
    %100 = arith.subf %65, %99 : vector<1x32xf32>
    %101 = vector.broadcast %98 : vector<1x32xf32> to vector<32x32xf32>
    %102 = arith.mulf %81, %101 : vector<32x32xf32>
    %103 = vector.broadcast %100 : vector<1x32xf32> to vector<32x32xf32>
    %104 = arith.addf %102, %103 : vector<32x32xf32>
    %cst_34 = arith.constant 0.000000e+00 : f32
    %105 = vector.broadcast %cst_34 : f32 to vector<32x32xf32>
    %106 = arith.maximumf %104, %105 : vector<32x32xf32>
    %107 = vector.extract_strided_slice %0 {offsets = [4, 0], sizes = [1, 128], strides = [1, 1]} : vector<21x128xf32> to vector<1x128xf32>
    %108 = vector.extract_strided_slice %0 {offsets = [5, 0], sizes = [1, 128], strides = [1, 1]} : vector<21x128xf32> to vector<1x128xf32>
    %c0_35 = arith.constant 0 : index
    %c0_36 = arith.constant 0 : index
    %c0_37 = arith.constant 0 : index
    %109 = vector.load %arg7[%c0_35, %c0_36, %c0_37] : memref<3x32x128xbf16, #tpu.memory_space<vmem>>, vector<1x32x128xbf16>
    %110 = vector.shape_cast %109 : vector<1x32x128xbf16> to vector<32x128xbf16>
    %111 = arith.truncf %106 : vector<32x32xf32> to vector<32x32xbf16>
    %cst_38 = arith.constant dense<0.000000e+00> : vector<32x128xf32>
    %112 = tpu.matmul %111, %110, %cst_38 {dimension_numbers = #tpu.dot_dimension_numbers<[1], [0], [0], [1], [0, 0, 1, 1], [], []>} : vector<32x32xbf16>, vector<32x128xbf16>, vector<32x128xf32> -> vector<32x128xf32>
    %cst_39 = arith.constant dense<0.000000e+00> : vector<128xf32>
    %113 = vector.multi_reduction <add>, %112, %cst_39 [0] : vector<32x128xf32> to vector<128xf32>
    %114 = vector.shape_cast %113 : vector<128xf32> to vector<1x128xf32>
    %115 = arith.mulf %112, %112 : vector<32x128xf32>
    %cst_40 = arith.constant dense<0.000000e+00> : vector<128xf32>
    %116 = vector.multi_reduction <add>, %115, %cst_40 [0] : vector<32x128xf32> to vector<128xf32>
    %117 = vector.shape_cast %116 : vector<128xf32> to vector<1x128xf32>
    %cst_41 = arith.constant 3.125000e-02 : f32
    %118 = vector.broadcast %cst_41 : f32 to vector<1x128xf32>
    %119 = arith.mulf %114, %118 : vector<1x128xf32>
    %cst_42 = arith.constant 3.125000e-02 : f32
    %120 = vector.broadcast %cst_42 : f32 to vector<1x128xf32>
    %121 = arith.mulf %117, %120 : vector<1x128xf32>
    %122 = arith.mulf %119, %119 : vector<1x128xf32>
    %123 = arith.subf %121, %122 : vector<1x128xf32>
    %cst_43 = arith.constant 0.000000e+00 : f32
    %124 = vector.broadcast %cst_43 : f32 to vector<1x128xf32>
    %125 = arith.maximumf %123, %124 : vector<1x128xf32>
    %cst_44 = arith.constant 9.99999974E-6 : f32
    %126 = vector.broadcast %cst_44 : f32 to vector<1x128xf32>
    %127 = arith.addf %125, %126 : vector<1x128xf32>
    %128 = math.rsqrt %127 : vector<1x128xf32>
    %129 = arith.mulf %107, %128 : vector<1x128xf32>
    %130 = arith.mulf %119, %129 : vector<1x128xf32>
    %131 = arith.subf %108, %130 : vector<1x128xf32>
    %132 = vector.broadcast %129 : vector<1x128xf32> to vector<32x128xf32>
    %133 = arith.mulf %112, %132 : vector<32x128xf32>
    %134 = vector.broadcast %131 : vector<1x128xf32> to vector<32x128xf32>
    %135 = arith.addf %133, %134 : vector<32x128xf32>
    %136 = arith.addf %135, %35 : vector<32x128xf32>
    %cst_45 = arith.constant 0.000000e+00 : f32
    %137 = vector.broadcast %cst_45 : f32 to vector<32x128xf32>
    %138 = arith.maximumf %136, %137 : vector<32x128xf32>
    %139 = vector.extract_strided_slice %0 {offsets = [8, 0], sizes = [1, 32], strides = [1, 1]} : vector<21x128xf32> to vector<1x32xf32>
    %140 = vector.extract_strided_slice %0 {offsets = [9, 0], sizes = [1, 32], strides = [1, 1]} : vector<21x128xf32> to vector<1x32xf32>
    %c0_46 = arith.constant 0 : index
    %c0_47 = arith.constant 0 : index
    %c0_48 = arith.constant 0 : index
    %141 = vector.load %arg5[%c0_46, %c0_47, %c0_48] : memref<2x128x32xbf16, #tpu.memory_space<vmem>>, vector<1x128x32xbf16>
    %142 = vector.shape_cast %141 : vector<1x128x32xbf16> to vector<128x32xbf16>
    %143 = arith.truncf %138 : vector<32x128xf32> to vector<32x128xbf16>
    %cst_49 = arith.constant dense<0.000000e+00> : vector<32x32xf32>
    %144 = tpu.matmul %143, %142, %cst_49 {dimension_numbers = #tpu.dot_dimension_numbers<[1], [0], [0], [1], [0, 0, 1, 1], [], []>} : vector<32x128xbf16>, vector<128x32xbf16>, vector<32x32xf32> -> vector<32x32xf32>
    %cst_50 = arith.constant dense<0.000000e+00> : vector<32xf32>
    %145 = vector.multi_reduction <add>, %144, %cst_50 [0] : vector<32x32xf32> to vector<32xf32>
    %146 = vector.shape_cast %145 : vector<32xf32> to vector<1x32xf32>
    %147 = arith.mulf %144, %144 : vector<32x32xf32>
    %cst_51 = arith.constant dense<0.000000e+00> : vector<32xf32>
    %148 = vector.multi_reduction <add>, %147, %cst_51 [0] : vector<32x32xf32> to vector<32xf32>
    %149 = vector.shape_cast %148 : vector<32xf32> to vector<1x32xf32>
    %cst_52 = arith.constant 3.125000e-02 : f32
    %150 = vector.broadcast %cst_52 : f32 to vector<1x32xf32>
    %151 = arith.mulf %146, %150 : vector<1x32xf32>
    %cst_53 = arith.constant 3.125000e-02 : f32
    %152 = vector.broadcast %cst_53 : f32 to vector<1x32xf32>
    %153 = arith.mulf %149, %152 : vector<1x32xf32>
    %154 = arith.mulf %151, %151 : vector<1x32xf32>
    %155 = arith.subf %153, %154 : vector<1x32xf32>
    %cst_54 = arith.constant 0.000000e+00 : f32
    %156 = vector.broadcast %cst_54 : f32 to vector<1x32xf32>
    %157 = arith.maximumf %155, %156 : vector<1x32xf32>
    %cst_55 = arith.constant 9.99999974E-6 : f32
    %158 = vector.broadcast %cst_55 : f32 to vector<1x32xf32>
    %159 = arith.addf %157, %158 : vector<1x32xf32>
    %160 = math.rsqrt %159 : vector<1x32xf32>
    %161 = arith.mulf %139, %160 : vector<1x32xf32>
    %162 = arith.mulf %151, %161 : vector<1x32xf32>
    %163 = arith.subf %140, %162 : vector<1x32xf32>
    %164 = vector.broadcast %161 : vector<1x32xf32> to vector<32x32xf32>
    %165 = arith.mulf %144, %164 : vector<32x32xf32>
    %166 = vector.broadcast %163 : vector<1x32xf32> to vector<32x32xf32>
    %167 = arith.addf %165, %166 : vector<32x32xf32>
    %cst_56 = arith.constant 0.000000e+00 : f32
    %168 = vector.broadcast %cst_56 : f32 to vector<32x32xf32>
    %169 = arith.maximumf %167, %168 : vector<32x32xf32>
    %170 = vector.extract_strided_slice %0 {offsets = [10, 0], sizes = [1, 32], strides = [1, 1]} : vector<21x128xf32> to vector<1x32xf32>
    %171 = vector.extract_strided_slice %0 {offsets = [11, 0], sizes = [1, 32], strides = [1, 1]} : vector<21x128xf32> to vector<1x32xf32>
    %c1 = arith.constant 1 : index
    %c0_57 = arith.constant 0 : index
    %c0_58 = arith.constant 0 : index
    %172 = vector.load %arg6[%c1, %c0_57, %c0_58] : memref<3x32x288xbf16, #tpu.memory_space<vmem>>, vector<1x32x288xbf16>
    %173 = vector.shape_cast %172 : vector<1x32x288xbf16> to vector<32x288xbf16>
    %174 = arith.truncf %169 : vector<32x32xf32> to vector<32x32xbf16>
    %cst_59 = arith.constant dense<0.000000e+00> : vector<32x288xf32>
    %175 = tpu.matmul %174, %173, %cst_59 {dimension_numbers = #tpu.dot_dimension_numbers<[1], [0], [0], [1], [0, 0, 1, 1], [], []>} : vector<32x32xbf16>, vector<32x288xbf16>, vector<32x288xf32> -> vector<32x288xf32>
    %176 = vector.extract_strided_slice %175 {offsets = [0, 0], sizes = [32, 32], strides = [1, 1]} : vector<32x288xf32> to vector<32x32xf32>
    %177 = vector.extract_strided_slice %175 {offsets = [0, 32], sizes = [32, 32], strides = [1, 1]} : vector<32x288xf32> to vector<32x32xf32>
    %178 = vector.extract_strided_slice %175 {offsets = [0, 64], sizes = [32, 32], strides = [1, 1]} : vector<32x288xf32> to vector<32x32xf32>
    %179 = vector.extract_strided_slice %175 {offsets = [0, 96], sizes = [32, 32], strides = [1, 1]} : vector<32x288xf32> to vector<32x32xf32>
    %180 = vector.extract_strided_slice %175 {offsets = [0, 128], sizes = [32, 32], strides = [1, 1]} : vector<32x288xf32> to vector<32x32xf32>
    %181 = vector.extract_strided_slice %175 {offsets = [0, 160], sizes = [32, 32], strides = [1, 1]} : vector<32x288xf32> to vector<32x32xf32>
    %182 = vector.extract_strided_slice %175 {offsets = [0, 192], sizes = [32, 32], strides = [1, 1]} : vector<32x288xf32> to vector<32x32xf32>
    %183 = vector.extract_strided_slice %175 {offsets = [0, 224], sizes = [32, 32], strides = [1, 1]} : vector<32x288xf32> to vector<32x32xf32>
    %184 = vector.extract_strided_slice %175 {offsets = [0, 256], sizes = [32, 32], strides = [1, 1]} : vector<32x288xf32> to vector<32x32xf32>
    %185 = tpu.concatenate %176, %177, %178, %179, %180, %181, %182, %183, %184 in 0 : vector<32x32xf32>, vector<32x32xf32>, vector<32x32xf32>, vector<32x32xf32>, vector<32x32xf32>, vector<32x32xf32>, vector<32x32xf32>, vector<32x32xf32>, vector<32x32xf32> -> vector<288x32xf32>
    %186 = arith.truncf %185 : vector<288x32xf32> to vector<288x32xbf16>
    %cst_60 = arith.constant dense<0.000000e+00> : vector<32x32xf32>
    %187 = tpu.matmul %5, %186, %cst_60 {dimension_numbers = #tpu.dot_dimension_numbers<[1], [0], [0], [1], [0, 0, 1, 1], [], []>} : vector<32x288xbf16>, vector<288x32xbf16>, vector<32x32xf32> -> vector<32x32xf32>
    %cst_61 = arith.constant dense<0.000000e+00> : vector<32xf32>
    %188 = vector.multi_reduction <add>, %187, %cst_61 [0] : vector<32x32xf32> to vector<32xf32>
    %189 = vector.shape_cast %188 : vector<32xf32> to vector<1x32xf32>
    %190 = arith.mulf %187, %187 : vector<32x32xf32>
    %cst_62 = arith.constant dense<0.000000e+00> : vector<32xf32>
    %191 = vector.multi_reduction <add>, %190, %cst_62 [0] : vector<32x32xf32> to vector<32xf32>
    %192 = vector.shape_cast %191 : vector<32xf32> to vector<1x32xf32>
    %cst_63 = arith.constant 3.125000e-02 : f32
    %193 = vector.broadcast %cst_63 : f32 to vector<1x32xf32>
    %194 = arith.mulf %189, %193 : vector<1x32xf32>
    %cst_64 = arith.constant 3.125000e-02 : f32
    %195 = vector.broadcast %cst_64 : f32 to vector<1x32xf32>
    %196 = arith.mulf %192, %195 : vector<1x32xf32>
    %197 = arith.mulf %194, %194 : vector<1x32xf32>
    %198 = arith.subf %196, %197 : vector<1x32xf32>
    %cst_65 = arith.constant 0.000000e+00 : f32
    %199 = vector.broadcast %cst_65 : f32 to vector<1x32xf32>
    %200 = arith.maximumf %198, %199 : vector<1x32xf32>
    %cst_66 = arith.constant 9.99999974E-6 : f32
    %201 = vector.broadcast %cst_66 : f32 to vector<1x32xf32>
    %202 = arith.addf %200, %201 : vector<1x32xf32>
    %203 = math.rsqrt %202 : vector<1x32xf32>
    %204 = arith.mulf %170, %203 : vector<1x32xf32>
    %205 = arith.mulf %194, %204 : vector<1x32xf32>
    %206 = arith.subf %171, %205 : vector<1x32xf32>
    %207 = vector.broadcast %204 : vector<1x32xf32> to vector<32x32xf32>
    %208 = arith.mulf %187, %207 : vector<32x32xf32>
    %209 = vector.broadcast %206 : vector<1x32xf32> to vector<32x32xf32>
    %210 = arith.addf %208, %209 : vector<32x32xf32>
    %cst_67 = arith.constant 0.000000e+00 : f32
    %211 = vector.broadcast %cst_67 : f32 to vector<32x32xf32>
    %212 = arith.maximumf %210, %211 : vector<32x32xf32>
    %213 = vector.extract_strided_slice %0 {offsets = [12, 0], sizes = [1, 128], strides = [1, 1]} : vector<21x128xf32> to vector<1x128xf32>
    %214 = vector.extract_strided_slice %0 {offsets = [13, 0], sizes = [1, 128], strides = [1, 1]} : vector<21x128xf32> to vector<1x128xf32>
    %c1_68 = arith.constant 1 : index
    %c0_69 = arith.constant 0 : index
    %c0_70 = arith.constant 0 : index
    %215 = vector.load %arg7[%c1_68, %c0_69, %c0_70] : memref<3x32x128xbf16, #tpu.memory_space<vmem>>, vector<1x32x128xbf16>
    %216 = vector.shape_cast %215 : vector<1x32x128xbf16> to vector<32x128xbf16>
    %217 = arith.truncf %212 : vector<32x32xf32> to vector<32x32xbf16>
    %cst_71 = arith.constant dense<0.000000e+00> : vector<32x128xf32>
    %218 = tpu.matmul %217, %216, %cst_71 {dimension_numbers = #tpu.dot_dimension_numbers<[1], [0], [0], [1], [0, 0, 1, 1], [], []>} : vector<32x32xbf16>, vector<32x128xbf16>, vector<32x128xf32> -> vector<32x128xf32>
    %cst_72 = arith.constant dense<0.000000e+00> : vector<128xf32>
    %219 = vector.multi_reduction <add>, %218, %cst_72 [0] : vector<32x128xf32> to vector<128xf32>
    %220 = vector.shape_cast %219 : vector<128xf32> to vector<1x128xf32>
    %221 = arith.mulf %218, %218 : vector<32x128xf32>
    %cst_73 = arith.constant dense<0.000000e+00> : vector<128xf32>
    %222 = vector.multi_reduction <add>, %221, %cst_73 [0] : vector<32x128xf32> to vector<128xf32>
    %223 = vector.shape_cast %222 : vector<128xf32> to vector<1x128xf32>
    %cst_74 = arith.constant 3.125000e-02 : f32
    %224 = vector.broadcast %cst_74 : f32 to vector<1x128xf32>
    %225 = arith.mulf %220, %224 : vector<1x128xf32>
    %cst_75 = arith.constant 3.125000e-02 : f32
    %226 = vector.broadcast %cst_75 : f32 to vector<1x128xf32>
    %227 = arith.mulf %223, %226 : vector<1x128xf32>
    %228 = arith.mulf %225, %225 : vector<1x128xf32>
    %229 = arith.subf %227, %228 : vector<1x128xf32>
    %cst_76 = arith.constant 0.000000e+00 : f32
    %230 = vector.broadcast %cst_76 : f32 to vector<1x128xf32>
    %231 = arith.maximumf %229, %230 : vector<1x128xf32>
    %cst_77 = arith.constant 9.99999974E-6 : f32
    %232 = vector.broadcast %cst_77 : f32 to vector<1x128xf32>
    %233 = arith.addf %231, %232 : vector<1x128xf32>
    %234 = math.rsqrt %233 : vector<1x128xf32>
    %235 = arith.mulf %213, %234 : vector<1x128xf32>
    %236 = arith.mulf %225, %235 : vector<1x128xf32>
    %237 = arith.subf %214, %236 : vector<1x128xf32>
    %238 = vector.broadcast %235 : vector<1x128xf32> to vector<32x128xf32>
    %239 = arith.mulf %218, %238 : vector<32x128xf32>
    %240 = vector.broadcast %237 : vector<1x128xf32> to vector<32x128xf32>
    %241 = arith.addf %239, %240 : vector<32x128xf32>
    %242 = arith.addf %241, %138 : vector<32x128xf32>
    %cst_78 = arith.constant 0.000000e+00 : f32
    %243 = vector.broadcast %cst_78 : f32 to vector<32x128xf32>
    %244 = arith.maximumf %242, %243 : vector<32x128xf32>
    %245 = vector.extract_strided_slice %0 {offsets = [14, 0], sizes = [1, 32], strides = [1, 1]} : vector<21x128xf32> to vector<1x32xf32>
    %246 = vector.extract_strided_slice %0 {offsets = [15, 0], sizes = [1, 32], strides = [1, 1]} : vector<21x128xf32> to vector<1x32xf32>
    %c1_79 = arith.constant 1 : index
    %c0_80 = arith.constant 0 : index
    %c0_81 = arith.constant 0 : index
    %247 = vector.load %arg5[%c1_79, %c0_80, %c0_81] : memref<2x128x32xbf16, #tpu.memory_space<vmem>>, vector<1x128x32xbf16>
    %248 = vector.shape_cast %247 : vector<1x128x32xbf16> to vector<128x32xbf16>
    %249 = arith.truncf %244 : vector<32x128xf32> to vector<32x128xbf16>
    %cst_82 = arith.constant dense<0.000000e+00> : vector<32x32xf32>
    %250 = tpu.matmul %249, %248, %cst_82 {dimension_numbers = #tpu.dot_dimension_numbers<[1], [0], [0], [1], [0, 0, 1, 1], [], []>} : vector<32x128xbf16>, vector<128x32xbf16>, vector<32x32xf32> -> vector<32x32xf32>
    %cst_83 = arith.constant dense<0.000000e+00> : vector<32xf32>
    %251 = vector.multi_reduction <add>, %250, %cst_83 [0] : vector<32x32xf32> to vector<32xf32>
    %252 = vector.shape_cast %251 : vector<32xf32> to vector<1x32xf32>
    %253 = arith.mulf %250, %250 : vector<32x32xf32>
    %cst_84 = arith.constant dense<0.000000e+00> : vector<32xf32>
    %254 = vector.multi_reduction <add>, %253, %cst_84 [0] : vector<32x32xf32> to vector<32xf32>
    %255 = vector.shape_cast %254 : vector<32xf32> to vector<1x32xf32>
    %cst_85 = arith.constant 3.125000e-02 : f32
    %256 = vector.broadcast %cst_85 : f32 to vector<1x32xf32>
    %257 = arith.mulf %252, %256 : vector<1x32xf32>
    %cst_86 = arith.constant 3.125000e-02 : f32
    %258 = vector.broadcast %cst_86 : f32 to vector<1x32xf32>
    %259 = arith.mulf %255, %258 : vector<1x32xf32>
    %260 = arith.mulf %257, %257 : vector<1x32xf32>
    %261 = arith.subf %259, %260 : vector<1x32xf32>
    %cst_87 = arith.constant 0.000000e+00 : f32
    %262 = vector.broadcast %cst_87 : f32 to vector<1x32xf32>
    %263 = arith.maximumf %261, %262 : vector<1x32xf32>
    %cst_88 = arith.constant 9.99999974E-6 : f32
    %264 = vector.broadcast %cst_88 : f32 to vector<1x32xf32>
    %265 = arith.addf %263, %264 : vector<1x32xf32>
    %266 = math.rsqrt %265 : vector<1x32xf32>
    %267 = arith.mulf %245, %266 : vector<1x32xf32>
    %268 = arith.mulf %257, %267 : vector<1x32xf32>
    %269 = arith.subf %246, %268 : vector<1x32xf32>
    %270 = vector.broadcast %267 : vector<1x32xf32> to vector<32x32xf32>
    %271 = arith.mulf %250, %270 : vector<32x32xf32>
    %272 = vector.broadcast %269 : vector<1x32xf32> to vector<32x32xf32>
    %273 = arith.addf %271, %272 : vector<32x32xf32>
    %cst_89 = arith.constant 0.000000e+00 : f32
    %274 = vector.broadcast %cst_89 : f32 to vector<32x32xf32>
    %275 = arith.maximumf %273, %274 : vector<32x32xf32>
    %276 = vector.extract_strided_slice %0 {offsets = [16, 0], sizes = [1, 32], strides = [1, 1]} : vector<21x128xf32> to vector<1x32xf32>
    %277 = vector.extract_strided_slice %0 {offsets = [17, 0], sizes = [1, 32], strides = [1, 1]} : vector<21x128xf32> to vector<1x32xf32>
    %c2 = arith.constant 2 : index
    %c0_90 = arith.constant 0 : index
    %c0_91 = arith.constant 0 : index
    %278 = vector.load %arg6[%c2, %c0_90, %c0_91] : memref<3x32x288xbf16, #tpu.memory_space<vmem>>, vector<1x32x288xbf16>
    %279 = vector.shape_cast %278 : vector<1x32x288xbf16> to vector<32x288xbf16>
    %280 = arith.truncf %275 : vector<32x32xf32> to vector<32x32xbf16>
    %cst_92 = arith.constant dense<0.000000e+00> : vector<32x288xf32>
    %281 = tpu.matmul %280, %279, %cst_92 {dimension_numbers = #tpu.dot_dimension_numbers<[1], [0], [0], [1], [0, 0, 1, 1], [], []>} : vector<32x32xbf16>, vector<32x288xbf16>, vector<32x288xf32> -> vector<32x288xf32>
    %282 = vector.extract_strided_slice %281 {offsets = [0, 0], sizes = [32, 32], strides = [1, 1]} : vector<32x288xf32> to vector<32x32xf32>
    %283 = vector.extract_strided_slice %281 {offsets = [0, 32], sizes = [32, 32], strides = [1, 1]} : vector<32x288xf32> to vector<32x32xf32>
    %284 = vector.extract_strided_slice %281 {offsets = [0, 64], sizes = [32, 32], strides = [1, 1]} : vector<32x288xf32> to vector<32x32xf32>
    %285 = vector.extract_strided_slice %281 {offsets = [0, 96], sizes = [32, 32], strides = [1, 1]} : vector<32x288xf32> to vector<32x32xf32>
    %286 = vector.extract_strided_slice %281 {offsets = [0, 128], sizes = [32, 32], strides = [1, 1]} : vector<32x288xf32> to vector<32x32xf32>
    %287 = vector.extract_strided_slice %281 {offsets = [0, 160], sizes = [32, 32], strides = [1, 1]} : vector<32x288xf32> to vector<32x32xf32>
    %288 = vector.extract_strided_slice %281 {offsets = [0, 192], sizes = [32, 32], strides = [1, 1]} : vector<32x288xf32> to vector<32x32xf32>
    %289 = vector.extract_strided_slice %281 {offsets = [0, 224], sizes = [32, 32], strides = [1, 1]} : vector<32x288xf32> to vector<32x32xf32>
    %290 = vector.extract_strided_slice %281 {offsets = [0, 256], sizes = [32, 32], strides = [1, 1]} : vector<32x288xf32> to vector<32x32xf32>
    %291 = tpu.concatenate %282, %283, %284, %285, %286, %287, %288, %289, %290 in 0 : vector<32x32xf32>, vector<32x32xf32>, vector<32x32xf32>, vector<32x32xf32>, vector<32x32xf32>, vector<32x32xf32>, vector<32x32xf32>, vector<32x32xf32>, vector<32x32xf32> -> vector<288x32xf32>
    %292 = arith.truncf %291 : vector<288x32xf32> to vector<288x32xbf16>
    %cst_93 = arith.constant dense<0.000000e+00> : vector<32x32xf32>
    %293 = tpu.matmul %5, %292, %cst_93 {dimension_numbers = #tpu.dot_dimension_numbers<[1], [0], [0], [1], [0, 0, 1, 1], [], []>} : vector<32x288xbf16>, vector<288x32xbf16>, vector<32x32xf32> -> vector<32x32xf32>
    %cst_94 = arith.constant dense<0.000000e+00> : vector<32xf32>
    %294 = vector.multi_reduction <add>, %293, %cst_94 [0] : vector<32x32xf32> to vector<32xf32>
    %295 = vector.shape_cast %294 : vector<32xf32> to vector<1x32xf32>
    %296 = arith.mulf %293, %293 : vector<32x32xf32>
    %cst_95 = arith.constant dense<0.000000e+00> : vector<32xf32>
    %297 = vector.multi_reduction <add>, %296, %cst_95 [0] : vector<32x32xf32> to vector<32xf32>
    %298 = vector.shape_cast %297 : vector<32xf32> to vector<1x32xf32>
    %cst_96 = arith.constant 3.125000e-02 : f32
    %299 = vector.broadcast %cst_96 : f32 to vector<1x32xf32>
    %300 = arith.mulf %295, %299 : vector<1x32xf32>
    %cst_97 = arith.constant 3.125000e-02 : f32
    %301 = vector.broadcast %cst_97 : f32 to vector<1x32xf32>
    %302 = arith.mulf %298, %301 : vector<1x32xf32>
    %303 = arith.mulf %300, %300 : vector<1x32xf32>
    %304 = arith.subf %302, %303 : vector<1x32xf32>
    %cst_98 = arith.constant 0.000000e+00 : f32
    %305 = vector.broadcast %cst_98 : f32 to vector<1x32xf32>
    %306 = arith.maximumf %304, %305 : vector<1x32xf32>
    %cst_99 = arith.constant 9.99999974E-6 : f32
    %307 = vector.broadcast %cst_99 : f32 to vector<1x32xf32>
    %308 = arith.addf %306, %307 : vector<1x32xf32>
    %309 = math.rsqrt %308 : vector<1x32xf32>
    %310 = arith.mulf %276, %309 : vector<1x32xf32>
    %311 = arith.mulf %300, %310 : vector<1x32xf32>
    %312 = arith.subf %277, %311 : vector<1x32xf32>
    %313 = vector.broadcast %310 : vector<1x32xf32> to vector<32x32xf32>
    %314 = arith.mulf %293, %313 : vector<32x32xf32>
    %315 = vector.broadcast %312 : vector<1x32xf32> to vector<32x32xf32>
    %316 = arith.addf %314, %315 : vector<32x32xf32>
    %cst_100 = arith.constant 0.000000e+00 : f32
    %317 = vector.broadcast %cst_100 : f32 to vector<32x32xf32>
    %318 = arith.maximumf %316, %317 : vector<32x32xf32>
    %319 = vector.extract_strided_slice %0 {offsets = [18, 0], sizes = [1, 128], strides = [1, 1]} : vector<21x128xf32> to vector<1x128xf32>
    %320 = vector.extract_strided_slice %0 {offsets = [19, 0], sizes = [1, 128], strides = [1, 1]} : vector<21x128xf32> to vector<1x128xf32>
    %c2_101 = arith.constant 2 : index
    %c0_102 = arith.constant 0 : index
    %c0_103 = arith.constant 0 : index
    %321 = vector.load %arg7[%c2_101, %c0_102, %c0_103] : memref<3x32x128xbf16, #tpu.memory_space<vmem>>, vector<1x32x128xbf16>
    %322 = vector.shape_cast %321 : vector<1x32x128xbf16> to vector<32x128xbf16>
    %323 = arith.truncf %318 : vector<32x32xf32> to vector<32x32xbf16>
    %cst_104 = arith.constant dense<0.000000e+00> : vector<32x128xf32>
    %324 = tpu.matmul %323, %322, %cst_104 {dimension_numbers = #tpu.dot_dimension_numbers<[1], [0], [0], [1], [0, 0, 1, 1], [], []>} : vector<32x32xbf16>, vector<32x128xbf16>, vector<32x128xf32> -> vector<32x128xf32>
    %cst_105 = arith.constant dense<0.000000e+00> : vector<128xf32>
    %325 = vector.multi_reduction <add>, %324, %cst_105 [0] : vector<32x128xf32> to vector<128xf32>
    %326 = vector.shape_cast %325 : vector<128xf32> to vector<1x128xf32>
    %327 = arith.mulf %324, %324 : vector<32x128xf32>
    %cst_106 = arith.constant dense<0.000000e+00> : vector<128xf32>
    %328 = vector.multi_reduction <add>, %327, %cst_106 [0] : vector<32x128xf32> to vector<128xf32>
    %329 = vector.shape_cast %328 : vector<128xf32> to vector<1x128xf32>
    %cst_107 = arith.constant 3.125000e-02 : f32
    %330 = vector.broadcast %cst_107 : f32 to vector<1x128xf32>
    %331 = arith.mulf %326, %330 : vector<1x128xf32>
    %cst_108 = arith.constant 3.125000e-02 : f32
    %332 = vector.broadcast %cst_108 : f32 to vector<1x128xf32>
    %333 = arith.mulf %329, %332 : vector<1x128xf32>
    %334 = arith.mulf %331, %331 : vector<1x128xf32>
    %335 = arith.subf %333, %334 : vector<1x128xf32>
    %cst_109 = arith.constant 0.000000e+00 : f32
    %336 = vector.broadcast %cst_109 : f32 to vector<1x128xf32>
    %337 = arith.maximumf %335, %336 : vector<1x128xf32>
    %cst_110 = arith.constant 9.99999974E-6 : f32
    %338 = vector.broadcast %cst_110 : f32 to vector<1x128xf32>
    %339 = arith.addf %337, %338 : vector<1x128xf32>
    %340 = math.rsqrt %339 : vector<1x128xf32>
    %341 = arith.mulf %319, %340 : vector<1x128xf32>
    %342 = arith.mulf %331, %341 : vector<1x128xf32>
    %343 = arith.subf %320, %342 : vector<1x128xf32>
    %344 = vector.broadcast %341 : vector<1x128xf32> to vector<32x128xf32>
    %345 = arith.mulf %324, %344 : vector<32x128xf32>
    %346 = vector.broadcast %343 : vector<1x128xf32> to vector<32x128xf32>
    %347 = arith.addf %345, %346 : vector<32x128xf32>
    %348 = arith.addf %347, %244 : vector<32x128xf32>
    %cst_111 = arith.constant 0.000000e+00 : f32
    %349 = vector.broadcast %cst_111 : f32 to vector<32x128xf32>
    %350 = arith.maximumf %348, %349 : vector<32x128xf32>
    %c0_112 = arith.constant 0 : index
    %c0_113 = arith.constant 0 : index
    %351 = vector.load %arg3[%c0_112, %c0_113] : memref<2x32xbf16, #tpu.memory_space<vmem>>, vector<2x32xbf16>
    %352 = arith.truncf %350 : vector<32x128xf32> to vector<32x128xbf16>
    %cst_114 = arith.constant dense<0.000000e+00> : vector<2x128xf32>
    %353 = tpu.matmul %351, %352, %cst_114 {dimension_numbers = #tpu.dot_dimension_numbers<[1], [0], [0], [1], [0, 0, 1, 1], [], []>} : vector<2x32xbf16>, vector<32x128xbf16>, vector<2x128xf32> -> vector<2x128xf32>
    %c0_115 = arith.constant 0 : index
    %c0_116 = arith.constant 0 : index
    %354 = vector.load %arg8[%c0_115, %c0_116] : memref<128x8xbf16, #tpu.memory_space<vmem>>, vector<128x8xbf16>
    %355 = arith.truncf %353 : vector<2x128xf32> to vector<2x128xbf16>
    %cst_117 = arith.constant dense<0.000000e+00> : vector<2x8xf32>
    %356 = tpu.matmul %355, %354, %cst_117 {dimension_numbers = #tpu.dot_dimension_numbers<[1], [0], [0], [1], [0, 0, 1, 1], [], []>} : vector<2x128xbf16>, vector<128x8xbf16>, vector<2x8xf32> -> vector<2x8xf32>
    %357 = vector.extract_strided_slice %0 {offsets = [20, 0], sizes = [1, 8], strides = [1, 1]} : vector<21x128xf32> to vector<1x8xf32>
    %358 = vector.broadcast %357 : vector<1x8xf32> to vector<2x8xf32>
    %359 = arith.addf %356, %358 : vector<2x8xf32>
    %c0_118 = arith.constant 0 : index
    %c0_119 = arith.constant 0 : index
    %360 = vector.load %arg10[%c0_118, %c0_119] : memref<2x8xf32, #tpu.memory_space<vmem>>, vector<2x8xf32>
    tpu.vector_store %arg10[%c0_118, %c0_119], %359 {strides = array<i32>} : memref<2x8xf32, #tpu.memory_space<vmem>>, vector<2x8xf32>,
    return
  }
}

</mosaic_0001>

<llo_original>
// kernel: small_resnet50_cutted_forward.1
$region0: #{small_resnet50_cutted_forward.1}
  #allocation0 [shape = 'u32[]', space=smem, size = 0x4, offset = 0x4, fixed_abs, tag = 'smem constant byte address 0x4 - core index']
  #allocation1 [shape = 'u32[144,128]{1,0:T(1,128)}', space=vmem, size = 0x12000, scoped, tag = 'internal scratch']
  %s0 = inlined_call_operand.vmem [shape: bf16[128,64], index: 0, kind: input, shape index: {}]
  %s1 = inlined_call_operand.vmem [shape: bf16[32,1280], index: 1, kind: input, shape index: {}]
  %s2 = inlined_call_operand.vmem [shape: bf16[32,288], index: 2, kind: input, shape index: {}]
  %s3 = inlined_call_operand.vmem [shape: bf16[2,32], index: 3, kind: input, shape index: {}]
  %s4 = inlined_call_operand.vmem [shape: bf16[64,160], index: 4, kind: input, shape index: {}]
  %s5 = inlined_call_operand.vmem [shape: bf16[2,128,32], index: 5, kind: input, shape index: {}]
  %s6 = inlined_call_operand.vmem [shape: bf16[3,32,288], index: 6, kind: input, shape index: {}]
  %s7 = inlined_call_operand.vmem [shape: bf16[3,32,128], index: 7, kind: input, shape index: {}]
  %s8 = inlined_call_operand.vmem [shape: bf16[128,8], index: 8, kind: input, shape index: {}]
  %s9 = inlined_call_operand.vmem [shape: f32[21,128], index: 9, kind: input, shape index: {}]
  %s10 = inlined_call_operand.hbm [shape: f32[2,8], index: 10, kind: output, shape index: {}]
  %s11 = sld [smem:[#allocation0]]
  $region50: #{small_resnet50_cutted_forward.1} parent=0
    _
  %s13 = ssub.s32 1, %s11
  %s14 = scalar_select 0, %s13, %s11
  $region1: #{small_resnet50_cutted_forward.1} parent=0
    #allocation2 [shape = 'u8[1024]{0}', space=vmem, size = 0x400, scoped, tag = 'output window, operand 0, single buffered']
    #allocation3 [shape = 's32[1]{0}', space=sflag, size = 0x4, scoped, tag = 'scoped memory for small_resnet50_cutted_forward.1']
    %15 = vsyncpa [#allocation3], 0
    // Predicated region
    $region2: #{small_resnet50_cutted_forward.1} parent=1 // pred_check
      _
    $region3: #{small_resnet50_cutted_forward.1} parent=1 // pred_check_branch
      %17 = sbr.rel (0) target = $region5
    $region4: #{small_resnet50_cutted_forward.1} parent=1 // pred_region
      _
    $region5: #{small_resnet50_cutted_forward.1} parent=1 // pred_fallthru
      _
    // Predicated region
    $region6: #{small_resnet50_cutted_forward.1} parent=1 // pred_check
      _
    $region7: #{small_resnet50_cutted_forward.1} parent=1 // pred_check_branch
      %19 = sbr.rel (0) target = $region9
    $region8: #{small_resnet50_cutted_forward.1} parent=1 // pred_region
      _
    $region9: #{small_resnet50_cutted_forward.1} parent=1 // pred_fallthru
      _
    // Predicated region
    $region10: #{small_resnet50_cutted_forward.1} parent=1 // pred_check
      _
    $region11: #{small_resnet50_cutted_forward.1} parent=1 // pred_check_branch
      %21 = sbr.rel (0) target = $region13
    $region12: #{small_resnet50_cutted_forward.1} parent=1 // pred_region
      _
    $region13: #{small_resnet50_cutted_forward.1} parent=1 // pred_fallthru
      _
    // Predicated region
    $region14: #{small_resnet50_cutted_forward.1} parent=1 // pred_check
      _
    $region15: #{small_resnet50_cutted_forward.1} parent=1 // pred_check_branch
      %23 = sbr.rel (0) target = $region17
    $region16: #{small_resnet50_cutted_forward.1} parent=1 // pred_region
      _
    $region17: #{small_resnet50_cutted_forward.1} parent=1 // pred_fallthru
      _
    // Predicated region
    $region18: #{small_resnet50_cutted_forward.1} parent=1 // pred_check
      _
    $region19: #{small_resnet50_cutted_forward.1} parent=1 // pred_check_branch
      %25 = sbr.rel (0) target = $region21
    $region20: #{small_resnet50_cutted_forward.1} parent=1 // pred_region
      _
    $region21: #{small_resnet50_cutted_forward.1} parent=1 // pred_fallthru
      _
    // Predicated region
    $region22: #{small_resnet50_cutted_forward.1} parent=1 // pred_check
      _
    $region23: #{small_resnet50_cutted_forward.1} parent=1 // pred_check_branch
      %27 = sbr.rel (0) target = $region25
    $region24: #{small_resnet50_cutted_forward.1} parent=1 // pred_region
      _
    $region25: #{small_resnet50_cutted_forward.1} parent=1 // pred_fallthru
      _
    // Predicated region
    $region26: #{small_resnet50_cutted_forward.1} parent=1 // pred_check
      _
    $region27: #{small_resnet50_cutted_forward.1} parent=1 // pred_check_branch
      %29 = sbr.rel (0) target = $region29
    $region28: #{small_resnet50_cutted_forward.1} parent=1 // pred_region
      _
    $region29: #{small_resnet50_cutted_forward.1} parent=1 // pred_fallthru
      _
    // Predicated region
    $region30: #{small_resnet50_cutted_forward.1} parent=1 // pred_check
      _
    $region31: #{small_resnet50_cutted_forward.1} parent=1 // pred_check_branch
      %31 = sbr.rel (0) target = $region33
    $region32: #{small_resnet50_cutted_forward.1} parent=1 // pred_region
      _
    $region33: #{small_resnet50_cutted_forward.1} parent=1 // pred_fallthru
      _
    // Predicated region
    $region34: #{small_resnet50_cutted_forward.1} parent=1 // pred_check
      _
    $region35: #{small_resnet50_cutted_forward.1} parent=1 // pred_check_branch
      %33 = sbr.rel (0) target = $region37
    $region36: #{small_resnet50_cutted_forward.1} parent=1 // pred_region
      _
    $region37: #{small_resnet50_cutted_forward.1} parent=1 // pred_fallthru
      _
    // Predicated region
    $region38: #{small_resnet50_cutted_forward.1} parent=1 // pred_check
      _
    $region39: #{small_resnet50_cutted_forward.1} parent=1 // pred_check_branch
      %35 = sbr.rel (0) target = $region41
    $region40: #{small_resnet50_cutted_forward.1} parent=1 // pred_region
      _
    $region41: #{small_resnet50_cutted_forward.1} parent=1 // pred_fallthru
      _
    %v37 = vld [vmem:[%s9] sm:$0xff]
    %v38 = vld [vmem:[%s9 + $0x8] sm:$0xff]
    %v39 = vld [vmem:[%s9 + $0x10] sm:$0x1f]
    %v40 = vld [vmem:[%s0] sm:$0xf]
    %v41 = vld [vmem:[%s0 + $0x4] sm:$0xf]
    %v42 = vld [vmem:[%s0 + $0x8] sm:$0xf]
    %v43 = vld [vmem:[%s0 + $0xc] sm:$0xf]
    %v44 = vld [vmem:[%s0 + $0x10] sm:$0xf]
    %v45 = vld [vmem:[%s0 + $0x14] sm:$0xf]
    %v46 = vld [vmem:[%s0 + $0x18] sm:$0xf]
    %v47 = vld [vmem:[%s0 + $0x1c] sm:$0xf]
    %v48 = vld [vmem:[%s0 + $0x20] sm:$0xf]
    %v49 = vld [vmem:[%s0 + $0x24] sm:$0xf]
    %v50 = vld [vmem:[%s0 + $0x28] sm:$0xf]
    %v51 = vld [vmem:[%s0 + $0x2c] sm:$0xf]
    %v52 = vld [vmem:[%s0 + $0x30] sm:$0xf]
    %v53 = vld [vmem:[%s0 + $0x34] sm:$0xf]
    %v54 = vld [vmem:[%s0 + $0x38] sm:$0xf]
    %v55 = vld [vmem:[%s0 + $0x3c] sm:$0xf]
    %v56 = vld [vmem:[%s1] sm:$0xff]
    %v57 = vld [vmem:[%s1 + $0x8] sm:$0xff]
    %v58 = vld [vmem:[%s1 + $0x10] sm:$0xff]
    %v59 = vld [vmem:[%s1 + $0x18] sm:$0xff]
    %v60 = vld [vmem:[%s1 + $0x20] sm:$0xff]
    %v61 = vld [vmem:[%s1 + $0x28] sm:$0xff]
    %v62 = vld [vmem:[%s1 + $0x30] sm:$0xff]
    %v63 = vld [vmem:[%s1 + $0x38] sm:$0xff]
    %v64 = vld [vmem:[%s1 + $0x40] sm:$0xff]
    %v65 = vld [vmem:[%s1 + $0x48] sm:$0xff]
    %v66 = vld [vmem:[%s1 + $0x50] sm:$0xff]
    %v67 = vld [vmem:[%s1 + $0x58] sm:$0xff]
    %v68 = vld [vmem:[%s1 + $0x60] sm:$0xff]
    %v69 = vld [vmem:[%s1 + $0x68] sm:$0xff]
    %v70 = vld [vmem:[%s1 + $0x70] sm:$0xff]
    %v71 = vld [vmem:[%s1 + $0x78] sm:$0xff]
    %v72 = vld [vmem:[%s1 + $0x80] sm:$0xff]
    %v73 = vld [vmem:[%s1 + $0x88] sm:$0xff]
    %v74 = vld [vmem:[%s1 + $0x90] sm:$0xff]
    %v75 = vld [vmem:[%s1 + $0x98] sm:$0xff]
    %v76 = vld [vmem:[%s2] sm:$0xff]
    %v77 = vld [vmem:[%s2 + $0x8] sm:$0xf]
    %v78 = vld [vmem:[%s2 + $0xc] sm:$0xff]
    %v79 = vld [vmem:[%s2 + $0x14] sm:$0xf]
    %v80 = vld [vmem:[%s2 + $0x18] sm:$0xff]
    %v81 = vld [vmem:[%s2 + $0x20] sm:$0xf]
    %v82 = vld [vmem:[%s2 + $0x24] sm:$0xff]
    %v83 = vld [vmem:[%s2 + $0x2c] sm:$0xf]
    %v84 = vld [vmem:[%s4] sm:$0xff]
    %v85 = vld [vmem:[%s4 + $0x8] sm:$0xff]
    %v86 = vld [vmem:[%s4 + $0x10] sm:$0xff]
    %v87 = vld [vmem:[%s4 + $0x18] sm:$0xff]
    %v88 = vld [vmem:[%s4 + $0x20] sm:$0xff]
    %v89 = vld [vmem:[%s4 + $0x28] sm:$0xff]
    %v90 = vld [vmem:[%s4 + $0x30] sm:$0xff]
    %v91 = vld [vmem:[%s4 + $0x38] sm:$0xff]
    %v108 = vunpack.c.l.b16 %v40
    %v109 = vunpack.c.l.b16 %v41
    %v110 = vunpack.c.l.b16 %v42
    %v111 = vunpack.c.l.b16 %v43
    %v112 = vunpack.c.l.b16 %v44
    %v113 = vunpack.c.l.b16 %v45
    %v114 = vunpack.c.l.b16 %v46
    %v115 = vunpack.c.l.b16 %v47
    %v116 = vunpack.c.l.b16 %v48
    %v117 = vunpack.c.l.b16 %v49
    %v118 = vunpack.c.l.b16 %v50
    %v119 = vunpack.c.l.b16 %v51
    %v120 = vunpack.c.l.b16 %v52
    %v121 = vunpack.c.l.b16 %v53
    %v122 = vunpack.c.l.b16 %v54
    %v123 = vunpack.c.l.b16 %v55
    %v124 = vpack.c.b16 %v109, %v108
    %v125 = vpack.c.b16 %v111, %v110
    %v126 = vpack.c.b16 %v113, %v112
    %v127 = vpack.c.b16 %v115, %v114
    %v128 = vpack.c.b16 %v117, %v116
    %v129 = vpack.c.b16 %v119, %v118
    %v130 = vpack.c.b16 %v121, %v120
    %v131 = vpack.c.b16 %v123, %v122
    %v140 = vunpack.c.l.b16 %v84
    %v141 = vunpack.c.h.b16 %v84
    %v142 = vunpack.c.l.b16 %v85
    %v143 = vunpack.c.h.b16 %v85
    %v144 = vunpack.c.l.b16 %v86
    %v145 = vunpack.c.h.b16 %v86
    %v146 = vunpack.c.l.b16 %v87
    %v147 = vunpack.c.h.b16 %v87
    %v148 = vunpack.c.l.b16 %v88
    %v149 = vunpack.c.h.b16 %v88
    %v150 = vunpack.c.l.b16 %v89
    %v151 = vunpack.c.h.b16 %v89
    %v152 = vunpack.c.l.b16 %v90
    %v153 = vunpack.c.h.b16 %v90
    %v154 = vunpack.c.l.b16 %v91
    %v155 = vunpack.c.h.b16 %v91
    %v156 = vpack.c.b16 %v142, %v140
    %v157 = vpack.c.b16 %v143, %v141
    %v158 = vpack.c.b16 %v146, %v144
    %v159 = vpack.c.b16 %v147, %v145
    %v160 = vpack.c.b16 %v150, %v148
    %v161 = vpack.c.b16 %v151, %v149
    %v162 = vpack.c.b16 %v154, %v152
    %v163 = vpack.c.b16 %v155, %v153
    %vm172 = vcmask 523264
    %v174 = vsel %vm172, %v124, 0
    %v177 = vsel %vm172, %v125, 0
    %v180 = vsel %vm172, %v126, 0
    %v183 = vsel %vm172, %v127, 0
    %v186 = vsel %vm172, %v128, 0
    %v189 = vsel %vm172, %v129, 0
    %v192 = vsel %vm172, %v130, 0
    %v195 = vsel %vm172, %v131, 0
    %197 = vmatprep.subr.bf16.mxu0 %v157
    %198 = vmatpush1.bf16.msra.mxu0 %v156
    %199 = vmatprep.subr.bf16.mxu0 %v159
    %200 = vmatpush1.bf16.msra.mxu0 %v158
    %201 = vmatprep.subr.bf16.mxu0 %v161
    %202 = vmatpush1.bf16.msra.mxu0 %v160
    %203 = vmatprep.subr.bf16.mxu0 %v163
    %204 = vmatpush1.bf16.msra.mxu0 %v162
    %205 = vmatprep.subr.bf16.mxu0 0
    %206 = vmatpush1.bf16.msra.mxu0 0
    %207 = vmatprep.subr.bf16.mxu0 0
    %208 = vmatpush1.bf16.msra.mxu0 0
    %209 = vmatprep.subr.bf16.mxu0 0
    %210 = vmatpush1.bf16.msra.mxu0 0
    %211 = vmatprep.subr.bf16.mxu0 0
    %212 = vmatpush1.bf16.msra.mxu0 0
    %213 = vmatprep.subr.bf16.mxu0 0
    %214 = vmatpush1.bf16.msra.mxu0 0
    %215 = vmatprep.subr.bf16.mxu0 0
    %216 = vmatpush1.bf16.msra.mxu0 0
    %217 = vmatprep.subr.bf16.mxu0 0
    %218 = vmatpush1.bf16.msra.mxu0 0
    %219 = vmatprep.subr.bf16.mxu0 0
    %220 = vmatpush1.bf16.msra.mxu0 0
    %221 = vmatprep.subr.bf16.mxu0 0
    %222 = vmatpush1.bf16.msra.mxu0 0
    %223 = vmatprep.subr.bf16.mxu0 0
    %224 = vmatpush1.bf16.msra.mxu0 0
    %225 = vmatprep.subr.bf16.mxu0 0
    %226 = vmatpush1.bf16.msra.mxu0 0
    %227 = vmatprep.subr.bf16.mxu0 0
    %228 = vmatpush1.bf16.msra.mxu0 0
    %229 = vmatprep.mubr.bf16.mxu0 0
    %230 = vmatmul.mubr.bf16.gmra.mrb[0].mxu0 %v174
    %v231 = vpop.f32.mrb[0].mxu0
    %v232 = vadd.f32 0.0, %v231
    %v233 = vpop.f32.mrb[0].mxu0
    %v234 = vadd.f32 0.0, %v233
    %v235 = vpop.f32.mrb[0].mxu0
    %v236 = vadd.f32 0.0, %v235
    %v237 = vpop.f32.mrb[0].mxu0
    %v238 = vadd.f32 0.0, %v237
    %239 = vmatprep.mubr.bf16.mxu0 0
    %240 = vmatmul.mubr.bf16.gmra.mrb[0].mxu0 %v177
    %v241 = vpop.f32.mrb[0].mxu0
    %v242 = vadd.f32 0.0, %v241
    %v243 = vpop.f32.mrb[0].mxu0
    %v244 = vadd.f32 0.0, %v243
    %v245 = vpop.f32.mrb[0].mxu0
    %v246 = vadd.f32 0.0, %v245
    %v247 = vpop.f32.mrb[0].mxu0
    %v248 = vadd.f32 0.0, %v247
    %249 = vmatprep.mubr.bf16.mxu0 0
    %250 = vmatmul.mubr.bf16.gmra.mrb[0].mxu0 %v180
    %v251 = vpop.f32.mrb[0].mxu0
    %v252 = vadd.f32 0.0, %v251
    %v253 = vpop.f32.mrb[0].mxu0
    %v254 = vadd.f32 0.0, %v253
    %v255 = vpop.f32.mrb[0].mxu0
    %v256 = vadd.f32 0.0, %v255
    %v257 = vpop.f32.mrb[0].mxu0
    %v258 = vadd.f32 0.0, %v257
    %259 = vmatprep.mubr.bf16.mxu0 0
    %260 = vmatmul.mubr.bf16.gmra.mrb[0].mxu0 %v183
    %v261 = vpop.f32.mrb[0].mxu0
    %v262 = vadd.f32 0.0, %v261
    %v263 = vpop.f32.mrb[0].mxu0
    %v264 = vadd.f32 0.0, %v263
    %v265 = vpop.f32.mrb[0].mxu0
    %v266 = vadd.f32 0.0, %v265
    %v267 = vpop.f32.mrb[0].mxu0
    %v268 = vadd.f32 0.0, %v267
    %269 = vmatprep.mubr.bf16.mxu0 0
    %270 = vmatmul.mubr.bf16.gmra.mrb[0].mxu0 %v186
    %v271 = vpop.f32.mrb[0].mxu0
    %v272 = vadd.f32 0.0, %v271
    %v273 = vpop.f32.mrb[0].mxu0
    %v274 = vadd.f32 0.0, %v273
    %v275 = vpop.f32.mrb[0].mxu0
    %v276 = vadd.f32 0.0, %v275
    %v277 = vpop.f32.mrb[0].mxu0
    %v278 = vadd.f32 0.0, %v277
    %279 = vmatprep.mubr.bf16.mxu0 0
    %280 = vmatmul.mubr.bf16.gmra.mrb[0].mxu0 %v189
    %v281 = vpop.f32.mrb[0].mxu0
    %v282 = vadd.f32 0.0, %v281
    %v283 = vpop.f32.mrb[0].mxu0
    %v284 = vadd.f32 0.0, %v283
    %v285 = vpop.f32.mrb[0].mxu0
    %v286 = vadd.f32 0.0, %v285
    %v287 = vpop.f32.mrb[0].mxu0
    %v288 = vadd.f32 0.0, %v287
    %289 = vmatprep.mubr.bf16.mxu0 0
    %290 = vmatmul.mubr.bf16.gmra.mrb[0].mxu0 %v192
    %v291 = vpop.f32.mrb[0].mxu0
    %v292 = vadd.f32 0.0, %v291
    %v293 = vpop.f32.mrb[0].mxu0
    %v294 = vadd.f32 0.0, %v293
    %v295 = vpop.f32.mrb[0].mxu0
    %v296 = vadd.f32 0.0, %v295
    %v297 = vpop.f32.mrb[0].mxu0
    %v298 = vadd.f32 0.0, %v297
    %299 = vmatprep.mubr.bf16.mxu0 0
    %300 = vmatmul.mubr.bf16.gmra.mrb[0].mxu0 %v195
    %v301 = vpop.f32.mrb[0].mxu0
    %v302 = vadd.f32 0.0, %v301
    %v303 = vpop.f32.mrb[0].mxu0
    %v304 = vadd.f32 0.0, %v303
    %v305 = vpop.f32.mrb[0].mxu0
    %v306 = vadd.f32 0.0, %v305
    %v307 = vpop.f32.mrb[0].mxu0
    %v308 = vadd.f32 0.0, %v307
    %309 = vdwg.mxu0
    %v310 = vpack.c.bf16 %v236, %v232
    %v311 = vpack.c.bf16 %v246, %v242
    %v312 = vpack.c.bf16 %v256, %v252
    %v313 = vpack.c.bf16 %v266, %v262
    %v314 = vpack.c.bf16 %v276, %v272
    %v315 = vpack.c.bf16 %v286, %v282
    %v316 = vpack.c.bf16 %v296, %v292
    %v317 = vpack.c.bf16 %v306, %v302
    %v322 = vunpack.c.h.b16 %v60
    %v323 = vunpack.c.h.b16 %v65
    %v324 = vunpack.c.h.b16 %v70
    %v325 = vunpack.c.h.b16 %v75
    %v326 = vpack.c.b16 %v323, %v322
    %v327 = vpack.c.b16 %v325, %v324
    %330 = vmatprep.subr.bf16.mxu0 0
    %331 = vmatpush1.bf16.msra.mxu0 %v310
    %332 = vmatprep.subr.bf16.mxu0 0
    %333 = vmatpush1.bf16.msra.mxu0 %v311
    %334 = vmatprep.subr.bf16.mxu0 0
    %335 = vmatpush1.bf16.msra.mxu0 %v312
    %336 = vmatprep.subr.bf16.mxu0 0
    %337 = vmatpush1.bf16.msra.mxu0 %v313
    %338 = vmatprep.subr.bf16.mxu0 0
    %339 = vmatpush1.bf16.msra.mxu0 %v314
    %340 = vmatprep.subr.bf16.mxu0 0
    %341 = vmatpush1.bf16.msra.mxu0 %v315
    %342 = vmatprep.subr.bf16.mxu0 0
    %343 = vmatpush1.bf16.msra.mxu0 %v316
    %344 = vmatprep.subr.bf16.mxu0 0
    %345 = vmatpush1.bf16.msra.mxu0 %v317
    %346 = vmatprep.subr.bf16.mxu0 0
    %347 = vmatpush1.bf16.msra.mxu0 0
    %348 = vmatprep.subr.bf16.mxu0 0
    %349 = vmatpush1.bf16.msra.mxu0 0
    %350 = vmatprep.subr.bf16.mxu0 0
    %351 = vmatpush1.bf16.msra.mxu0 0
    %352 = vmatprep.subr.bf16.mxu0 0
    %353 = vmatpush1.bf16.msra.mxu0 0
    %354 = vmatprep.subr.bf16.mxu0 0
    %355 = vmatpush1.bf16.msra.mxu0 0
    %356 = vmatprep.subr.bf16.mxu0 0
    %357 = vmatpush1.bf16.msra.mxu0 0
    %358 = vmatprep.subr.bf16.mxu0 0
    %359 = vmatpush1.bf16.msra.mxu0 0
    %360 = vmatprep.subr.bf16.mxu0 0
    %361 = vmatpush1.bf16.msra.mxu0 0
    %362 = vmatprep.mubr.bf16.mxu0 0
    %363 = vmatmul.mubr.bf16.gmra.mrb[0].mxu0 %v326
    %v364 = vpop.f32.mrb[0].mxu0
    %v365 = vadd.f32 0.0, %v364
    %v366 = vpop.f32.mrb[0].mxu0
    %v367 = vpop.f32.mrb[0].mxu0
    %v368 = vadd.f32 0.0, %v367
    %v369 = vpop.f32.mrb[0].mxu0
    %370 = vmatprep.mubr.bf16.mxu0 0
    %371 = vmatmul.mubr.bf16.gmra.mrb[0].mxu0 %v327
    %v372 = vpop.f32.mrb[0].mxu0
    %v373 = vadd.f32 0.0, %v372
    %v374 = vpop.f32.mrb[0].mxu0
    %v375 = vpop.f32.mrb[0].mxu0
    %v376 = vadd.f32 0.0, %v375
    %v377 = vpop.f32.mrb[0].mxu0
    %378 = vdwg.mxu0
    %v379 = vadd.f32 %v365, %v368
    %v380 = vadd.f32 %v379, %v373
    %v381 = vadd.f32 %v380, %v376
    %v382 = vrot.slane %v381, 4
    %v383 = vadd.f32 %v381, %v382
    %v384 = vrot.slane %v383, 2
    %v385 = vadd.f32 %v383, %v384
    %v386 = vrot.slane %v385, 1
    %v387 = vadd.f32 %v385, %v386
    %v388 = vmul.f32 %v365, %v365
    %v389 = vmul.f32 %v368, %v368
    %v390 = vmul.f32 %v373, %v373
    %v391 = vmul.f32 %v376, %v376
    %v392 = vadd.f32 %v388, %v389
    %v393 = vadd.f32 %v392, %v390
    %v394 = vadd.f32 %v393, %v391
    %v395 = vrot.slane %v394, 4
    %v396 = vadd.f32 %v394, %v395
    %v397 = vrot.slane %v396, 2
    %v398 = vadd.f32 %v396, %v397
    %v399 = vrot.slane %v398, 1
    %v400 = vadd.f32 %v398, %v399
    %v401 = vmul.f32 %v387, 0.03125
    %v402 = vmul.f32 %v400, 0.03125
    %v403 = vmul.f32 %v401, %v401
    %v404 = vsub.f32 %v402, %v403
    %v405 = vmax.f32 %v404, 0.0
    %v406 = vadd.f32 %v405, 1e-05
    %v407 = vrsqrt.pop %v406
    %v408 = vmul.f32 %v37, %v407
    %v409 = vmul.f32 %v401, %v408
    %v411 = vrot.slane %v409, 7
    %v413 = vsub.f32 %v37, %v411
    %v414 = vlaneseq
    %v415 = vshrl.u32 %v414, 7
    %v416 = vsub.s32 6, %v415
    %v417 = vrot.slane %v408, %v416
    %v418 = vmul.f32 %v365, %v417
    %v419 = vmul.f32 %v368, %v417
    %v420 = vmul.f32 %v373, %v417
    %v421 = vmul.f32 %v376, %v417
    %v422 = vlaneseq
    %v423 = vshrl.u32 %v422, 7
    %v424 = vsub.s32 7, %v423
    %v425 = vrot.slane %v413, %v424
    %v426 = vadd.f32 %v418, %v425
    %v427 = vadd.f32 %v419, %v425
    %v428 = vadd.f32 %v420, %v425
    %v429 = vadd.f32 %v421, %v425
    %vm430 = vcmask 261120
    %v431 = vsel %vm430, %v234, 0.0
    %v432 = vsel %vm430, %v238, 0.0
    %v433 = vadd.f32 %v431, %v432
    %v434 = vsel %vm430, %v244, 0.0
    %v435 = vadd.f32 %v433, %v434
    %v436 = vsel %vm430, %v248, 0.0
    %v437 = vadd.f32 %v435, %v436
    %v438 = vsel %vm430, %v254, 0.0
    %v439 = vadd.f32 %v437, %v438
    %v440 = vsel %vm430, %v258, 0.0
    %v441 = vadd.f32 %v439, %v440
    %v442 = vsel %vm430, %v264, 0.0
    %v443 = vadd.f32 %v441, %v442
    %v444 = vsel %vm430, %v268, 0.0
    %v445 = vadd.f32 %v443, %v444
    %v446 = vsel %vm430, %v274, 0.0
    %v447 = vadd.f32 %v445, %v446
    %v448 = vsel %vm430, %v278, 0.0
    %v449 = vadd.f32 %v447, %v448
    %v450 = vsel %vm430, %v284, 0.0
    %v451 = vadd.f32 %v449, %v450
    %v452 = vsel %vm430, %v288, 0.0
    %v453 = vadd.f32 %v451, %v452
    %v454 = vsel %vm430, %v294, 0.0
    %v455 = vadd.f32 %v453, %v454
    %v456 = vsel %vm430, %v298, 0.0
    %v457 = vadd.f32 %v455, %v456
    %v458 = vsel %vm430, %v304, 0.0
    %v459 = vadd.f32 %v457, %v458
    %v460 = vsel %vm430, %v308, 0.0
    %v461 = vadd.f32 %v459, %v460
    %v462 = vrot.slane %v461, 4
    %v463 = vadd.f32 %v461, %v462
    %v464 = vrot.slane %v463, 2
    %v465 = vadd.f32 %v463, %v464
    %v466 = vrot.slane %v465, 1
    %v467 = vadd.f32 %v465, %v466
    %v468 = vmul.f32 %v234, %v234
    %v469 = vmul.f32 %v238, %v238
    %v470 = vmul.f32 %v244, %v244
    %v471 = vmul.f32 %v248, %v248
    %v472 = vmul.f32 %v254, %v254
    %v473 = vmul.f32 %v258, %v258
    %v474 = vmul.f32 %v264, %v264
    %v475 = vmul.f32 %v268, %v268
    %v476 = vmul.f32 %v274, %v274
    %v477 = vmul.f32 %v278, %v278
    %v478 = vmul.f32 %v284, %v284
    %v479 = vmul.f32 %v288, %v288
    %v480 = vmul.f32 %v294, %v294
    %v481 = vmul.f32 %v298, %v298
    %v482 = vmul.f32 %v304, %v304
    %v483 = vmul.f32 %v308, %v308
    %v484 = vsel %vm430, %v468, 0.0
    %v485 = vsel %vm430, %v469, 0.0
    %v486 = vadd.f32 %v484, %v485
    %v487 = vsel %vm430, %v470, 0.0
    %v488 = vadd.f32 %v486, %v487
    %v489 = vsel %vm430, %v471, 0.0
    %v490 = vadd.f32 %v488, %v489
    %v491 = vsel %vm430, %v472, 0.0
    %v492 = vadd.f32 %v490, %v491
    %v493 = vsel %vm430, %v473, 0.0
    %v494 = vadd.f32 %v492, %v493
    %v495 = vsel %vm430, %v474, 0.0
    %v496 = vadd.f32 %v494, %v495
    %v497 = vsel %vm430, %v475, 0.0
    %v498 = vadd.f32 %v496, %v497
    %v499 = vsel %vm430, %v476, 0.0
    %v500 = vadd.f32 %v498, %v499
    %v501 = vsel %vm430, %v477, 0.0
    %v502 = vadd.f32 %v500, %v501
    %v503 = vsel %vm430, %v478, 0.0
    %v504 = vadd.f32 %v502, %v503
    %v505 = vsel %vm430, %v479, 0.0
    %v506 = vadd.f32 %v504, %v505
    %v507 = vsel %vm430, %v480, 0.0
    %v508 = vadd.f32 %v506, %v507
    %v509 = vsel %vm430, %v481, 0.0
    %v510 = vadd.f32 %v508, %v509
    %v511 = vsel %vm430, %v482, 0.0
    %v512 = vadd.f32 %v510, %v511
    %v513 = vsel %vm430, %v483, 0.0
    %v514 = vadd.f32 %v512, %v513
    %v515 = vrot.slane %v514, 4
    %v516 = vadd.f32 %v514, %v515
    %v517 = vrot.slane %v516, 2
    %v518 = vadd.f32 %v516, %v517
    %v519 = vrot.slane %v518, 1
    %v520 = vadd.f32 %v518, %v519
    %v521 = vmul.f32 %v467, 0.0078125
    %v522 = vmul.f32 %v520, 0.0078125
    %v523 = vmul.f32 %v521, %v521
    %v524 = vsub.f32 %v522, %v523
    %v525 = vmax.f32 %v524, 0.0
    %v526 = vadd.f32 %v525, 1e-05
    %v527 = vrsqrt.pop %v526
    %v528 = vmul.f32 %v37, %v527
    %v529 = vmul.f32 %v521, %v528
    %v531 = vrot.slane %v529, 7
    %v533 = vsub.f32 %v37, %v531
    %v534 = vlaneseq
    %v535 = vshrl.u32 %v534, 7
    %v536 = vsub.s32 0, %v535
    %v537 = vrot.slane %v528, %v536
    %v538 = vmul.f32 %v234, %v537
    %v539 = vmul.f32 %v238, %v537
    %v540 = vmul.f32 %v244, %v537
    %v541 = vmul.f32 %v248, %v537
    %v542 = vmul.f32 %v254, %v537
    %v543 = vmul.f32 %v258, %v537
    %v544 = vmul.f32 %v264, %v537
    %v545 = vmul.f32 %v268, %v537
    %v546 = vmul.f32 %v274, %v537
    %v547 = vmul.f32 %v278, %v537
    %v548 = vmul.f32 %v284, %v537
    %v549 = vmul.f32 %v288, %v537
    %v550 = vmul.f32 %v294, %v537
    %v551 = vmul.f32 %v298, %v537
    %v552 = vmul.f32 %v304, %v537
    %v553 = vmul.f32 %v308, %v537
    %v554 = vlaneseq
    %v555 = vshrl.u32 %v554, 7
    %v556 = vsub.s32 1, %v555
    %v557 = vrot.slane %v533, %v556
    %v558 = vadd.f32 %v538, %v557
    %v559 = vadd.f32 %v539, %v557
    %v560 = vadd.f32 %v540, %v557
    %v561 = vadd.f32 %v541, %v557
    %v562 = vadd.f32 %v542, %v557
    %v563 = vadd.f32 %v543, %v557
    %v564 = vadd.f32 %v544, %v557
    %v565 = vadd.f32 %v545, %v557
    %v566 = vadd.f32 %v546, %v557
    %v567 = vadd.f32 %v547, %v557
    %v568 = vadd.f32 %v548, %v557
    %v569 = vadd.f32 %v549, %v557
    %v570 = vadd.f32 %v550, %v557
    %v571 = vadd.f32 %v551, %v557
    %v572 = vadd.f32 %v552, %v557
    %v573 = vadd.f32 %v553, %v557
    %v574 = vmax.f32 %v558, 0.0
    %v575 = vmax.f32 %v559, 0.0
    %v576 = vmax.f32 %v560, 0.0
    %v577 = vmax.f32 %v561, 0.0
    %v578 = vmax.f32 %v562, 0.0
    %v579 = vmax.f32 %v563, 0.0
    %v580 = vmax.f32 %v564, 0.0
    %v581 = vmax.f32 %v565, 0.0
    %v582 = vmax.f32 %v566, 0.0
    %v583 = vmax.f32 %v567, 0.0
    %v584 = vmax.f32 %v568, 0.0
    %v585 = vmax.f32 %v569, 0.0
    %v586 = vmax.f32 %v570, 0.0
    %v587 = vmax.f32 %v571, 0.0
    %v588 = vmax.f32 %v572, 0.0
    %v589 = vmax.f32 %v573, 0.0
    %v590 = vld [vmem:[%s6] sm:$0xff]
    %v591 = vld [vmem:[%s6 + $0x8] sm:$0xf]
    %v592 = vld [vmem:[%s6 + $0xc] sm:$0xff]
    %v593 = vld [vmem:[%s6 + $0x14] sm:$0xf]
    %v594 = vld [vmem:[%s6 + $0x18] sm:$0xff]
    %v595 = vld [vmem:[%s6 + $0x20] sm:$0xf]
    %v596 = vld [vmem:[%s6 + $0x24] sm:$0xff]
    %v597 = vld [vmem:[%s6 + $0x2c] sm:$0xf]
    %v598 = vpack.c.bf16 %v575, %v574
    %v599 = vpack.c.bf16 %v577, %v576
    %v600 = vpack.c.bf16 %v579, %v578
    %v601 = vpack.c.bf16 %v581, %v580
    %v602 = vpack.c.bf16 %v583, %v582
    %v603 = vpack.c.bf16 %v585, %v584
    %v604 = vpack.c.bf16 %v587, %v586
    %v605 = vpack.c.bf16 %v589, %v588
    %v614 = vunpack.c.l.b16 %v590
    %v615 = vunpack.c.h.b16 %v590
    %v616 = vunpack.c.l.b16 %v591
    %v617 = vunpack.c.l.b16 %v592
    %v618 = vunpack.c.h.b16 %v592
    %v619 = vunpack.c.l.b16 %v593
    %v620 = vunpack.c.l.b16 %v594
    %v621 = vunpack.c.h.b16 %v594
    %v622 = vunpack.c.l.b16 %v595
    %v623 = vunpack.c.l.b16 %v596
    %v624 = vunpack.c.h.b16 %v596
    %v625 = vunpack.c.l.b16 %v597
    %v626 = vpack.c.b16 %v617, %v614
    %v627 = vpack.c.b16 %v618, %v615
    %v628 = vpack.c.b16 %v619, %v616
    %v629 = vpack.c.b16 %v623, %v620
    %v630 = vpack.c.b16 %v624, %v621
    %v631 = vpack.c.b16 %v625, %v622
    %v639 = vsel %vm430, %v598, 0
    %v642 = vsel %vm430, %v599, 0
    %v645 = vsel %vm430, %v600, 0
    %v648 = vsel %vm430, %v601, 0
    %v651 = vsel %vm430, %v602, 0
    %v654 = vsel %vm430, %v603, 0
    %v657 = vsel %vm430, %v604, 0
    %v660 = vsel %vm430, %v605, 0
    %662 = vmatprep.subr.bf16.mxu0 %v627
    %663 = vmatpush1.bf16.msra.mxu0 %v626
    %664 = vmatprep.subr.bf16.mxu0 %v630
    %665 = vmatpush1.bf16.msra.mxu0 %v629
    %666 = vmatprep.subr.bf16.mxu0 0
    %667 = vmatpush1.bf16.msra.mxu0 0
    %668 = vmatprep.subr.bf16.mxu0 0
    %669 = vmatpush1.bf16.msra.mxu0 0
    %670 = vmatprep.subr.bf16.mxu0 0
    %671 = vmatpush1.bf16.msra.mxu0 0
    %672 = vmatprep.subr.bf16.mxu0 0
    %673 = vmatpush1.bf16.msra.mxu0 0
    %674 = vmatprep.subr.bf16.mxu0 0
    %675 = vmatpush1.bf16.msra.mxu0 0
    %676 = vmatprep.subr.bf16.mxu0 0
    %677 = vmatpush1.bf16.msra.mxu0 0
    %678 = vmatprep.subr.bf16.mxu0 0
    %679 = vmatpush1.bf16.msra.mxu0 0
    %680 = vmatprep.subr.bf16.mxu0 0
    %681 = vmatpush1.bf16.msra.mxu0 0
    %682 = vmatprep.subr.bf16.mxu0 0
    %683 = vmatpush1.bf16.msra.mxu0 0
    %684 = vmatprep.subr.bf16.mxu0 0
    %685 = vmatpush1.bf16.msra.mxu0 0
    %686 = vmatprep.subr.bf16.mxu0 0
    %687 = vmatpush1.bf16.msra.mxu0 0
    %688 = vmatprep.subr.bf16.mxu0 0
    %689 = vmatpush1.bf16.msra.mxu0 0
    %690 = vmatprep.subr.bf16.mxu0 0
    %691 = vmatpush1.bf16.msra.mxu0 0
    %692 = vmatprep.subr.bf16.mxu0 0
    %693 = vmatpush1.bf16.msra.mxu0 0
    %694 = vmatprep.mubr.bf16.mxu0 0
    %695 = vmatmul.mubr.bf16.gmra.mrb[0].mxu0 %v639
    %v696 = vpop.f32.mrb[0].mxu0
    %v697 = vadd.f32 0.0, %v696
    %v698 = vpop.f32.mrb[0].mxu0
    %v699 = vadd.f32 0.0, %v698
    %v700 = vpop.f32.mrb[0].mxu0
    %v701 = vadd.f32 0.0, %v700
    %v702 = vpop.f32.mrb[0].mxu0
    %v703 = vadd.f32 0.0, %v702
    %704 = vmatprep.mubr.bf16.mxu0 0
    %705 = vmatmul.mubr.bf16.gmra.mrb[0].mxu0 %v642
    %v706 = vpop.f32.mrb[0].mxu0
    %v707 = vadd.f32 0.0, %v706
    %v708 = vpop.f32.mrb[0].mxu0
    %v709 = vadd.f32 0.0, %v708
    %v710 = vpop.f32.mrb[0].mxu0
    %v711 = vadd.f32 0.0, %v710
    %v712 = vpop.f32.mrb[0].mxu0
    %v713 = vadd.f32 0.0, %v712
    %714 = vmatprep.mubr.bf16.mxu0 0
    %715 = vmatmul.mubr.bf16.gmra.mrb[0].mxu0 %v645
    %v716 = vpop.f32.mrb[0].mxu0
    %v717 = vadd.f32 0.0, %v716
    %v718 = vpop.f32.mrb[0].mxu0
    %v719 = vadd.f32 0.0, %v718
    %v720 = vpop.f32.mrb[0].mxu0
    %v721 = vadd.f32 0.0, %v720
    %v722 = vpop.f32.mrb[0].mxu0
    %v723 = vadd.f32 0.0, %v722
    %724 = vmatprep.mubr.bf16.mxu0 0
    %725 = vmatmul.mubr.bf16.gmra.mrb[0].mxu0 %v648
    %v726 = vpop.f32.mrb[0].mxu0
    %v727 = vadd.f32 0.0, %v726
    %v728 = vpop.f32.mrb[0].mxu0
    %v729 = vadd.f32 0.0, %v728
    %v730 = vpop.f32.mrb[0].mxu0
    %v731 = vadd.f32 0.0, %v730
    %v732 = vpop.f32.mrb[0].mxu0
    %v733 = vadd.f32 0.0, %v732
    %734 = vmatprep.mubr.bf16.mxu0 0
    %735 = vmatmul.mubr.bf16.gmra.mrb[0].mxu0 %v651
    %v736 = vpop.f32.mrb[0].mxu0
    %v737 = vadd.f32 0.0, %v736
    %v738 = vpop.f32.mrb[0].mxu0
    %v739 = vadd.f32 0.0, %v738
    %v740 = vpop.f32.mrb[0].mxu0
    %v741 = vadd.f32 0.0, %v740
    %v742 = vpop.f32.mrb[0].mxu0
    %v743 = vadd.f32 0.0, %v742
    %744 = vmatprep.mubr.bf16.mxu0 0
    %745 = vmatmul.mubr.bf16.gmra.mrb[0].mxu0 %v654
    %v746 = vpop.f32.mrb[0].mxu0
    %v747 = vadd.f32 0.0, %v746
    %v748 = vpop.f32.mrb[0].mxu0
    %v749 = vadd.f32 0.0, %v748
    %v750 = vpop.f32.mrb[0].mxu0
    %v751 = vadd.f32 0.0, %v750
    %v752 = vpop.f32.mrb[0].mxu0
    %v753 = vadd.f32 0.0, %v752
    %754 = vmatprep.mubr.bf16.mxu0 0
    %755 = vmatmul.mubr.bf16.gmra.mrb[0].mxu0 %v657
    %v756 = vpop.f32.mrb[0].mxu0
    %v757 = vadd.f32 0.0, %v756
    %v758 = vpop.f32.mrb[0].mxu0
    %v759 = vadd.f32 0.0, %v758
    %v760 = vpop.f32.mrb[0].mxu0
    %v761 = vadd.f32 0.0, %v760
    %v762 = vpop.f32.mrb[0].mxu0
    %v763 = vadd.f32 0.0, %v762
    %764 = vmatprep.mubr.bf16.mxu0 0
    %765 = vmatmul.mubr.bf16.gmra.mrb[0].mxu0 %v660
    %v766 = vpop.f32.mrb[0].mxu0
    %v767 = vadd.f32 0.0, %v766
    %v768 = vpop.f32.mrb[0].mxu0
    %v769 = vadd.f32 0.0, %v768
    %v770 = vpop.f32.mrb[0].mxu0
    %v771 = vadd.f32 0.0, %v770
    %v772 = vpop.f32.mrb[0].mxu0
    %v773 = vadd.f32 0.0, %v772
    %774 = vdwg.mxu0
    %775 = vmatprep.subr.bf16.mxu0 0
    %776 = vmatpush1.bf16.msra.mxu0 %v628
    %777 = vmatprep.subr.bf16.mxu0 0
    %778 = vmatpush1.bf16.msra.mxu0 %v631
    %779 = vmatprep.subr.bf16.mxu0 0
    %780 = vmatpush1.bf16.msra.mxu0 0
    %781 = vmatprep.subr.bf16.mxu0 0
    %782 = vmatpush1.bf16.msra.mxu0 0
    %783 = vmatprep.subr.bf16.mxu0 0
    %784 = vmatpush1.bf16.msra.mxu0 0
    %785 = vmatprep.subr.bf16.mxu0 0
    %786 = vmatpush1.bf16.msra.mxu0 0
    %787 = vmatprep.subr.bf16.mxu0 0
    %788 = vmatpush1.bf16.msra.mxu0 0
    %789 = vmatprep.subr.bf16.mxu0 0
    %790 = vmatpush1.bf16.msra.mxu0 0
    %791 = vmatprep.subr.bf16.mxu0 0
    %792 = vmatpush1.bf16.msra.mxu0 0
    %793 = vmatprep.subr.bf16.mxu0 0
    %794 = vmatpush1.bf16.msra.mxu0 0
    %795 = vmatprep.subr.bf16.mxu0 0
    %796 = vmatpush1.bf16.msra.mxu0 0
    %797 = vmatprep.subr.bf16.mxu0 0
    %798 = vmatpush1.bf16.msra.mxu0 0
    %799 = vmatprep.subr.bf16.mxu0 0
    %800 = vmatpush1.bf16.msra.mxu0 0
    %801 = vmatprep.subr.bf16.mxu0 0
    %802 = vmatpush1.bf16.msra.mxu0 0
    %803 = vmatprep.subr.bf16.mxu0 0
    %804 = vmatpush1.bf16.msra.mxu0 0
    %805 = vmatprep.subr.bf16.mxu0 0
    %806 = vmatpush1.bf16.msra.mxu0 0
    %807 = vmatprep.mubr.bf16.mxu0 0
    %808 = vmatmul.mubr.bf16.gmra.mrb[0].mxu0 %v639
    %v809 = vpop.f32.mrb[0].mxu0
    %v810 = vadd.f32 0.0, %v809
    %v811 = vpop.f32.mrb[0].mxu0
    %v812 = vpop.f32.mrb[0].mxu0
    %v813 = vadd.f32 0.0, %v812
    %v814 = vpop.f32.mrb[0].mxu0
    %815 = vmatprep.mubr.bf16.mxu0 0
    %816 = vmatmul.mubr.bf16.gmra.mrb[0].mxu0 %v642
    %v817 = vpop.f32.mrb[0].mxu0
    %v818 = vadd.f32 0.0, %v817
    %v819 = vpop.f32.mrb[0].mxu0
    %v820 = vpop.f32.mrb[0].mxu0
    %v821 = vadd.f32 0.0, %v820
    %v822 = vpop.f32.mrb[0].mxu0
    %823 = vmatprep.mubr.bf16.mxu0 0
    %824 = vmatmul.mubr.bf16.gmra.mrb[0].mxu0 %v645
    %v825 = vpop.f32.mrb[0].mxu0
    %v826 = vadd.f32 0.0, %v825
    %v827 = vpop.f32.mrb[0].mxu0
    %v828 = vpop.f32.mrb[0].mxu0
    %v829 = vadd.f32 0.0, %v828
    %v830 = vpop.f32.mrb[0].mxu0
    %831 = vmatprep.mubr.bf16.mxu0 0
    %832 = vmatmul.mubr.bf16.gmra.mrb[0].mxu0 %v648
    %v833 = vpop.f32.mrb[0].mxu0
    %v834 = vadd.f32 0.0, %v833
    %v835 = vpop.f32.mrb[0].mxu0
    %v836 = vpop.f32.mrb[0].mxu0
    %v837 = vadd.f32 0.0, %v836
    %v838 = vpop.f32.mrb[0].mxu0
    %839 = vmatprep.mubr.bf16.mxu0 0
    %840 = vmatmul.mubr.bf16.gmra.mrb[0].mxu0 %v651
    %v841 = vpop.f32.mrb[0].mxu0
    %v842 = vadd.f32 0.0, %v841
    %v843 = vpop.f32.mrb[0].mxu0
    %v844 = vpop.f32.mrb[0].mxu0
    %v845 = vadd.f32 0.0, %v844
    %v846 = vpop.f32.mrb[0].mxu0
    %847 = vmatprep.mubr.bf16.mxu0 0
    %848 = vmatmul.mubr.bf16.gmra.mrb[0].mxu0 %v654
    %v849 = vpop.f32.mrb[0].mxu0
    %v850 = vadd.f32 0.0, %v849
    %v851 = vpop.f32.mrb[0].mxu0
    %v852 = vpop.f32.mrb[0].mxu0
    %v853 = vadd.f32 0.0, %v852
    %v854 = vpop.f32.mrb[0].mxu0
    %855 = vmatprep.mubr.bf16.mxu0 0
    %856 = vmatmul.mubr.bf16.gmra.mrb[0].mxu0 %v657
    %v857 = vpop.f32.mrb[0].mxu0
    %v858 = vadd.f32 0.0, %v857
    %v859 = vpop.f32.mrb[0].mxu0
    %v860 = vpop.f32.mrb[0].mxu0
    %v861 = vadd.f32 0.0, %v860
    %v862 = vpop.f32.mrb[0].mxu0
    %863 = vmatprep.mubr.bf16.mxu0 0
    %864 = vmatmul.mubr.bf16.gmra.mrb[0].mxu0 %v660
    %v865 = vpop.f32.mrb[0].mxu0
    %v866 = vadd.f32 0.0, %v865
    %v867 = vpop.f32.mrb[0].mxu0
    %v868 = vpop.f32.mrb[0].mxu0
    %v869 = vadd.f32 0.0, %v868
    %v870 = vpop.f32.mrb[0].mxu0
    %871 = vdwg.mxu0
    %888 = vrot.lane.b32.xlu0 %v697, 96
    %v889 = vpop.permute.xlu0 %888
    %890 = vrot.lane.b32.xlu0 %v701, 96
    %v891 = vpop.permute.xlu0 %890
    %892 = vrot.lane.b32.xlu0 %v707, 96
    %v893 = vpop.permute.xlu0 %892
    %894 = vrot.lane.b32.xlu0 %v711, 96
    %v895 = vpop.permute.xlu0 %894
    %896 = vrot.lane.b32.xlu0 %v717, 96
    %v897 = vpop.permute.xlu0 %896
    %898 = vrot.lane.b32.xlu0 %v721, 96
    %v899 = vpop.permute.xlu0 %898
    %900 = vrot.lane.b32.xlu0 %v727, 96
    %v901 = vpop.permute.xlu0 %900
    %902 = vrot.lane.b32.xlu0 %v731, 96
    %v903 = vpop.permute.xlu0 %902
    %904 = vrot.lane.b32.xlu0 %v737, 96
    %v905 = vpop.permute.xlu0 %904
    %906 = vrot.lane.b32.xlu0 %v741, 96
    %v907 = vpop.permute.xlu0 %906
    %908 = vrot.lane.b32.xlu0 %v747, 96
    %v909 = vpop.permute.xlu0 %908
    %910 = vrot.lane.b32.xlu0 %v751, 96
    %v911 = vpop.permute.xlu0 %910
    %912 = vrot.lane.b32.xlu0 %v757, 96
    %v913 = vpop.permute.xlu0 %912
    %914 = vrot.lane.b32.xlu0 %v761, 96
    %v915 = vpop.permute.xlu0 %914
    %916 = vrot.lane.b32.xlu0 %v767, 96
    %v917 = vpop.permute.xlu0 %916
    %918 = vrot.lane.b32.xlu0 %v771, 96
    %v919 = vpop.permute.xlu0 %918
    %936 = vrot.lane.b32.xlu0 %v697, 64
    %v937 = vpop.permute.xlu0 %936
    %938 = vrot.lane.b32.xlu0 %v701, 64
    %v939 = vpop.permute.xlu0 %938
    %940 = vrot.lane.b32.xlu0 %v707, 64
    %v941 = vpop.permute.xlu0 %940
    %942 = vrot.lane.b32.xlu0 %v711, 64
    %v943 = vpop.permute.xlu0 %942
    %944 = vrot.lane.b32.xlu0 %v717, 64
    %v945 = vpop.permute.xlu0 %944
    %946 = vrot.lane.b32.xlu0 %v721, 64
    %v947 = vpop.permute.xlu0 %946
    %948 = vrot.lane.b32.xlu0 %v727, 64
    %v949 = vpop.permute.xlu0 %948
    %950 = vrot.lane.b32.xlu0 %v731, 64
    %v951 = vpop.permute.xlu0 %950
    %952 = vrot.lane.b32.xlu0 %v737, 64
    %v953 = vpop.permute.xlu0 %952
    %954 = vrot.lane.b32.xlu0 %v741, 64
    %v955 = vpop.permute.xlu0 %954
    %956 = vrot.lane.b32.xlu0 %v747, 64
    %v957 = vpop.permute.xlu0 %956
    %958 = vrot.lane.b32.xlu0 %v751, 64
    %v959 = vpop.permute.xlu0 %958
    %960 = vrot.lane.b32.xlu0 %v757, 64
    %v961 = vpop.permute.xlu0 %960
    %962 = vrot.lane.b32.xlu0 %v761, 64
    %v963 = vpop.permute.xlu0 %962
    %964 = vrot.lane.b32.xlu0 %v767, 64
    %v965 = vpop.permute.xlu0 %964
    %966 = vrot.lane.b32.xlu0 %v771, 64
    %v967 = vpop.permute.xlu0 %966
    %984 = vrot.lane.b32.xlu0 %v697, 32
    %v985 = vpop.permute.xlu0 %984
    %986 = vrot.lane.b32.xlu0 %v701, 32
    %v987 = vpop.permute.xlu0 %986
    %988 = vrot.lane.b32.xlu0 %v707, 32
    %v989 = vpop.permute.xlu0 %988
    %990 = vrot.lane.b32.xlu0 %v711, 32
    %v991 = vpop.permute.xlu0 %990
    %992 = vrot.lane.b32.xlu0 %v717, 32
    %v993 = vpop.permute.xlu0 %992
    %994 = vrot.lane.b32.xlu0 %v721, 32
    %v995 = vpop.permute.xlu0 %994
    %996 = vrot.lane.b32.xlu0 %v727, 32
    %v997 = vpop.permute.xlu0 %996
    %998 = vrot.lane.b32.xlu0 %v731, 32
    %v999 = vpop.permute.xlu0 %998
    %1000 = vrot.lane.b32.xlu0 %v737, 32
    %v1001 = vpop.permute.xlu0 %1000
    %1002 = vrot.lane.b32.xlu0 %v741, 32
    %v1003 = vpop.permute.xlu0 %1002
    %1004 = vrot.lane.b32.xlu0 %v747, 32
    %v1005 = vpop.permute.xlu0 %1004
    %1006 = vrot.lane.b32.xlu0 %v751, 32
    %v1007 = vpop.permute.xlu0 %1006
    %1008 = vrot.lane.b32.xlu0 %v757, 32
    %v1009 = vpop.permute.xlu0 %1008
    %1010 = vrot.lane.b32.xlu0 %v761, 32
    %v1011 = vpop.permute.xlu0 %1010
    %1012 = vrot.lane.b32.xlu0 %v767, 32
    %v1013 = vpop.permute.xlu0 %1012
    %1014 = vrot.lane.b32.xlu0 %v771, 32
    %v1015 = vpop.permute.xlu0 %1014
    %1048 = vrot.lane.b32.xlu0 %v699, 96
    %v1049 = vpop.permute.xlu0 %1048
    %1050 = vrot.lane.b32.xlu0 %v703, 96
    %v1051 = vpop.permute.xlu0 %1050
    %1052 = vrot.lane.b32.xlu0 %v709, 96
    %v1053 = vpop.permute.xlu0 %1052
    %1054 = vrot.lane.b32.xlu0 %v713, 96
    %v1055 = vpop.permute.xlu0 %1054
    %1056 = vrot.lane.b32.xlu0 %v719, 96
    %v1057 = vpop.permute.xlu0 %1056
    %1058 = vrot.lane.b32.xlu0 %v723, 96
    %v1059 = vpop.permute.xlu0 %1058
    %1060 = vrot.lane.b32.xlu0 %v729, 96
    %v1061 = vpop.permute.xlu0 %1060
    %1062 = vrot.lane.b32.xlu0 %v733, 96
    %v1063 = vpop.permute.xlu0 %1062
    %1064 = vrot.lane.b32.xlu0 %v739, 96
    %v1065 = vpop.permute.xlu0 %1064
    %1066 = vrot.lane.b32.xlu0 %v743, 96
    %v1067 = vpop.permute.xlu0 %1066
    %1068 = vrot.lane.b32.xlu0 %v749, 96
    %v1069 = vpop.permute.xlu0 %1068
    %1070 = vrot.lane.b32.xlu0 %v753, 96
    %v1071 = vpop.permute.xlu0 %1070
    %1072 = vrot.lane.b32.xlu0 %v759, 96
    %v1073 = vpop.permute.xlu0 %1072
    %1074 = vrot.lane.b32.xlu0 %v763, 96
    %v1075 = vpop.permute.xlu0 %1074
    %1076 = vrot.lane.b32.xlu0 %v769, 96
    %v1077 = vpop.permute.xlu0 %1076
    %1078 = vrot.lane.b32.xlu0 %v773, 96
    %v1079 = vpop.permute.xlu0 %1078
    %1096 = vrot.lane.b32.xlu0 %v699, 64
    %v1097 = vpop.permute.xlu0 %1096
    %1098 = vrot.lane.b32.xlu0 %v703, 64
    %v1099 = vpop.permute.xlu0 %1098
    %1100 = vrot.lane.b32.xlu0 %v709, 64
    %v1101 = vpop.permute.xlu0 %1100
    %1102 = vrot.lane.b32.xlu0 %v713, 64
    %v1103 = vpop.permute.xlu0 %1102
    %1104 = vrot.lane.b32.xlu0 %v719, 64
    %v1105 = vpop.permute.xlu0 %1104
    %1106 = vrot.lane.b32.xlu0 %v723, 64
    %v1107 = vpop.permute.xlu0 %1106
    %1108 = vrot.lane.b32.xlu0 %v729, 64
    %v1109 = vpop.permute.xlu0 %1108
    %1110 = vrot.lane.b32.xlu0 %v733, 64
    %v1111 = vpop.permute.xlu0 %1110
    %1112 = vrot.lane.b32.xlu0 %v739, 64
    %v1113 = vpop.permute.xlu0 %1112
    %1114 = vrot.lane.b32.xlu0 %v743, 64
    %v1115 = vpop.permute.xlu0 %1114
    %1116 = vrot.lane.b32.xlu0 %v749, 64
    %v1117 = vpop.permute.xlu0 %1116
    %1118 = vrot.lane.b32.xlu0 %v753, 64
    %v1119 = vpop.permute.xlu0 %1118
    %1120 = vrot.lane.b32.xlu0 %v759, 64
    %v1121 = vpop.permute.xlu0 %1120
    %1122 = vrot.lane.b32.xlu0 %v763, 64
    %v1123 = vpop.permute.xlu0 %1122
    %1124 = vrot.lane.b32.xlu0 %v769, 64
    %v1125 = vpop.permute.xlu0 %1124
    %1126 = vrot.lane.b32.xlu0 %v773, 64
    %v1127 = vpop.permute.xlu0 %1126
    %1144 = vrot.lane.b32.xlu0 %v699, 32
    %v1145 = vpop.permute.xlu0 %1144
    %1146 = vrot.lane.b32.xlu0 %v703, 32
    %v1147 = vpop.permute.xlu0 %1146
    %1148 = vrot.lane.b32.xlu0 %v709, 32
    %v1149 = vpop.permute.xlu0 %1148
    %1150 = vrot.lane.b32.xlu0 %v713, 32
    %v1151 = vpop.permute.xlu0 %1150
    %1152 = vrot.lane.b32.xlu0 %v719, 32
    %v1153 = vpop.permute.xlu0 %1152
    %1154 = vrot.lane.b32.xlu0 %v723, 32
    %v1155 = vpop.permute.xlu0 %1154
    %1156 = vrot.lane.b32.xlu0 %v729, 32
    %v1157 = vpop.permute.xlu0 %1156
    %1158 = vrot.lane.b32.xlu0 %v733, 32
    %v1159 = vpop.permute.xlu0 %1158
    %1160 = vrot.lane.b32.xlu0 %v739, 32
    %v1161 = vpop.permute.xlu0 %1160
    %1162 = vrot.lane.b32.xlu0 %v743, 32
    %v1163 = vpop.permute.xlu0 %1162
    %1164 = vrot.lane.b32.xlu0 %v749, 32
    %v1165 = vpop.permute.xlu0 %1164
    %1166 = vrot.lane.b32.xlu0 %v753, 32
    %v1167 = vpop.permute.xlu0 %1166
    %1168 = vrot.lane.b32.xlu0 %v759, 32
    %v1169 = vpop.permute.xlu0 %1168
    %1170 = vrot.lane.b32.xlu0 %v763, 32
    %v1171 = vpop.permute.xlu0 %1170
    %1172 = vrot.lane.b32.xlu0 %v769, 32
    %v1173 = vpop.permute.xlu0 %1172
    %1174 = vrot.lane.b32.xlu0 %v773, 32
    %v1175 = vpop.permute.xlu0 %1174
    %v1192 = vpack.c.bf16 %v701, %v697
    %v1193 = vpack.c.bf16 %v711, %v707
    %v1194 = vpack.c.bf16 %v721, %v717
    %v1195 = vpack.c.bf16 %v731, %v727
    %v1196 = vpack.c.bf16 %v741, %v737
    %v1197 = vpack.c.bf16 %v751, %v747
    %v1198 = vpack.c.bf16 %v761, %v757
    %v1199 = vpack.c.bf16 %v771, %v767
    %v1200 = vpack.c.bf16 %v891, %v889
    %v1201 = vpack.c.bf16 %v895, %v893
    %v1202 = vpack.c.bf16 %v899, %v897
    %v1203 = vpack.c.bf16 %v903, %v901
    %v1204 = vpack.c.bf16 %v907, %v905
    %v1205 = vpack.c.bf16 %v911, %v909
    %v1206 = vpack.c.bf16 %v915, %v913
    %v1207 = vpack.c.bf16 %v919, %v917
    %v1208 = vpack.c.bf16 %v939, %v937
    %v1209 = vpack.c.bf16 %v943, %v941
    %v1210 = vpack.c.bf16 %v947, %v945
    %v1211 = vpack.c.bf16 %v951, %v949
    %v1212 = vpack.c.bf16 %v955, %v953
    %v1213 = vpack.c.bf16 %v959, %v957
    %v1214 = vpack.c.bf16 %v963, %v961
    %v1215 = vpack.c.bf16 %v967, %v965
    %v1216 = vpack.c.bf16 %v987, %v985
    %v1217 = vpack.c.bf16 %v991, %v989
    %v1218 = vpack.c.bf16 %v995, %v993
    %v1219 = vpack.c.bf16 %v999, %v997
    %v1220 = vpack.c.bf16 %v1003, %v1001
    %v1221 = vpack.c.bf16 %v1007, %v1005
    %v1222 = vpack.c.bf16 %v1011, %v1009
    %v1223 = vpack.c.bf16 %v1015, %v1013
    %v1224 = vpack.c.bf16 %v703, %v699
    %v1225 = vpack.c.bf16 %v713, %v709
    %v1226 = vpack.c.bf16 %v723, %v719
    %v1227 = vpack.c.bf16 %v733, %v729
    %v1228 = vpack.c.bf16 %v743, %v739
    %v1229 = vpack.c.bf16 %v753, %v749
    %v1230 = vpack.c.bf16 %v763, %v759
    %v1231 = vpack.c.bf16 %v773, %v769
    %v1232 = vpack.c.bf16 %v1051, %v1049
    %v1233 = vpack.c.bf16 %v1055, %v1053
    %v1234 = vpack.c.bf16 %v1059, %v1057
    %v1235 = vpack.c.bf16 %v1063, %v1061
    %v1236 = vpack.c.bf16 %v1067, %v1065
    %v1237 = vpack.c.bf16 %v1071, %v1069
    %v1238 = vpack.c.bf16 %v1075, %v1073
    %v1239 = vpack.c.bf16 %v1079, %v1077
    %v1240 = vpack.c.bf16 %v1099, %v1097
    %v1241 = vpack.c.bf16 %v1103, %v1101
    %v1242 = vpack.c.bf16 %v1107, %v1105
    %v1243 = vpack.c.bf16 %v1111, %v1109
    %v1244 = vpack.c.bf16 %v1115, %v1113
    %v1245 = vpack.c.bf16 %v1119, %v1117
    %v1246 = vpack.c.bf16 %v1123, %v1121
    %v1247 = vpack.c.bf16 %v1127, %v1125
    %v1248 = vpack.c.bf16 %v1147, %v1145
    %v1249 = vpack.c.bf16 %v1151, %v1149
    %v1250 = vpack.c.bf16 %v1155, %v1153
    %v1251 = vpack.c.bf16 %v1159, %v1157
    %v1252 = vpack.c.bf16 %v1163, %v1161
    %v1253 = vpack.c.bf16 %v1167, %v1165
    %v1254 = vpack.c.bf16 %v1171, %v1169
    %v1255 = vpack.c.bf16 %v1175, %v1173
    %v1256 = vpack.c.bf16 %v813, %v810
    %v1257 = vpack.c.bf16 %v821, %v818
    %v1258 = vpack.c.bf16 %v829, %v826
    %v1259 = vpack.c.bf16 %v837, %v834
    %v1260 = vpack.c.bf16 %v845, %v842
    %v1261 = vpack.c.bf16 %v853, %v850
    %v1262 = vpack.c.bf16 %v861, %v858
    %v1263 = vpack.c.bf16 %v869, %v866
    %v1280 = vunpack.c.l.b16 %v56
    %v1281 = vunpack.c.h.b16 %v56
    %v1282 = vunpack.c.l.b16 %v57
    %v1283 = vunpack.c.h.b16 %v57
    %v1284 = vunpack.c.l.b16 %v58
    %v1285 = vunpack.c.h.b16 %v58
    %v1286 = vunpack.c.l.b16 %v59
    %v1287 = vunpack.c.h.b16 %v59
    %v1288 = vunpack.c.l.b16 %v60
    %v1289 = vunpack.c.l.b16 %v61
    %v1290 = vunpack.c.h.b16 %v61
    %v1291 = vunpack.c.l.b16 %v62
    %v1292 = vunpack.c.h.b16 %v62
    %v1293 = vunpack.c.l.b16 %v63
    %v1294 = vunpack.c.h.b16 %v63
    %v1295 = vunpack.c.l.b16 %v64
    %v1296 = vunpack.c.h.b16 %v64
    %v1297 = vunpack.c.l.b16 %v65
    %v1298 = vunpack.c.l.b16 %v66
    %v1299 = vunpack.c.h.b16 %v66
    %v1300 = vunpack.c.l.b16 %v67
    %v1301 = vunpack.c.h.b16 %v67
    %v1302 = vunpack.c.l.b16 %v68
    %v1303 = vunpack.c.h.b16 %v68
    %v1304 = vunpack.c.l.b16 %v69
    %v1305 = vunpack.c.h.b16 %v69
    %v1306 = vunpack.c.l.b16 %v70
    %v1307 = vunpack.c.l.b16 %v71
    %v1308 = vunpack.c.h.b16 %v71
    %v1309 = vunpack.c.l.b16 %v72
    %v1310 = vunpack.c.h.b16 %v72
    %v1311 = vunpack.c.l.b16 %v73
    %v1312 = vunpack.c.h.b16 %v73
    %v1313 = vunpack.c.l.b16 %v74
    %v1314 = vunpack.c.h.b16 %v74
    %v1315 = vunpack.c.l.b16 %v75
    %v1316 = vpack.c.b16 %v1289, %v1280
    %v1317 = vpack.c.b16 %v1290, %v1281
    %v1318 = vpack.c.b16 %v1291, %v1282
    %v1319 = vpack.c.b16 %v1292, %v1283
    %v1320 = vpack.c.b16 %v1293, %v1284
    %v1321 = vpack.c.b16 %v1294, %v1285
    %v1322 = vpack.c.b16 %v1295, %v1286
    %v1323 = vpack.c.b16 %v1296, %v1287
    %v1324 = vpack.c.b16 %v1297, %v1288
    %v1325 = vpack.c.b16 %v1307, %v1298
    %v1326 = vpack.c.b16 %v1308, %v1299
    %v1327 = vpack.c.b16 %v1309, %v1300
    %v1328 = vpack.c.b16 %v1310, %v1301
    %v1329 = vpack.c.b16 %v1311, %v1302
    %v1330 = vpack.c.b16 %v1312, %v1303
    %v1331 = vpack.c.b16 %v1313, %v1304
    %v1332 = vpack.c.b16 %v1314, %v1305
    %v1333 = vpack.c.b16 %v1315, %v1306
    %1352 = vmatprep.subr.bf16.mxu0 0
    %1353 = vmatpush1.bf16.msra.mxu0 %v1192
    %1354 = vmatprep.subr.bf16.mxu0 0
    %1355 = vmatpush1.bf16.msra.mxu0 %v1193
    %1356 = vmatprep.subr.bf16.mxu0 0
    %1357 = vmatpush1.bf16.msra.mxu0 %v1194
    %1358 = vmatprep.subr.bf16.mxu0 0
    %1359 = vmatpush1.bf16.msra.mxu0 %v1195
    %1360 = vmatprep.subr.bf16.mxu0 0
    %1361 = vmatpush1.bf16.msra.mxu0 %v1196
    %1362 = vmatprep.subr.bf16.mxu0 0
    %1363 = vmatpush1.bf16.msra.mxu0 %v1197
    %1364 = vmatprep.subr.bf16.mxu0 0
    %1365 = vmatpush1.bf16.msra.mxu0 %v1198
    %1366 = vmatprep.subr.bf16.mxu0 0
    %1367 = vmatpush1.bf16.msra.mxu0 %v1199
    %1368 = vmatprep.subr.bf16.mxu0 0
    %1369 = vmatpush1.bf16.msra.mxu0 %v1200
    %1370 = vmatprep.subr.bf16.mxu0 0
    %1371 = vmatpush1.bf16.msra.mxu0 %v1201
    %1372 = vmatprep.subr.bf16.mxu0 0
    %1373 = vmatpush1.bf16.msra.mxu0 %v1202
    %1374 = vmatprep.subr.bf16.mxu0 0
    %1375 = vmatpush1.bf16.msra.mxu0 %v1203
    %1376 = vmatprep.subr.bf16.mxu0 0
    %1377 = vmatpush1.bf16.msra.mxu0 %v1204
    %1378 = vmatprep.subr.bf16.mxu0 0
    %1379 = vmatpush1.bf16.msra.mxu0 %v1205
    %1380 = vmatprep.subr.bf16.mxu0 0
    %1381 = vmatpush1.bf16.msra.mxu0 %v1206
    %1382 = vmatprep.subr.bf16.mxu0 0
    %1383 = vmatpush1.bf16.msra.mxu0 %v1207
    %1384 = vmatprep.mubr.bf16.mxu0 %v1317
    %1385 = vmatmul.mubr.bf16.gmra.mrb[0].mxu0 %v1316
    %v1386 = vpop.f32.mrb[0].mxu0
    %v1387 = vadd.f32 0.0, %v1386
    %v1388 = vpop.f32.mrb[0].mxu0
    %v1389 = vpop.f32.mrb[0].mxu0
    %v1390 = vadd.f32 0.0, %v1389
    %v1391 = vpop.f32.mrb[0].mxu0
    %1392 = vmatprep.mubr.bf16.mxu0 %v1326
    %1393 = vmatmul.mubr.bf16.gmra.mrb[0].mxu0 %v1325
    %v1394 = vpop.f32.mrb[0].mxu0
    %v1395 = vadd.f32 0.0, %v1394
    %v1396 = vpop.f32.mrb[0].mxu0
    %v1397 = vpop.f32.mrb[0].mxu0
    %v1398 = vadd.f32 0.0, %v1397
    %v1399 = vpop.f32.mrb[0].mxu0
    %1400 = vdwg.mxu0
    %1401 = vmatprep.subr.bf16.mxu0 0
    %1402 = vmatpush1.bf16.msra.mxu0 %v1208
    %1403 = vmatprep.subr.bf16.mxu0 0
    %1404 = vmatpush1.bf16.msra.mxu0 %v1209
    %1405 = vmatprep.subr.bf16.mxu0 0
    %1406 = vmatpush1.bf16.msra.mxu0 %v1210
    %1407 = vmatprep.subr.bf16.mxu0 0
    %1408 = vmatpush1.bf16.msra.mxu0 %v1211
    %1409 = vmatprep.subr.bf16.mxu0 0
    %1410 = vmatpush1.bf16.msra.mxu0 %v1212
    %1411 = vmatprep.subr.bf16.mxu0 0
    %1412 = vmatpush1.bf16.msra.mxu0 %v1213
    %1413 = vmatprep.subr.bf16.mxu0 0
    %1414 = vmatpush1.bf16.msra.mxu0 %v1214
    %1415 = vmatprep.subr.bf16.mxu0 0
    %1416 = vmatpush1.bf16.msra.mxu0 %v1215
    %1417 = vmatprep.subr.bf16.mxu0 0
    %1418 = vmatpush1.bf16.msra.mxu0 %v1216
    %1419 = vmatprep.subr.bf16.mxu0 0
    %1420 = vmatpush1.bf16.msra.mxu0 %v1217
    %1421 = vmatprep.subr.bf16.mxu0 0
    %1422 = vmatpush1.bf16.msra.mxu0 %v1218
    %1423 = vmatprep.subr.bf16.mxu0 0
    %1424 = vmatpush1.bf16.msra.mxu0 %v1219
    %1425 = vmatprep.subr.bf16.mxu0 0
    %1426 = vmatpush1.bf16.msra.mxu0 %v1220
    %1427 = vmatprep.subr.bf16.mxu0 0
    %1428 = vmatpush1.bf16.msra.mxu0 %v1221
    %1429 = vmatprep.subr.bf16.mxu0 0
    %1430 = vmatpush1.bf16.msra.mxu0 %v1222
    %1431 = vmatprep.subr.bf16.mxu0 0
    %1432 = vmatpush1.bf16.msra.mxu0 %v1223
    %1433 = vmatprep.mubr.bf16.mxu0 %v1319
    %1434 = vmatmul.mubr.bf16.gmra.mrb[0].mxu0 %v1318
    %v1435 = vpop.f32.mrb[0].mxu0
    %v1436 = vadd.f32 %v1387, %v1435
    %v1437 = vpop.f32.mrb[0].mxu0
    %v1438 = vpop.f32.mrb[0].mxu0
    %v1439 = vadd.f32 %v1390, %v1438
    %v1440 = vpop.f32.mrb[0].mxu0
    %1441 = vmatprep.mubr.bf16.mxu0 %v1328
    %1442 = vmatmul.mubr.bf16.gmra.mrb[0].mxu0 %v1327
    %v1443 = vpop.f32.mrb[0].mxu0
    %v1444 = vadd.f32 %v1395, %v1443
    %v1445 = vpop.f32.mrb[0].mxu0
    %v1446 = vpop.f32.mrb[0].mxu0
    %v1447 = vadd.f32 %v1398, %v1446
    %v1448 = vpop.f32.mrb[0].mxu0
    %1449 = vdwg.mxu0
    %1450 = vmatprep.subr.bf16.mxu0 0
    %1451 = vmatpush1.bf16.msra.mxu0 %v1224
    %1452 = vmatprep.subr.bf16.mxu0 0
    %1453 = vmatpush1.bf16.msra.mxu0 %v1225
    %1454 = vmatprep.subr.bf16.mxu0 0
    %1455 = vmatpush1.bf16.msra.mxu0 %v1226
    %1456 = vmatprep.subr.bf16.mxu0 0
    %1457 = vmatpush1.bf16.msra.mxu0 %v1227
    %1458 = vmatprep.subr.bf16.mxu0 0
    %1459 = vmatpush1.bf16.msra.mxu0 %v1228
    %1460 = vmatprep.subr.bf16.mxu0 0
    %1461 = vmatpush1.bf16.msra.mxu0 %v1229
    %1462 = vmatprep.subr.bf16.mxu0 0
    %1463 = vmatpush1.bf16.msra.mxu0 %v1230
    %1464 = vmatprep.subr.bf16.mxu0 0
    %1465 = vmatpush1.bf16.msra.mxu0 %v1231
    %1466 = vmatprep.subr.bf16.mxu0 0
    %1467 = vmatpush1.bf16.msra.mxu0 %v1232
    %1468 = vmatprep.subr.bf16.mxu0 0
    %1469 = vmatpush1.bf16.msra.mxu0 %v1233
    %1470 = vmatprep.subr.bf16.mxu0 0
    %1471 = vmatpush1.bf16.msra.mxu0 %v1234
    %1472 = vmatprep.subr.bf16.mxu0 0
    %1473 = vmatpush1.bf16.msra.mxu0 %v1235
    %1474 = vmatprep.subr.bf16.mxu0 0
    %1475 = vmatpush1.bf16.msra.mxu0 %v1236
    %1476 = vmatprep.subr.bf16.mxu0 0
    %1477 = vmatpush1.bf16.msra.mxu0 %v1237
    %1478 = vmatprep.subr.bf16.mxu0 0
    %1479 = vmatpush1.bf16.msra.mxu0 %v1238
    %1480 = vmatprep.subr.bf16.mxu0 0
    %1481 = vmatpush1.bf16.msra.mxu0 %v1239
    %1482 = vmatprep.mubr.bf16.mxu0 %v1321
    %1483 = vmatmul.mubr.bf16.gmra.mrb[0].mxu0 %v1320
    %v1484 = vpop.f32.mrb[0].mxu0
    %v1485 = vadd.f32 %v1436, %v1484
    %v1486 = vpop.f32.mrb[0].mxu0
    %v1487 = vpop.f32.mrb[0].mxu0
    %v1488 = vadd.f32 %v1439, %v1487
    %v1489 = vpop.f32.mrb[0].mxu0
    %1490 = vmatprep.mubr.bf16.mxu0 %v1330
    %1491 = vmatmul.mubr.bf16.gmra.mrb[0].mxu0 %v1329
    %v1492 = vpop.f32.mrb[0].mxu0
    %v1493 = vadd.f32 %v1444, %v1492
    %v1494 = vpop.f32.mrb[0].mxu0
    %v1495 = vpop.f32.mrb[0].mxu0
    %v1496 = vadd.f32 %v1447, %v1495
    %v1497 = vpop.f32.mrb[0].mxu0
    %1498 = vdwg.mxu0
    %1499 = vmatprep.subr.bf16.mxu0 0
    %1500 = vmatpush1.bf16.msra.mxu0 %v1240
    %1501 = vmatprep.subr.bf16.mxu0 0
    %1502 = vmatpush1.bf16.msra.mxu0 %v1241
    %1503 = vmatprep.subr.bf16.mxu0 0
    %1504 = vmatpush1.bf16.msra.mxu0 %v1242
    %1505 = vmatprep.subr.bf16.mxu0 0
    %1506 = vmatpush1.bf16.msra.mxu0 %v1243
    %1507 = vmatprep.subr.bf16.mxu0 0
    %1508 = vmatpush1.bf16.msra.mxu0 %v1244
    %1509 = vmatprep.subr.bf16.mxu0 0
    %1510 = vmatpush1.bf16.msra.mxu0 %v1245
    %1511 = vmatprep.subr.bf16.mxu0 0
    %1512 = vmatpush1.bf16.msra.mxu0 %v1246
    %1513 = vmatprep.subr.bf16.mxu0 0
    %1514 = vmatpush1.bf16.msra.mxu0 %v1247
    %1515 = vmatprep.subr.bf16.mxu0 0
    %1516 = vmatpush1.bf16.msra.mxu0 %v1248
    %1517 = vmatprep.subr.bf16.mxu0 0
    %1518 = vmatpush1.bf16.msra.mxu0 %v1249
    %1519 = vmatprep.subr.bf16.mxu0 0
    %1520 = vmatpush1.bf16.msra.mxu0 %v1250
    %1521 = vmatprep.subr.bf16.mxu0 0
    %1522 = vmatpush1.bf16.msra.mxu0 %v1251
    %1523 = vmatprep.subr.bf16.mxu0 0
    %1524 = vmatpush1.bf16.msra.mxu0 %v1252
    %1525 = vmatprep.subr.bf16.mxu0 0
    %1526 = vmatpush1.bf16.msra.mxu0 %v1253
    %1527 = vmatprep.subr.bf16.mxu0 0
    %1528 = vmatpush1.bf16.msra.mxu0 %v1254
    %1529 = vmatprep.subr.bf16.mxu0 0
    %1530 = vmatpush1.bf16.msra.mxu0 %v1255
    %1531 = vmatprep.mubr.bf16.mxu0 %v1323
    %1532 = vmatmul.mubr.bf16.gmra.mrb[0].mxu0 %v1322
    %v1533 = vpop.f32.mrb[0].mxu0
    %v1534 = vadd.f32 %v1485, %v1533
    %v1535 = vpop.f32.mrb[0].mxu0
    %v1536 = vpop.f32.mrb[0].mxu0
    %v1537 = vadd.f32 %v1488, %v1536
    %v1538 = vpop.f32.mrb[0].mxu0
    %1539 = vmatprep.mubr.bf16.mxu0 %v1332
    %1540 = vmatmul.mubr.bf16.gmra.mrb[0].mxu0 %v1331
    %v1541 = vpop.f32.mrb[0].mxu0
    %v1542 = vadd.f32 %v1493, %v1541
    %v1543 = vpop.f32.mrb[0].mxu0
    %v1544 = vpop.f32.mrb[0].mxu0
    %v1545 = vadd.f32 %v1496, %v1544
    %v1546 = vpop.f32.mrb[0].mxu0
    %1547 = vdwg.mxu0
    %1548 = vmatprep.subr.bf16.mxu0 0
    %1549 = vmatpush1.bf16.msra.mxu0 %v1256
    %1550 = vmatprep.subr.bf16.mxu0 0
    %1551 = vmatpush1.bf16.msra.mxu0 %v1257
    %1552 = vmatprep.subr.bf16.mxu0 0
    %1553 = vmatpush1.bf16.msra.mxu0 %v1258
    %1554 = vmatprep.subr.bf16.mxu0 0
    %1555 = vmatpush1.bf16.msra.mxu0 %v1259
    %1556 = vmatprep.subr.bf16.mxu0 0
    %1557 = vmatpush1.bf16.msra.mxu0 %v1260
    %1558 = vmatprep.subr.bf16.mxu0 0
    %1559 = vmatpush1.bf16.msra.mxu0 %v1261
    %1560 = vmatprep.subr.bf16.mxu0 0
    %1561 = vmatpush1.bf16.msra.mxu0 %v1262
    %1562 = vmatprep.subr.bf16.mxu0 0
    %1563 = vmatpush1.bf16.msra.mxu0 %v1263
    %1564 = vmatprep.subr.bf16.mxu0 0
    %1565 = vmatpush1.bf16.msra.mxu0 0
    %1566 = vmatprep.subr.bf16.mxu0 0
    %1567 = vmatpush1.bf16.msra.mxu0 0
    %1568 = vmatprep.subr.bf16.mxu0 0
    %1569 = vmatpush1.bf16.msra.mxu0 0
    %1570 = vmatprep.subr.bf16.mxu0 0
    %1571 = vmatpush1.bf16.msra.mxu0 0
    %1572 = vmatprep.subr.bf16.mxu0 0
    %1573 = vmatpush1.bf16.msra.mxu0 0
    %1574 = vmatprep.subr.bf16.mxu0 0
    %1575 = vmatpush1.bf16.msra.mxu0 0
    %1576 = vmatprep.subr.bf16.mxu0 0
    %1577 = vmatpush1.bf16.msra.mxu0 0
    %1578 = vmatprep.subr.bf16.mxu0 0
    %1579 = vmatpush1.bf16.msra.mxu0 0
    %1580 = vmatprep.mubr.bf16.mxu0 0
    %1581 = vmatmul.mubr.bf16.gmra.mrb[0].mxu0 %v1324
    %v1582 = vpop.f32.mrb[0].mxu0
    %v1583 = vadd.f32 %v1534, %v1582
    %v1584 = vpop.f32.mrb[0].mxu0
    %v1585 = vpop.f32.mrb[0].mxu0
    %v1586 = vadd.f32 %v1537, %v1585
    %v1587 = vpop.f32.mrb[0].mxu0
    %1588 = vmatprep.mubr.bf16.mxu0 0
    %1589 = vmatmul.mubr.bf16.gmra.mrb[0].mxu0 %v1333
    %v1590 = vpop.f32.mrb[0].mxu0
    %v1591 = vadd.f32 %v1542, %v1590
    %v1592 = vpop.f32.mrb[0].mxu0
    %v1593 = vpop.f32.mrb[0].mxu0
    %v1594 = vadd.f32 %v1545, %v1593
    %v1595 = vpop.f32.mrb[0].mxu0
    %1596 = vdwg.mxu0
    %v1597 = vsel %vm430, %v1583, 0.0
    %v1598 = vsel %vm430, %v1586, 0.0
    %v1599 = vadd.f32 %v1597, %v1598
    %v1600 = vsel %vm430, %v1591, 0.0
    %v1601 = vadd.f32 %v1599, %v1600
    %v1602 = vsel %vm430, %v1594, 0.0
    %v1603 = vadd.f32 %v1601, %v1602
    %v1604 = vrot.slane %v1603, 4
    %v1605 = vadd.f32 %v1603, %v1604
    %v1606 = vrot.slane %v1605, 2
    %v1607 = vadd.f32 %v1605, %v1606
    %v1608 = vrot.slane %v1607, 1
    %v1609 = vadd.f32 %v1607, %v1608
    %v1610 = vmul.f32 %v1583, %v1583
    %v1611 = vmul.f32 %v1586, %v1586
    %v1612 = vmul.f32 %v1591, %v1591
    %v1613 = vmul.f32 %v1594, %v1594
    %v1614 = vsel %vm430, %v1610, 0.0
    %v1615 = vsel %vm430, %v1611, 0.0
    %v1616 = vadd.f32 %v1614, %v1615
    %v1617 = vsel %vm430, %v1612, 0.0
    %v1618 = vadd.f32 %v1616, %v1617
    %v1619 = vsel %vm430, %v1613, 0.0
    %v1620 = vadd.f32 %v1618, %v1619
    %v1621 = vrot.slane %v1620, 4
    %v1622 = vadd.f32 %v1620, %v1621
    %v1623 = vrot.slane %v1622, 2
    %v1624 = vadd.f32 %v1622, %v1623
    %v1625 = vrot.slane %v1624, 1
    %v1626 = vadd.f32 %v1624, %v1625
    %v1627 = vmul.f32 %v1609, 0.03125
    %v1628 = vmul.f32 %v1626, 0.03125
    %v1629 = vmul.f32 %v1627, %v1627
    %v1630 = vsub.f32 %v1628, %v1629
    %v1631 = vmax.f32 %v1630, 0.0
    %v1632 = vadd.f32 %v1631, 1e-05
    %v1633 = vrsqrt.pop %v1632
    %v1634 = vmul.f32 %v37, %v1633
    %v1635 = vmul.f32 %v1627, %v1634
    %v1637 = vrot.slane %v1635, 7
    %v1639 = vsub.f32 %v37, %v1637
    %v1640 = vlaneseq
    %v1641 = vshrl.u32 %v1640, 7
    %v1642 = vsub.s32 2, %v1641
    %v1643 = vrot.slane %v1634, %v1642
    %v1644 = vmul.f32 %v1583, %v1643
    %v1645 = vmul.f32 %v1586, %v1643
    %v1646 = vmul.f32 %v1591, %v1643
    %v1647 = vmul.f32 %v1594, %v1643
    %v1648 = vlaneseq
    %v1649 = vshrl.u32 %v1648, 7
    %v1650 = vsub.s32 3, %v1649
    %v1651 = vrot.slane %v1639, %v1650
    %v1652 = vadd.f32 %v1644, %v1651
    %v1653 = vadd.f32 %v1645, %v1651
    %v1654 = vadd.f32 %v1646, %v1651
    %v1655 = vadd.f32 %v1647, %v1651
    %v1656 = vmax.f32 %v1652, 0.0
    %v1657 = vmax.f32 %v1653, 0.0
    %v1658 = vmax.f32 %v1654, 0.0
    %v1659 = vmax.f32 %v1655, 0.0
    %v1660 = vld [vmem:[%s7] sm:$0xf]
    %v1661 = vld [vmem:[%s7 + $0x4] sm:$0xf]
    %v1662 = vld [vmem:[%s7 + $0x8] sm:$0xf]
    %v1663 = vld [vmem:[%s7 + $0xc] sm:$0xf]
    %v1664 = vpack.c.bf16 %v1657, %v1656
    %v1665 = vpack.c.bf16 %v1659, %v1658
    %v1670 = vunpack.c.l.b16 %v1660
    %v1671 = vunpack.c.l.b16 %v1661
    %v1672 = vunpack.c.l.b16 %v1662
    %v1673 = vunpack.c.l.b16 %v1663
    %v1674 = vpack.c.b16 %v1671, %v1670
    %v1675 = vpack.c.b16 %v1673, %v1672
    %v1679 = vsel %vm430, %v1664, 0
    %v1682 = vsel %vm430, %v1665, 0
    %1684 = vmatprep.subr.bf16.mxu0 0
    %1685 = vmatpush1.bf16.msra.mxu0 %v1674
    %1686 = vmatprep.subr.bf16.mxu0 0
    %1687 = vmatpush1.bf16.msra.mxu0 %v1675
    %1688 = vmatprep.subr.bf16.mxu0 0
    %1689 = vmatpush1.bf16.msra.mxu0 0
    %1690 = vmatprep.subr.bf16.mxu0 0
    %1691 = vmatpush1.bf16.msra.mxu0 0
    %1692 = vmatprep.subr.bf16.mxu0 0
    %1693 = vmatpush1.bf16.msra.mxu0 0
    %1694 = vmatprep.subr.bf16.mxu0 0
    %1695 = vmatpush1.bf16.msra.mxu0 0
    %1696 = vmatprep.subr.bf16.mxu0 0
    %1697 = vmatpush1.bf16.msra.mxu0 0
    %1698 = vmatprep.subr.bf16.mxu0 0
    %1699 = vmatpush1.bf16.msra.mxu0 0
    %1700 = vmatprep.subr.bf16.mxu0 0
    %1701 = vmatpush1.bf16.msra.mxu0 0
    %1702 = vmatprep.subr.bf16.mxu0 0
    %1703 = vmatpush1.bf16.msra.mxu0 0
    %1704 = vmatprep.subr.bf16.mxu0 0
    %1705 = vmatpush1.bf16.msra.mxu0 0
    %1706 = vmatprep.subr.bf16.mxu0 0
    %1707 = vmatpush1.bf16.msra.mxu0 0
    %1708 = vmatprep.subr.bf16.mxu0 0
    %1709 = vmatpush1.bf16.msra.mxu0 0
    %1710 = vmatprep.subr.bf16.mxu0 0
    %1711 = vmatpush1.bf16.msra.mxu0 0
    %1712 = vmatprep.subr.bf16.mxu0 0
    %1713 = vmatpush1.bf16.msra.mxu0 0
    %1714 = vmatprep.subr.bf16.mxu0 0
    %1715 = vmatpush1.bf16.msra.mxu0 0
    %1716 = vmatprep.mubr.bf16.mxu0 0
    %1717 = vmatmul.mubr.bf16.gmra.mrb[0].mxu0 %v1679
    %v1718 = vpop.f32.mrb[0].mxu0
    %v1719 = vadd.f32 0.0, %v1718
    %v1720 = vpop.f32.mrb[0].mxu0
    %v1721 = vpop.f32.mrb[0].mxu0
    %v1722 = vadd.f32 0.0, %v1721
    %v1723 = vpop.f32.mrb[0].mxu0
    %1724 = vmatprep.mubr.bf16.mxu0 0
    %1725 = vmatmul.mubr.bf16.gmra.mrb[0].mxu0 %v1682
    %v1726 = vpop.f32.mrb[0].mxu0
    %v1727 = vadd.f32 0.0, %v1726
    %v1728 = vpop.f32.mrb[0].mxu0
    %v1729 = vpop.f32.mrb[0].mxu0
    %v1730 = vadd.f32 0.0, %v1729
    %v1731 = vpop.f32.mrb[0].mxu0
    %1732 = vdwg.mxu0
    %v1733 = vadd.f32 %v1719, %v1722
    %v1734 = vadd.f32 %v1733, %v1727
    %v1735 = vadd.f32 %v1734, %v1730
    %v1736 = vrot.slane %v1735, 4
    %v1737 = vadd.f32 %v1735, %v1736
    %v1738 = vrot.slane %v1737, 2
    %v1739 = vadd.f32 %v1737, %v1738
    %v1740 = vrot.slane %v1739, 1
    %v1741 = vadd.f32 %v1739, %v1740
    %v1742 = vmul.f32 %v1719, %v1719
    %v1743 = vmul.f32 %v1722, %v1722
    %v1744 = vmul.f32 %v1727, %v1727
    %v1745 = vmul.f32 %v1730, %v1730
    %v1746 = vadd.f32 %v1742, %v1743
    %v1747 = vadd.f32 %v1746, %v1744
    %v1748 = vadd.f32 %v1747, %v1745
    %v1749 = vrot.slane %v1748, 4
    %v1750 = vadd.f32 %v1748, %v1749
    %v1751 = vrot.slane %v1750, 2
    %v1752 = vadd.f32 %v1750, %v1751
    %v1753 = vrot.slane %v1752, 1
    %v1754 = vadd.f32 %v1752, %v1753
    %v1755 = vmul.f32 %v1741, 0.03125
    %v1756 = vmul.f32 %v1754, 0.03125
    %v1757 = vmul.f32 %v1755, %v1755
    %v1758 = vsub.f32 %v1756, %v1757
    %v1759 = vmax.f32 %v1758, 0.0
    %v1760 = vadd.f32 %v1759, 1e-05
    %v1761 = vrsqrt.pop %v1760
    %v1762 = vmul.f32 %v37, %v1761
    %v1763 = vmul.f32 %v1755, %v1762
    %v1765 = vrot.slane %v1763, 7
    %v1767 = vsub.f32 %v37, %v1765
    %v1768 = vlaneseq
    %v1769 = vshrl.u32 %v1768, 7
    %v1770 = vsub.s32 4, %v1769
    %v1771 = vrot.slane %v1762, %v1770
    %v1772 = vmul.f32 %v1719, %v1771
    %v1773 = vmul.f32 %v1722, %v1771
    %v1774 = vmul.f32 %v1727, %v1771
    %v1775 = vmul.f32 %v1730, %v1771
    %v1776 = vlaneseq
    %v1777 = vshrl.u32 %v1776, 7
    %v1778 = vsub.s32 5, %v1777
    %v1779 = vrot.slane %v1767, %v1778
    %v1780 = vadd.f32 %v1772, %v1779
    %v1781 = vadd.f32 %v1773, %v1779
    %v1782 = vadd.f32 %v1774, %v1779
    %v1783 = vadd.f32 %v1775, %v1779
    %v1784 = vadd.f32 %v1780, %v426
    %v1785 = vadd.f32 %v1781, %v427
    %v1786 = vadd.f32 %v1782, %v428
    %v1787 = vadd.f32 %v1783, %v429
    %v1788 = vmax.f32 %v1784, 0.0
    %v1789 = vmax.f32 %v1785, 0.0
    %v1790 = vmax.f32 %v1786, 0.0
    %v1791 = vmax.f32 %v1787, 0.0
    %v1792 = vld [vmem:[%s5] sm:$0xf]
    %v1793 = vld [vmem:[%s5 + $0x4] sm:$0xf]
    %v1794 = vld [vmem:[%s5 + $0x8] sm:$0xf]
    %v1795 = vld [vmem:[%s5 + $0xc] sm:$0xf]
    %v1796 = vld [vmem:[%s5 + $0x10] sm:$0xf]
    %v1797 = vld [vmem:[%s5 + $0x14] sm:$0xf]
    %v1798 = vld [vmem:[%s5 + $0x18] sm:$0xf]
    %v1799 = vld [vmem:[%s5 + $0x1c] sm:$0xf]
    %v1800 = vld [vmem:[%s5 + $0x20] sm:$0xf]
    %v1801 = vld [vmem:[%s5 + $0x24] sm:$0xf]
    %v1802 = vld [vmem:[%s5 + $0x28] sm:$0xf]
    %v1803 = vld [vmem:[%s5 + $0x2c] sm:$0xf]
    %v1804 = vld [vmem:[%s5 + $0x30] sm:$0xf]
    %v1805 = vld [vmem:[%s5 + $0x34] sm:$0xf]
    %v1806 = vld [vmem:[%s5 + $0x38] sm:$0xf]
    %v1807 = vld [vmem:[%s5 + $0x3c] sm:$0xf]
    %v1808 = vpack.c.bf16 %v1789, %v1788
    %v1809 = vpack.c.bf16 %v1791, %v1790
    %v1826 = vunpack.c.l.b16 %v1792
    %v1827 = vunpack.c.l.b16 %v1793
    %v1828 = vunpack.c.l.b16 %v1794
    %v1829 = vunpack.c.l.b16 %v1795
    %v1830 = vunpack.c.l.b16 %v1796
    %v1831 = vunpack.c.l.b16 %v1797
    %v1832 = vunpack.c.l.b16 %v1798
    %v1833 = vunpack.c.l.b16 %v1799
    %v1834 = vunpack.c.l.b16 %v1800
    %v1835 = vunpack.c.l.b16 %v1801
    %v1836 = vunpack.c.l.b16 %v1802
    %v1837 = vunpack.c.l.b16 %v1803
    %v1838 = vunpack.c.l.b16 %v1804
    %v1839 = vunpack.c.l.b16 %v1805
    %v1840 = vunpack.c.l.b16 %v1806
    %v1841 = vunpack.c.l.b16 %v1807
    %v1842 = vpack.c.b16 %v1827, %v1826
    %v1843 = vpack.c.b16 %v1829, %v1828
    %v1844 = vpack.c.b16 %v1831, %v1830
    %v1845 = vpack.c.b16 %v1833, %v1832
    %v1846 = vpack.c.b16 %v1835, %v1834
    %v1847 = vpack.c.b16 %v1837, %v1836
    %v1848 = vpack.c.b16 %v1839, %v1838
    %v1849 = vpack.c.b16 %v1841, %v1840
    %1858 = vmatprep.subr.bf16.mxu0 0
    %1859 = vmatpush1.bf16.msra.mxu0 %v1842
    %1860 = vmatprep.subr.bf16.mxu0 0
    %1861 = vmatpush1.bf16.msra.mxu0 %v1843
    %1862 = vmatprep.subr.bf16.mxu0 0
    %1863 = vmatpush1.bf16.msra.mxu0 %v1844
    %1864 = vmatprep.subr.bf16.mxu0 0
    %1865 = vmatpush1.bf16.msra.mxu0 %v1845
    %1866 = vmatprep.subr.bf16.mxu0 0
    %1867 = vmatpush1.bf16.msra.mxu0 %v1846
    %1868 = vmatprep.subr.bf16.mxu0 0
    %1869 = vmatpush1.bf16.msra.mxu0 %v1847
    %1870 = vmatprep.subr.bf16.mxu0 0
    %1871 = vmatpush1.bf16.msra.mxu0 %v1848
    %1872 = vmatprep.subr.bf16.mxu0 0
    %1873 = vmatpush1.bf16.msra.mxu0 %v1849
    %1874 = vmatprep.subr.bf16.mxu0 0
    %1875 = vmatpush1.bf16.msra.mxu0 0
    %1876 = vmatprep.subr.bf16.mxu0 0
    %1877 = vmatpush1.bf16.msra.mxu0 0
    %1878 = vmatprep.subr.bf16.mxu0 0
    %1879 = vmatpush1.bf16.msra.mxu0 0
    %1880 = vmatprep.subr.bf16.mxu0 0
    %1881 = vmatpush1.bf16.msra.mxu0 0
    %1882 = vmatprep.subr.bf16.mxu0 0
    %1883 = vmatpush1.bf16.msra.mxu0 0
    %1884 = vmatprep.subr.bf16.mxu0 0
    %1885 = vmatpush1.bf16.msra.mxu0 0
    %1886 = vmatprep.subr.bf16.mxu0 0
    %1887 = vmatpush1.bf16.msra.mxu0 0
    %1888 = vmatprep.subr.bf16.mxu0 0
    %1889 = vmatpush1.bf16.msra.mxu0 0
    %1890 = vmatprep.mubr.bf16.mxu0 0
    %1891 = vmatmul.mubr.bf16.gmra.mrb[0].mxu0 %v1808
    %v1892 = vpop.f32.mrb[0].mxu0
    %v1893 = vadd.f32 0.0, %v1892
    %v1894 = vpop.f32.mrb[0].mxu0
    %v1895 = vpop.f32.mrb[0].mxu0
    %v1896 = vadd.f32 0.0, %v1895
    %v1897 = vpop.f32.mrb[0].mxu0
    %1898 = vmatprep.mubr.bf16.mxu0 0
    %1899 = vmatmul.mubr.bf16.gmra.mrb[0].mxu0 %v1809
    %v1900 = vpop.f32.mrb[0].mxu0
    %v1901 = vadd.f32 0.0, %v1900
    %v1902 = vpop.f32.mrb[0].mxu0
    %v1903 = vpop.f32.mrb[0].mxu0
    %v1904 = vadd.f32 0.0, %v1903
    %v1905 = vpop.f32.mrb[0].mxu0
    %1906 = vdwg.mxu0
    %v1907 = vsel %vm430, %v1893, 0.0
    %v1908 = vsel %vm430, %v1896, 0.0
    %v1909 = vadd.f32 %v1907, %v1908
    %v1910 = vsel %vm430, %v1901, 0.0
    %v1911 = vadd.f32 %v1909, %v1910
    %v1912 = vsel %vm430, %v1904, 0.0
    %v1913 = vadd.f32 %v1911, %v1912
    %v1914 = vrot.slane %v1913, 4
    %v1915 = vadd.f32 %v1913, %v1914
    %v1916 = vrot.slane %v1915, 2
    %v1917 = vadd.f32 %v1915, %v1916
    %v1918 = vrot.slane %v1917, 1
    %v1919 = vadd.f32 %v1917, %v1918
    %v1920 = vmul.f32 %v1893, %v1893
    %v1921 = vmul.f32 %v1896, %v1896
    %v1922 = vmul.f32 %v1901, %v1901
    %v1923 = vmul.f32 %v1904, %v1904
    %v1924 = vsel %vm430, %v1920, 0.0
    %v1925 = vsel %vm430, %v1921, 0.0
    %v1926 = vadd.f32 %v1924, %v1925
    %v1927 = vsel %vm430, %v1922, 0.0
    %v1928 = vadd.f32 %v1926, %v1927
    %v1929 = vsel %vm430, %v1923, 0.0
    %v1930 = vadd.f32 %v1928, %v1929
    %v1931 = vrot.slane %v1930, 4
    %v1932 = vadd.f32 %v1930, %v1931
    %v1933 = vrot.slane %v1932, 2
    %v1934 = vadd.f32 %v1932, %v1933
    %v1935 = vrot.slane %v1934, 1
    %v1936 = vadd.f32 %v1934, %v1935
    %v1937 = vmul.f32 %v1919, 0.03125
    %v1938 = vmul.f32 %v1936, 0.03125
    %v1939 = vmul.f32 %v1937, %v1937
    %v1940 = vsub.f32 %v1938, %v1939
    %v1941 = vmax.f32 %v1940, 0.0
    %v1942 = vadd.f32 %v1941, 1e-05
    %v1943 = vrsqrt.pop %v1942
    %v1944 = vmul.f32 %v38, %v1943
    %v1945 = vmul.f32 %v1937, %v1944
    %v1947 = vrot.slane %v1945, 7
    %v1949 = vsub.f32 %v38, %v1947
    %v1950 = vlaneseq
    %v1951 = vshrl.u32 %v1950, 7
    %v1952 = vsub.s32 0, %v1951
    %v1953 = vrot.slane %v1944, %v1952
    %v1954 = vmul.f32 %v1893, %v1953
    %v1955 = vmul.f32 %v1896, %v1953
    %v1956 = vmul.f32 %v1901, %v1953
    %v1957 = vmul.f32 %v1904, %v1953
    %v1958 = vlaneseq
    %v1959 = vshrl.u32 %v1958, 7
    %v1960 = vsub.s32 1, %v1959
    %v1961 = vrot.slane %v1949, %v1960
    %v1962 = vadd.f32 %v1954, %v1961
    %v1963 = vadd.f32 %v1955, %v1961
    %v1964 = vadd.f32 %v1956, %v1961
    %v1965 = vadd.f32 %v1957, %v1961
    %v1966 = vmax.f32 %v1962, 0.0
    %v1967 = vmax.f32 %v1963, 0.0
    %v1968 = vmax.f32 %v1964, 0.0
    %v1969 = vmax.f32 %v1965, 0.0
    %s1970 = scalar_lea.vmem %s6, 48
    %v1971 = vld [vmem:[%s1970] sm:$0xff]
    %v1972 = vld [vmem:[%s1970 + $0x8] sm:$0xf]
    %v1973 = vld [vmem:[%s1970 + $0xc] sm:$0xff]
    %v1974 = vld [vmem:[%s1970 + $0x14] sm:$0xf]
    %v1975 = vld [vmem:[%s1970 + $0x18] sm:$0xff]
    %v1976 = vld [vmem:[%s1970 + $0x20] sm:$0xf]
    %v1977 = vld [vmem:[%s1970 + $0x24] sm:$0xff]
    %v1978 = vld [vmem:[%s1970 + $0x2c] sm:$0xf]
    %v1979 = vpack.c.bf16 %v1967, %v1966
    %v1980 = vpack.c.bf16 %v1969, %v1968
    %v1989 = vunpack.c.l.b16 %v1971
    %v1990 = vunpack.c.h.b16 %v1971
    %v1991 = vunpack.c.l.b16 %v1972
    %v1992 = vunpack.c.l.b16 %v1973
    %v1993 = vunpack.c.h.b16 %v1973
    %v1994 = vunpack.c.l.b16 %v1974
    %v1995 = vunpack.c.l.b16 %v1975
    %v1996 = vunpack.c.h.b16 %v1975
    %v1997 = vunpack.c.l.b16 %v1976
    %v1998 = vunpack.c.l.b16 %v1977
    %v1999 = vunpack.c.h.b16 %v1977
    %v2000 = vunpack.c.l.b16 %v1978
    %v2001 = vpack.c.b16 %v1992, %v1989
    %v2002 = vpack.c.b16 %v1993, %v1990
    %v2003 = vpack.c.b16 %v1994, %v1991
    %v2004 = vpack.c.b16 %v1998, %v1995
    %v2005 = vpack.c.b16 %v1999, %v1996
    %v2006 = vpack.c.b16 %v2000, %v1997
    %v2014 = vsel %vm430, %v1979, 0
    %v2017 = vsel %vm430, %v1980, 0
    %2019 = vmatprep.subr.bf16.mxu0 %v2002
    %2020 = vmatpush1.bf16.msra.mxu0 %v2001
    %2021 = vmatprep.subr.bf16.mxu0 %v2005
    %2022 = vmatpush1.bf16.msra.mxu0 %v2004
    %2023 = vmatprep.subr.bf16.mxu0 0
    %2024 = vmatpush1.bf16.msra.mxu0 0
    %2025 = vmatprep.subr.bf16.mxu0 0
    %2026 = vmatpush1.bf16.msra.mxu0 0
    %2027 = vmatprep.subr.bf16.mxu0 0
    %2028 = vmatpush1.bf16.msra.mxu0 0
    %2029 = vmatprep.subr.bf16.mxu0 0
    %2030 = vmatpush1.bf16.msra.mxu0 0
    %2031 = vmatprep.subr.bf16.mxu0 0
    %2032 = vmatpush1.bf16.msra.mxu0 0
    %2033 = vmatprep.subr.bf16.mxu0 0
    %2034 = vmatpush1.bf16.msra.mxu0 0
    %2035 = vmatprep.subr.bf16.mxu0 0
    %2036 = vmatpush1.bf16.msra.mxu0 0
    %2037 = vmatprep.subr.bf16.mxu0 0
    %2038 = vmatpush1.bf16.msra.mxu0 0
    %2039 = vmatprep.subr.bf16.mxu0 0
    %2040 = vmatpush1.bf16.msra.mxu0 0
    %2041 = vmatprep.subr.bf16.mxu0 0
    %2042 = vmatpush1.bf16.msra.mxu0 0
    %2043 = vmatprep.subr.bf16.mxu0 0
    %2044 = vmatpush1.bf16.msra.mxu0 0
    %2045 = vmatprep.subr.bf16.mxu0 0
    %2046 = vmatpush1.bf16.msra.mxu0 0
    %2047 = vmatprep.subr.bf16.mxu0 0
    %2048 = vmatpush1.bf16.msra.mxu0 0
    %2049 = vmatprep.subr.bf16.mxu0 0
    %2050 = vmatpush1.bf16.msra.mxu0 0
    %2051 = vmatprep.mubr.bf16.mxu0 0
    %2052 = vmatmul.mubr.bf16.gmra.mrb[0].mxu0 %v2014
    %v2053 = vpop.f32.mrb[0].mxu0
    %v2054 = vadd.f32 0.0, %v2053
    %v2055 = vpop.f32.mrb[0].mxu0
    %v2056 = vadd.f32 0.0, %v2055
    %v2057 = vpop.f32.mrb[0].mxu0
    %v2058 = vadd.f32 0.0, %v2057
    %v2059 = vpop.f32.mrb[0].mxu0
    %v2060 = vadd.f32 0.0, %v2059
    %2061 = vmatprep.mubr.bf16.mxu0 0
    %2062 = vmatmul.mubr.bf16.gmra.mrb[0].mxu0 %v2017
    %v2063 = vpop.f32.mrb[0].mxu0
    %v2064 = vadd.f32 0.0, %v2063
    %v2065 = vpop.f32.mrb[0].mxu0
    %v2066 = vadd.f32 0.0, %v2065
    %v2067 = vpop.f32.mrb[0].mxu0
    %v2068 = vadd.f32 0.0, %v2067
    %v2069 = vpop.f32.mrb[0].mxu0
    %v2070 = vadd.f32 0.0, %v2069
    %2071 = vdwg.mxu0
    %2072 = vmatprep.subr.bf16.mxu0 0
    %2073 = vmatpush1.bf16.msra.mxu0 %v2003
    %2074 = vmatprep.subr.bf16.mxu0 0
    %2075 = vmatpush1.bf16.msra.mxu0 %v2006
    %2076 = vmatprep.subr.bf16.mxu0 0
    %2077 = vmatpush1.bf16.msra.mxu0 0
    %2078 = vmatprep.subr.bf16.mxu0 0
    %2079 = vmatpush1.bf16.msra.mxu0 0
    %2080 = vmatprep.subr.bf16.mxu0 0
    %2081 = vmatpush1.bf16.msra.mxu0 0
    %2082 = vmatprep.subr.bf16.mxu0 0
    %2083 = vmatpush1.bf16.msra.mxu0 0
    %2084 = vmatprep.subr.bf16.mxu0 0
    %2085 = vmatpush1.bf16.msra.mxu0 0
    %2086 = vmatprep.subr.bf16.mxu0 0
    %2087 = vmatpush1.bf16.msra.mxu0 0
    %2088 = vmatprep.subr.bf16.mxu0 0
    %2089 = vmatpush1.bf16.msra.mxu0 0
    %2090 = vmatprep.subr.bf16.mxu0 0
    %2091 = vmatpush1.bf16.msra.mxu0 0
    %2092 = vmatprep.subr.bf16.mxu0 0
    %2093 = vmatpush1.bf16.msra.mxu0 0
    %2094 = vmatprep.subr.bf16.mxu0 0
    %2095 = vmatpush1.bf16.msra.mxu0 0
    %2096 = vmatprep.subr.bf16.mxu0 0
    %2097 = vmatpush1.bf16.msra.mxu0 0
    %2098 = vmatprep.subr.bf16.mxu0 0
    %2099 = vmatpush1.bf16.msra.mxu0 0
    %2100 = vmatprep.subr.bf16.mxu0 0
    %2101 = vmatpush1.bf16.msra.mxu0 0
    %2102 = vmatprep.subr.bf16.mxu0 0
    %2103 = vmatpush1.bf16.msra.mxu0 0
    %2104 = vmatprep.mubr.bf16.mxu0 0
    %2105 = vmatmul.mubr.bf16.gmra.mrb[0].mxu0 %v2014
    %v2106 = vpop.f32.mrb[0].mxu0
    %v2107 = vadd.f32 0.0, %v2106
    %v2108 = vpop.f32.mrb[0].mxu0
    %v2109 = vpop.f32.mrb[0].mxu0
    %v2110 = vadd.f32 0.0, %v2109
    %v2111 = vpop.f32.mrb[0].mxu0
    %2112 = vmatprep.mubr.bf16.mxu0 0
    %2113 = vmatmul.mubr.bf16.gmra.mrb[0].mxu0 %v2017
    %v2114 = vpop.f32.mrb[0].mxu0
    %v2115 = vadd.f32 0.0, %v2114
    %v2116 = vpop.f32.mrb[0].mxu0
    %v2117 = vpop.f32.mrb[0].mxu0
    %v2118 = vadd.f32 0.0, %v2117
    %v2119 = vpop.f32.mrb[0].mxu0
    %2120 = vdwg.mxu0
    %2125 = vrot.lane.b32.xlu0 %v2054, 96
    %v2126 = vpop.permute.xlu0 %2125
    %2127 = vrot.lane.b32.xlu0 %v2058, 96
    %v2128 = vpop.permute.xlu0 %2127
    %2129 = vrot.lane.b32.xlu0 %v2064, 96
    %v2130 = vpop.permute.xlu0 %2129
    %2131 = vrot.lane.b32.xlu0 %v2068, 96
    %v2132 = vpop.permute.xlu0 %2131
    %2137 = vrot.lane.b32.xlu0 %v2054, 64
    %v2138 = vpop.permute.xlu0 %2137
    %2139 = vrot.lane.b32.xlu0 %v2058, 64
    %v2140 = vpop.permute.xlu0 %2139
    %2141 = vrot.lane.b32.xlu0 %v2064, 64
    %v2142 = vpop.permute.xlu0 %2141
    %2143 = vrot.lane.b32.xlu0 %v2068, 64
    %v2144 = vpop.permute.xlu0 %2143
    %2149 = vrot.lane.b32.xlu0 %v2054, 32
    %v2150 = vpop.permute.xlu0 %2149
    %2151 = vrot.lane.b32.xlu0 %v2058, 32
    %v2152 = vpop.permute.xlu0 %2151
    %2153 = vrot.lane.b32.xlu0 %v2064, 32
    %v2154 = vpop.permute.xlu0 %2153
    %2155 = vrot.lane.b32.xlu0 %v2068, 32
    %v2156 = vpop.permute.xlu0 %2155
    %2165 = vrot.lane.b32.xlu0 %v2056, 96
    %v2166 = vpop.permute.xlu0 %2165
    %2167 = vrot.lane.b32.xlu0 %v2060, 96
    %v2168 = vpop.permute.xlu0 %2167
    %2169 = vrot.lane.b32.xlu0 %v2066, 96
    %v2170 = vpop.permute.xlu0 %2169
    %2171 = vrot.lane.b32.xlu0 %v2070, 96
    %v2172 = vpop.permute.xlu0 %2171
    %2177 = vrot.lane.b32.xlu0 %v2056, 64
    %v2178 = vpop.permute.xlu0 %2177
    %2179 = vrot.lane.b32.xlu0 %v2060, 64
    %v2180 = vpop.permute.xlu0 %2179
    %2181 = vrot.lane.b32.xlu0 %v2066, 64
    %v2182 = vpop.permute.xlu0 %2181
    %2183 = vrot.lane.b32.xlu0 %v2070, 64
    %v2184 = vpop.permute.xlu0 %2183
    %2189 = vrot.lane.b32.xlu0 %v2056, 32
    %v2190 = vpop.permute.xlu0 %2189
    %2191 = vrot.lane.b32.xlu0 %v2060, 32
    %v2192 = vpop.permute.xlu0 %2191
    %2193 = vrot.lane.b32.xlu0 %v2066, 32
    %v2194 = vpop.permute.xlu0 %2193
    %2195 = vrot.lane.b32.xlu0 %v2070, 32
    %v2196 = vpop.permute.xlu0 %2195
    %v2201 = vpack.c.bf16 %v2058, %v2054
    %v2202 = vpack.c.bf16 %v2068, %v2064
    %v2203 = vpack.c.bf16 %v2128, %v2126
    %v2204 = vpack.c.bf16 %v2132, %v2130
    %v2205 = vpack.c.bf16 %v2140, %v2138
    %v2206 = vpack.c.bf16 %v2144, %v2142
    %v2207 = vpack.c.bf16 %v2152, %v2150
    %v2208 = vpack.c.bf16 %v2156, %v2154
    %v2209 = vpack.c.bf16 %v2060, %v2056
    %v2210 = vpack.c.bf16 %v2070, %v2066
    %v2211 = vpack.c.bf16 %v2168, %v2166
    %v2212 = vpack.c.bf16 %v2172, %v2170
    %v2213 = vpack.c.bf16 %v2180, %v2178
    %v2214 = vpack.c.bf16 %v2184, %v2182
    %v2215 = vpack.c.bf16 %v2192, %v2190
    %v2216 = vpack.c.bf16 %v2196, %v2194
    %v2217 = vpack.c.bf16 %v2110, %v2107
    %v2218 = vpack.c.bf16 %v2118, %v2115
    %v2227 = vunpack.c.l.b16 %v76
    %v2228 = vunpack.c.h.b16 %v76
    %v2229 = vunpack.c.l.b16 %v77
    %v2230 = vunpack.c.l.b16 %v78
    %v2231 = vunpack.c.h.b16 %v78
    %v2232 = vunpack.c.l.b16 %v79
    %v2233 = vunpack.c.l.b16 %v80
    %v2234 = vunpack.c.h.b16 %v80
    %v2235 = vunpack.c.l.b16 %v81
    %v2236 = vunpack.c.l.b16 %v82
    %v2237 = vunpack.c.h.b16 %v82
    %v2238 = vunpack.c.l.b16 %v83
    %v2239 = vpack.c.b16 %v2230, %v2227
    %v2240 = vpack.c.b16 %v2231, %v2228
    %v2241 = vpack.c.b16 %v2232, %v2229
    %v2242 = vpack.c.b16 %v2236, %v2233
    %v2243 = vpack.c.b16 %v2237, %v2234
    %v2244 = vpack.c.b16 %v2238, %v2235
    %v2250 = vsel %vm430, %v2241, 0
    %v2253 = vsel %vm430, %v2244, 0
    %2255 = vmatprep.subr.bf16.mxu0 0
    %2256 = vmatpush1.bf16.msra.mxu0 %v2201
    %2257 = vmatprep.subr.bf16.mxu0 0
    %2258 = vmatpush1.bf16.msra.mxu0 %v2202
    %2259 = vmatprep.subr.bf16.mxu0 0
    %2260 = vmatpush1.bf16.msra.mxu0 %v2203
    %2261 = vmatprep.subr.bf16.mxu0 0
    %2262 = vmatpush1.bf16.msra.mxu0 %v2204
    %2263 = vmatprep.subr.bf16.mxu0 0
    %2264 = vmatpush1.bf16.msra.mxu0 %v2205
    %2265 = vmatprep.subr.bf16.mxu0 0
    %2266 = vmatpush1.bf16.msra.mxu0 %v2206
    %2267 = vmatprep.subr.bf16.mxu0 0
    %2268 = vmatpush1.bf16.msra.mxu0 %v2207
    %2269 = vmatprep.subr.bf16.mxu0 0
    %2270 = vmatpush1.bf16.msra.mxu0 %v2208
    %2271 = vmatprep.subr.bf16.mxu0 0
    %2272 = vmatpush1.bf16.msra.mxu0 %v2209
    %2273 = vmatprep.subr.bf16.mxu0 0
    %2274 = vmatpush1.bf16.msra.mxu0 %v2210
    %2275 = vmatprep.subr.bf16.mxu0 0
    %2276 = vmatpush1.bf16.msra.mxu0 %v2211
    %2277 = vmatprep.subr.bf16.mxu0 0
    %2278 = vmatpush1.bf16.msra.mxu0 %v2212
    %2279 = vmatprep.subr.bf16.mxu0 0
    %2280 = vmatpush1.bf16.msra.mxu0 %v2213
    %2281 = vmatprep.subr.bf16.mxu0 0
    %2282 = vmatpush1.bf16.msra.mxu0 %v2214
    %2283 = vmatprep.subr.bf16.mxu0 0
    %2284 = vmatpush1.bf16.msra.mxu0 %v2215
    %2285 = vmatprep.subr.bf16.mxu0 0
    %2286 = vmatpush1.bf16.msra.mxu0 %v2216
    %2287 = vmatprep.mubr.bf16.mxu0 %v2240
    %2288 = vmatmul.mubr.bf16.gmra.mrb[0].mxu0 %v2239
    %v2289 = vpop.f32.mrb[0].mxu0
    %v2290 = vadd.f32 0.0, %v2289
    %v2291 = vpop.f32.mrb[0].mxu0
    %v2292 = vpop.f32.mrb[0].mxu0
    %v2293 = vadd.f32 0.0, %v2292
    %v2294 = vpop.f32.mrb[0].mxu0
    %2295 = vmatprep.mubr.bf16.mxu0 %v2243
    %2296 = vmatmul.mubr.bf16.gmra.mrb[0].mxu0 %v2242
    %v2297 = vpop.f32.mrb[0].mxu0
    %v2298 = vadd.f32 0.0, %v2297
    %v2299 = vpop.f32.mrb[0].mxu0
    %v2300 = vpop.f32.mrb[0].mxu0
    %v2301 = vadd.f32 0.0, %v2300
    %v2302 = vpop.f32.mrb[0].mxu0
    %2303 = vdwg.mxu0
    %2304 = vmatprep.subr.bf16.mxu0 0
    %2305 = vmatpush1.bf16.msra.mxu0 %v2217
    %2306 = vmatprep.subr.bf16.mxu0 0
    %2307 = vmatpush1.bf16.msra.mxu0 %v2218
    %2308 = vmatprep.subr.bf16.mxu0 0
    %2309 = vmatpush1.bf16.msra.mxu0 0
    %2310 = vmatprep.subr.bf16.mxu0 0
    %2311 = vmatpush1.bf16.msra.mxu0 0
    %2312 = vmatprep.subr.bf16.mxu0 0
    %2313 = vmatpush1.bf16.msra.mxu0 0
    %2314 = vmatprep.subr.bf16.mxu0 0
    %2315 = vmatpush1.bf16.msra.mxu0 0
    %2316 = vmatprep.subr.bf16.mxu0 0
    %2317 = vmatpush1.bf16.msra.mxu0 0
    %2318 = vmatprep.subr.bf16.mxu0 0
    %2319 = vmatpush1.bf16.msra.mxu0 0
    %2320 = vmatprep.subr.bf16.mxu0 0
    %2321 = vmatpush1.bf16.msra.mxu0 0
    %2322 = vmatprep.subr.bf16.mxu0 0
    %2323 = vmatpush1.bf16.msra.mxu0 0
    %2324 = vmatprep.subr.bf16.mxu0 0
    %2325 = vmatpush1.bf16.msra.mxu0 0
    %2326 = vmatprep.subr.bf16.mxu0 0
    %2327 = vmatpush1.bf16.msra.mxu0 0
    %2328 = vmatprep.subr.bf16.mxu0 0
    %2329 = vmatpush1.bf16.msra.mxu0 0
    %2330 = vmatprep.subr.bf16.mxu0 0
    %2331 = vmatpush1.bf16.msra.mxu0 0
    %2332 = vmatprep.subr.bf16.mxu0 0
    %2333 = vmatpush1.bf16.msra.mxu0 0
    %2334 = vmatprep.subr.bf16.mxu0 0
    %2335 = vmatpush1.bf16.msra.mxu0 0
    %2336 = vmatprep.mubr.bf16.mxu0 0
    %2337 = vmatmul.mubr.bf16.gmra.mrb[0].mxu0 %v2250
    %v2338 = vpop.f32.mrb[0].mxu0
    %v2339 = vadd.f32 %v2290, %v2338
    %v2340 = vpop.f32.mrb[0].mxu0
    %v2341 = vpop.f32.mrb[0].mxu0
    %v2342 = vadd.f32 %v2293, %v2341
    %v2343 = vpop.f32.mrb[0].mxu0
    %2344 = vmatprep.mubr.bf16.mxu0 0
    %2345 = vmatmul.mubr.bf16.gmra.mrb[0].mxu0 %v2253
    %v2346 = vpop.f32.mrb[0].mxu0
    %v2347 = vadd.f32 %v2298, %v2346
    %v2348 = vpop.f32.mrb[0].mxu0
    %v2349 = vpop.f32.mrb[0].mxu0
    %v2350 = vadd.f32 %v2301, %v2349
    %v2351 = vpop.f32.mrb[0].mxu0
    %2352 = vdwg.mxu0
    %v2353 = vsel %vm430, %v2339, 0.0
    %v2354 = vsel %vm430, %v2342, 0.0
    %v2355 = vadd.f32 %v2353, %v2354
    %v2356 = vsel %vm430, %v2347, 0.0
    %v2357 = vadd.f32 %v2355, %v2356
    %v2358 = vsel %vm430, %v2350, 0.0
    %v2359 = vadd.f32 %v2357, %v2358
    %v2360 = vrot.slane %v2359, 4
    %v2361 = vadd.f32 %v2359, %v2360
    %v2362 = vrot.slane %v2361, 2
    %v2363 = vadd.f32 %v2361, %v2362
    %v2364 = vrot.slane %v2363, 1
    %v2365 = vadd.f32 %v2363, %v2364
    %v2366 = vmul.f32 %v2339, %v2339
    %v2367 = vmul.f32 %v2342, %v2342
    %v2368 = vmul.f32 %v2347, %v2347
    %v2369 = vmul.f32 %v2350, %v2350
    %v2370 = vsel %vm430, %v2366, 0.0
    %v2371 = vsel %vm430, %v2367, 0.0
    %v2372 = vadd.f32 %v2370, %v2371
    %v2373 = vsel %vm430, %v2368, 0.0
    %v2374 = vadd.f32 %v2372, %v2373
    %v2375 = vsel %vm430, %v2369, 0.0
    %v2376 = vadd.f32 %v2374, %v2375
    %v2377 = vrot.slane %v2376, 4
    %v2378 = vadd.f32 %v2376, %v2377
    %v2379 = vrot.slane %v2378, 2
    %v2380 = vadd.f32 %v2378, %v2379
    %v2381 = vrot.slane %v2380, 1
    %v2382 = vadd.f32 %v2380, %v2381
    %v2383 = vmul.f32 %v2365, 0.03125
    %v2384 = vmul.f32 %v2382, 0.03125
    %v2385 = vmul.f32 %v2383, %v2383
    %v2386 = vsub.f32 %v2384, %v2385
    %v2387 = vmax.f32 %v2386, 0.0
    %v2388 = vadd.f32 %v2387, 1e-05
    %v2389 = vrsqrt.pop %v2388
    %v2390 = vmul.f32 %v38, %v2389
    %v2391 = vmul.f32 %v2383, %v2390
    %v2393 = vrot.slane %v2391, 7
    %v2395 = vsub.f32 %v38, %v2393
    %v2396 = vlaneseq
    %v2397 = vshrl.u32 %v2396, 7
    %v2398 = vsub.s32 2, %v2397
    %v2399 = vrot.slane %v2390, %v2398
    %v2400 = vmul.f32 %v2339, %v2399
    %v2401 = vmul.f32 %v2342, %v2399
    %v2402 = vmul.f32 %v2347, %v2399
    %v2403 = vmul.f32 %v2350, %v2399
    %v2404 = vlaneseq
    %v2405 = vshrl.u32 %v2404, 7
    %v2406 = vsub.s32 3, %v2405
    %v2407 = vrot.slane %v2395, %v2406
    %v2408 = vadd.f32 %v2400, %v2407
    %v2409 = vadd.f32 %v2401, %v2407
    %v2410 = vadd.f32 %v2402, %v2407
    %v2411 = vadd.f32 %v2403, %v2407
    %v2412 = vmax.f32 %v2408, 0.0
    %v2413 = vmax.f32 %v2409, 0.0
    %v2414 = vmax.f32 %v2410, 0.0
    %v2415 = vmax.f32 %v2411, 0.0
    %s2416 = scalar_lea.vmem %s7, 16
    %v2417 = vld [vmem:[%s2416] sm:$0xf]
    %v2418 = vld [vmem:[%s2416 + $0x4] sm:$0xf]
    %v2419 = vld [vmem:[%s2416 + $0x8] sm:$0xf]
    %v2420 = vld [vmem:[%s2416 + $0xc] sm:$0xf]
    %v2421 = vpack.c.bf16 %v2413, %v2412
    %v2422 = vpack.c.bf16 %v2415, %v2414
    %v2427 = vunpack.c.l.b16 %v2417
    %v2428 = vunpack.c.l.b16 %v2418
    %v2429 = vunpack.c.l.b16 %v2419
    %v2430 = vunpack.c.l.b16 %v2420
    %v2431 = vpack.c.b16 %v2428, %v2427
    %v2432 = vpack.c.b16 %v2430, %v2429
    %v2436 = vsel %vm430, %v2421, 0
    %v2439 = vsel %vm430, %v2422, 0
    %2441 = vmatprep.subr.bf16.mxu0 0
    %2442 = vmatpush1.bf16.msra.mxu0 %v2431
    %2443 = vmatprep.subr.bf16.mxu0 0
    %2444 = vmatpush1.bf16.msra.mxu0 %v2432
    %2445 = vmatprep.subr.bf16.mxu0 0
    %2446 = vmatpush1.bf16.msra.mxu0 0
    %2447 = vmatprep.subr.bf16.mxu0 0
    %2448 = vmatpush1.bf16.msra.mxu0 0
    %2449 = vmatprep.subr.bf16.mxu0 0
    %2450 = vmatpush1.bf16.msra.mxu0 0
    %2451 = vmatprep.subr.bf16.mxu0 0
    %2452 = vmatpush1.bf16.msra.mxu0 0
    %2453 = vmatprep.subr.bf16.mxu0 0
    %2454 = vmatpush1.bf16.msra.mxu0 0
    %2455 = vmatprep.subr.bf16.mxu0 0
    %2456 = vmatpush1.bf16.msra.mxu0 0
    %2457 = vmatprep.subr.bf16.mxu0 0
    %2458 = vmatpush1.bf16.msra.mxu0 0
    %2459 = vmatprep.subr.bf16.mxu0 0
    %2460 = vmatpush1.bf16.msra.mxu0 0
    %2461 = vmatprep.subr.bf16.mxu0 0
    %2462 = vmatpush1.bf16.msra.mxu0 0
    %2463 = vmatprep.subr.bf16.mxu0 0
    %2464 = vmatpush1.bf16.msra.mxu0 0
    %2465 = vmatprep.subr.bf16.mxu0 0
    %2466 = vmatpush1.bf16.msra.mxu0 0
    %2467 = vmatprep.subr.bf16.mxu0 0
    %2468 = vmatpush1.bf16.msra.mxu0 0
    %2469 = vmatprep.subr.bf16.mxu0 0
    %2470 = vmatpush1.bf16.msra.mxu0 0
    %2471 = vmatprep.subr.bf16.mxu0 0
    %2472 = vmatpush1.bf16.msra.mxu0 0
    %2473 = vmatprep.mubr.bf16.mxu0 0
    %2474 = vmatmul.mubr.bf16.gmra.mrb[0].mxu0 %v2436
    %v2475 = vpop.f32.mrb[0].mxu0
    %v2476 = vadd.f32 0.0, %v2475
    %v2477 = vpop.f32.mrb[0].mxu0
    %v2478 = vpop.f32.mrb[0].mxu0
    %v2479 = vadd.f32 0.0, %v2478
    %v2480 = vpop.f32.mrb[0].mxu0
    %2481 = vmatprep.mubr.bf16.mxu0 0
    %2482 = vmatmul.mubr.bf16.gmra.mrb[0].mxu0 %v2439
    %v2483 = vpop.f32.mrb[0].mxu0
    %v2484 = vadd.f32 0.0, %v2483
    %v2485 = vpop.f32.mrb[0].mxu0
    %v2486 = vpop.f32.mrb[0].mxu0
    %v2487 = vadd.f32 0.0, %v2486
    %v2488 = vpop.f32.mrb[0].mxu0
    %2489 = vdwg.mxu0
    %v2490 = vadd.f32 %v2476, %v2479
    %v2491 = vadd.f32 %v2490, %v2484
    %v2492 = vadd.f32 %v2491, %v2487
    %v2493 = vrot.slane %v2492, 4
    %v2494 = vadd.f32 %v2492, %v2493
    %v2495 = vrot.slane %v2494, 2
    %v2496 = vadd.f32 %v2494, %v2495
    %v2497 = vrot.slane %v2496, 1
    %v2498 = vadd.f32 %v2496, %v2497
    %v2499 = vmul.f32 %v2476, %v2476
    %v2500 = vmul.f32 %v2479, %v2479
    %v2501 = vmul.f32 %v2484, %v2484
    %v2502 = vmul.f32 %v2487, %v2487
    %v2503 = vadd.f32 %v2499, %v2500
    %v2504 = vadd.f32 %v2503, %v2501
    %v2505 = vadd.f32 %v2504, %v2502
    %v2506 = vrot.slane %v2505, 4
    %v2507 = vadd.f32 %v2505, %v2506
    %v2508 = vrot.slane %v2507, 2
    %v2509 = vadd.f32 %v2507, %v2508
    %v2510 = vrot.slane %v2509, 1
    %v2511 = vadd.f32 %v2509, %v2510
    %v2512 = vmul.f32 %v2498, 0.03125
    %v2513 = vmul.f32 %v2511, 0.03125
    %v2514 = vmul.f32 %v2512, %v2512
    %v2515 = vsub.f32 %v2513, %v2514
    %v2516 = vmax.f32 %v2515, 0.0
    %v2517 = vadd.f32 %v2516, 1e-05
    %v2518 = vrsqrt.pop %v2517
    %v2519 = vmul.f32 %v38, %v2518
    %v2520 = vmul.f32 %v2512, %v2519
    %v2522 = vrot.slane %v2520, 7
    %v2524 = vsub.f32 %v38, %v2522
    %v2525 = vlaneseq
    %v2526 = vshrl.u32 %v2525, 7
    %v2527 = vsub.s32 4, %v2526
    %v2528 = vrot.slane %v2519, %v2527
    %v2529 = vmul.f32 %v2476, %v2528
    %v2530 = vmul.f32 %v2479, %v2528
    %v2531 = vmul.f32 %v2484, %v2528
    %v2532 = vmul.f32 %v2487, %v2528
    %v2533 = vlaneseq
    %v2534 = vshrl.u32 %v2533, 7
    %v2535 = vsub.s32 5, %v2534
    %v2536 = vrot.slane %v2524, %v2535
    %v2537 = vadd.f32 %v2529, %v2536
    %v2538 = vadd.f32 %v2530, %v2536
    %v2539 = vadd.f32 %v2531, %v2536
    %v2540 = vadd.f32 %v2532, %v2536
    %v2541 = vadd.f32 %v2537, %v1788
    %v2542 = vadd.f32 %v2538, %v1789
    %v2543 = vadd.f32 %v2539, %v1790
    %v2544 = vadd.f32 %v2540, %v1791
    %v2545 = vmax.f32 %v2541, 0.0
    %v2546 = vmax.f32 %v2542, 0.0
    %v2547 = vmax.f32 %v2543, 0.0
    %v2548 = vmax.f32 %v2544, 0.0
    %s2549 = scalar_lea.vmem %s5, 64
    %v2550 = vld [vmem:[%s2549] sm:$0xf]
    %v2551 = vld [vmem:[%s2549 + $0x4] sm:$0xf]
    %v2552 = vld [vmem:[%s2549 + $0x8] sm:$0xf]
    %v2553 = vld [vmem:[%s2549 + $0xc] sm:$0xf]
    %v2554 = vld [vmem:[%s2549 + $0x10] sm:$0xf]
    %v2555 = vld [vmem:[%s2549 + $0x14] sm:$0xf]
    %v2556 = vld [vmem:[%s2549 + $0x18] sm:$0xf]
    %v2557 = vld [vmem:[%s2549 + $0x1c] sm:$0xf]
    %v2558 = vld [vmem:[%s2549 + $0x20] sm:$0xf]
    %v2559 = vld [vmem:[%s2549 + $0x24] sm:$0xf]
    %v2560 = vld [vmem:[%s2549 + $0x28] sm:$0xf]
    %v2561 = vld [vmem:[%s2549 + $0x2c] sm:$0xf]
    %v2562 = vld [vmem:[%s2549 + $0x30] sm:$0xf]
    %v2563 = vld [vmem:[%s2549 + $0x34] sm:$0xf]
    %v2564 = vld [vmem:[%s2549 + $0x38] sm:$0xf]
    %v2565 = vld [vmem:[%s2549 + $0x3c] sm:$0xf]
    %v2566 = vpack.c.bf16 %v2546, %v2545
    %v2567 = vpack.c.bf16 %v2548, %v2547
    %v2584 = vunpack.c.l.b16 %v2550
    %v2585 = vunpack.c.l.b16 %v2551
    %v2586 = vunpack.c.l.b16 %v2552
    %v2587 = vunpack.c.l.b16 %v2553
    %v2588 = vunpack.c.l.b16 %v2554
    %v2589 = vunpack.c.l.b16 %v2555
    %v2590 = vunpack.c.l.b16 %v2556
    %v2591 = vunpack.c.l.b16 %v2557
    %v2592 = vunpack.c.l.b16 %v2558
    %v2593 = vunpack.c.l.b16 %v2559
    %v2594 = vunpack.c.l.b16 %v2560
    %v2595 = vunpack.c.l.b16 %v2561
    %v2596 = vunpack.c.l.b16 %v2562
    %v2597 = vunpack.c.l.b16 %v2563
    %v2598 = vunpack.c.l.b16 %v2564
    %v2599 = vunpack.c.l.b16 %v2565
    %v2600 = vpack.c.b16 %v2585, %v2584
    %v2601 = vpack.c.b16 %v2587, %v2586
    %v2602 = vpack.c.b16 %v2589, %v2588
    %v2603 = vpack.c.b16 %v2591, %v2590
    %v2604 = vpack.c.b16 %v2593, %v2592
    %v2605 = vpack.c.b16 %v2595, %v2594
    %v2606 = vpack.c.b16 %v2597, %v2596
    %v2607 = vpack.c.b16 %v2599, %v2598
    %2616 = vmatprep.subr.bf16.mxu0 0
    %2617 = vmatpush1.bf16.msra.mxu0 %v2600
    %2618 = vmatprep.subr.bf16.mxu0 0
    %2619 = vmatpush1.bf16.msra.mxu0 %v2601
    %2620 = vmatprep.subr.bf16.mxu0 0
    %2621 = vmatpush1.bf16.msra.mxu0 %v2602
    %2622 = vmatprep.subr.bf16.mxu0 0
    %2623 = vmatpush1.bf16.msra.mxu0 %v2603
    %2624 = vmatprep.subr.bf16.mxu0 0
    %2625 = vmatpush1.bf16.msra.mxu0 %v2604
    %2626 = vmatprep.subr.bf16.mxu0 0
    %2627 = vmatpush1.bf16.msra.mxu0 %v2605
    %2628 = vmatprep.subr.bf16.mxu0 0
    %2629 = vmatpush1.bf16.msra.mxu0 %v2606
    %2630 = vmatprep.subr.bf16.mxu0 0
    %2631 = vmatpush1.bf16.msra.mxu0 %v2607
    %2632 = vmatprep.subr.bf16.mxu0 0
    %2633 = vmatpush1.bf16.msra.mxu0 0
    %2634 = vmatprep.subr.bf16.mxu0 0
    %2635 = vmatpush1.bf16.msra.mxu0 0
    %2636 = vmatprep.subr.bf16.mxu0 0
    %2637 = vmatpush1.bf16.msra.mxu0 0
    %2638 = vmatprep.subr.bf16.mxu0 0
    %2639 = vmatpush1.bf16.msra.mxu0 0
    %2640 = vmatprep.subr.bf16.mxu0 0
    %2641 = vmatpush1.bf16.msra.mxu0 0
    %2642 = vmatprep.subr.bf16.mxu0 0
    %2643 = vmatpush1.bf16.msra.mxu0 0
    %2644 = vmatprep.subr.bf16.mxu0 0
    %2645 = vmatpush1.bf16.msra.mxu0 0
    %2646 = vmatprep.subr.bf16.mxu0 0
    %2647 = vmatpush1.bf16.msra.mxu0 0
    %2648 = vmatprep.mubr.bf16.mxu0 0
    %2649 = vmatmul.mubr.bf16.gmra.mrb[0].mxu0 %v2566
    %v2650 = vpop.f32.mrb[0].mxu0
    %v2651 = vadd.f32 0.0, %v2650
    %v2652 = vpop.f32.mrb[0].mxu0
    %v2653 = vpop.f32.mrb[0].mxu0
    %v2654 = vadd.f32 0.0, %v2653
    %v2655 = vpop.f32.mrb[0].mxu0
    %2656 = vmatprep.mubr.bf16.mxu0 0
    %2657 = vmatmul.mubr.bf16.gmra.mrb[0].mxu0 %v2567
    %v2658 = vpop.f32.mrb[0].mxu0
    %v2659 = vadd.f32 0.0, %v2658
    %v2660 = vpop.f32.mrb[0].mxu0
    %v2661 = vpop.f32.mrb[0].mxu0
    %v2662 = vadd.f32 0.0, %v2661
    %v2663 = vpop.f32.mrb[0].mxu0
    %2664 = vdwg.mxu0
    %v2665 = vsel %vm430, %v2651, 0.0
    %v2666 = vsel %vm430, %v2654, 0.0
    %v2667 = vadd.f32 %v2665, %v2666
    %v2668 = vsel %vm430, %v2659, 0.0
    %v2669 = vadd.f32 %v2667, %v2668
    %v2670 = vsel %vm430, %v2662, 0.0
    %v2671 = vadd.f32 %v2669, %v2670
    %v2672 = vrot.slane %v2671, 4
    %v2673 = vadd.f32 %v2671, %v2672
    %v2674 = vrot.slane %v2673, 2
    %v2675 = vadd.f32 %v2673, %v2674
    %v2676 = vrot.slane %v2675, 1
    %v2677 = vadd.f32 %v2675, %v2676
    %v2678 = vmul.f32 %v2651, %v2651
    %v2679 = vmul.f32 %v2654, %v2654
    %v2680 = vmul.f32 %v2659, %v2659
    %v2681 = vmul.f32 %v2662, %v2662
    %v2682 = vsel %vm430, %v2678, 0.0
    %v2683 = vsel %vm430, %v2679, 0.0
    %v2684 = vadd.f32 %v2682, %v2683
    %v2685 = vsel %vm430, %v2680, 0.0
    %v2686 = vadd.f32 %v2684, %v2685
    %v2687 = vsel %vm430, %v2681, 0.0
    %v2688 = vadd.f32 %v2686, %v2687
    %v2689 = vrot.slane %v2688, 4
    %v2690 = vadd.f32 %v2688, %v2689
    %v2691 = vrot.slane %v2690, 2
    %v2692 = vadd.f32 %v2690, %v2691
    %v2693 = vrot.slane %v2692, 1
    %v2694 = vadd.f32 %v2692, %v2693
    %v2695 = vmul.f32 %v2677, 0.03125
    %v2696 = vmul.f32 %v2694, 0.03125
    %v2697 = vmul.f32 %v2695, %v2695
    %v2698 = vsub.f32 %v2696, %v2697
    %v2699 = vmax.f32 %v2698, 0.0
    %v2700 = vadd.f32 %v2699, 1e-05
    %v2701 = vrsqrt.pop %v2700
    %v2702 = vmul.f32 %v38, %v2701
    %v2703 = vmul.f32 %v2695, %v2702
    %v2705 = vrot.slane %v2703, 7
    %v2707 = vsub.f32 %v38, %v2705
    %v2708 = vlaneseq
    %v2709 = vshrl.u32 %v2708, 7
    %v2710 = vsub.s32 6, %v2709
    %v2711 = vrot.slane %v2702, %v2710
    %v2712 = vmul.f32 %v2651, %v2711
    %v2713 = vmul.f32 %v2654, %v2711
    %v2714 = vmul.f32 %v2659, %v2711
    %v2715 = vmul.f32 %v2662, %v2711
    %v2716 = vlaneseq
    %v2717 = vshrl.u32 %v2716, 7
    %v2718 = vsub.s32 7, %v2717
    %v2719 = vrot.slane %v2707, %v2718
    %v2720 = vadd.f32 %v2712, %v2719
    %v2721 = vadd.f32 %v2713, %v2719
    %v2722 = vadd.f32 %v2714, %v2719
    %v2723 = vadd.f32 %v2715, %v2719
    %v2724 = vmax.f32 %v2720, 0.0
    %v2725 = vmax.f32 %v2721, 0.0
    %v2726 = vmax.f32 %v2722, 0.0
    %v2727 = vmax.f32 %v2723, 0.0
    %s2728 = scalar_lea.vmem %s6, 96
    %v2729 = vld [vmem:[%s2728] sm:$0xff]
    %v2730 = vld [vmem:[%s2728 + $0x8] sm:$0xf]
    %v2731 = vld [vmem:[%s2728 + $0xc] sm:$0xff]
    %v2732 = vld [vmem:[%s2728 + $0x14] sm:$0xf]
    %v2733 = vld [vmem:[%s2728 + $0x18] sm:$0xff]
    %v2734 = vld [vmem:[%s2728 + $0x20] sm:$0xf]
    %v2735 = vld [vmem:[%s2728 + $0x24] sm:$0xff]
    %v2736 = vld [vmem:[%s2728 + $0x2c] sm:$0xf]
    %v2737 = vpack.c.bf16 %v2725, %v2724
    %v2738 = vpack.c.bf16 %v2727, %v2726
    %v2747 = vunpack.c.l.b16 %v2729
    %v2748 = vunpack.c.h.b16 %v2729
    %v2749 = vunpack.c.l.b16 %v2730
    %v2750 = vunpack.c.l.b16 %v2731
    %v2751 = vunpack.c.h.b16 %v2731
    %v2752 = vunpack.c.l.b16 %v2732
    %v2753 = vunpack.c.l.b16 %v2733
    %v2754 = vunpack.c.h.b16 %v2733
    %v2755 = vunpack.c.l.b16 %v2734
    %v2756 = vunpack.c.l.b16 %v2735
    %v2757 = vunpack.c.h.b16 %v2735
    %v2758 = vunpack.c.l.b16 %v2736
    %v2759 = vpack.c.b16 %v2750, %v2747
    %v2760 = vpack.c.b16 %v2751, %v2748
    %v2761 = vpack.c.b16 %v2752, %v2749
    %v2762 = vpack.c.b16 %v2756, %v2753
    %v2763 = vpack.c.b16 %v2757, %v2754
    %v2764 = vpack.c.b16 %v2758, %v2755
    %v2772 = vsel %vm430, %v2737, 0
    %v2775 = vsel %vm430, %v2738, 0
    %2777 = vmatprep.subr.bf16.mxu0 %v2760
    %2778 = vmatpush1.bf16.msra.mxu0 %v2759
    %2779 = vmatprep.subr.bf16.mxu0 %v2763
    %2780 = vmatpush1.bf16.msra.mxu0 %v2762
    %2781 = vmatprep.subr.bf16.mxu0 0
    %2782 = vmatpush1.bf16.msra.mxu0 0
    %2783 = vmatprep.subr.bf16.mxu0 0
    %2784 = vmatpush1.bf16.msra.mxu0 0
    %2785 = vmatprep.subr.bf16.mxu0 0
    %2786 = vmatpush1.bf16.msra.mxu0 0
    %2787 = vmatprep.subr.bf16.mxu0 0
    %2788 = vmatpush1.bf16.msra.mxu0 0
    %2789 = vmatprep.subr.bf16.mxu0 0
    %2790 = vmatpush1.bf16.msra.mxu0 0
    %2791 = vmatprep.subr.bf16.mxu0 0
    %2792 = vmatpush1.bf16.msra.mxu0 0
    %2793 = vmatprep.subr.bf16.mxu0 0
    %2794 = vmatpush1.bf16.msra.mxu0 0
    %2795 = vmatprep.subr.bf16.mxu0 0
    %2796 = vmatpush1.bf16.msra.mxu0 0
    %2797 = vmatprep.subr.bf16.mxu0 0
    %2798 = vmatpush1.bf16.msra.mxu0 0
    %2799 = vmatprep.subr.bf16.mxu0 0
    %2800 = vmatpush1.bf16.msra.mxu0 0
    %2801 = vmatprep.subr.bf16.mxu0 0
    %2802 = vmatpush1.bf16.msra.mxu0 0
    %2803 = vmatprep.subr.bf16.mxu0 0
    %2804 = vmatpush1.bf16.msra.mxu0 0
    %2805 = vmatprep.subr.bf16.mxu0 0
    %2806 = vmatpush1.bf16.msra.mxu0 0
    %2807 = vmatprep.subr.bf16.mxu0 0
    %2808 = vmatpush1.bf16.msra.mxu0 0
    %2809 = vmatprep.mubr.bf16.mxu0 0
    %2810 = vmatmul.mubr.bf16.gmra.mrb[0].mxu0 %v2772
    %v2811 = vpop.f32.mrb[0].mxu0
    %v2812 = vadd.f32 0.0, %v2811
    %v2813 = vpop.f32.mrb[0].mxu0
    %v2814 = vadd.f32 0.0, %v2813
    %v2815 = vpop.f32.mrb[0].mxu0
    %v2816 = vadd.f32 0.0, %v2815
    %v2817 = vpop.f32.mrb[0].mxu0
    %v2818 = vadd.f32 0.0, %v2817
    %2819 = vmatprep.mubr.bf16.mxu0 0
    %2820 = vmatmul.mubr.bf16.gmra.mrb[0].mxu0 %v2775
    %v2821 = vpop.f32.mrb[0].mxu0
    %v2822 = vadd.f32 0.0, %v2821
    %v2823 = vpop.f32.mrb[0].mxu0
    %v2824 = vadd.f32 0.0, %v2823
    %v2825 = vpop.f32.mrb[0].mxu0
    %v2826 = vadd.f32 0.0, %v2825
    %v2827 = vpop.f32.mrb[0].mxu0
    %v2828 = vadd.f32 0.0, %v2827
    %2829 = vdwg.mxu0
    %2830 = vmatprep.subr.bf16.mxu0 0
    %2831 = vmatpush1.bf16.msra.mxu0 %v2761
    %2832 = vmatprep.subr.bf16.mxu0 0
    %2833 = vmatpush1.bf16.msra.mxu0 %v2764
    %2834 = vmatprep.subr.bf16.mxu0 0
    %2835 = vmatpush1.bf16.msra.mxu0 0
    %2836 = vmatprep.subr.bf16.mxu0 0
    %2837 = vmatpush1.bf16.msra.mxu0 0
    %2838 = vmatprep.subr.bf16.mxu0 0
    %2839 = vmatpush1.bf16.msra.mxu0 0
    %2840 = vmatprep.subr.bf16.mxu0 0
    %2841 = vmatpush1.bf16.msra.mxu0 0
    %2842 = vmatprep.subr.bf16.mxu0 0
    %2843 = vmatpush1.bf16.msra.mxu0 0
    %2844 = vmatprep.subr.bf16.mxu0 0
    %2845 = vmatpush1.bf16.msra.mxu0 0
    %2846 = vmatprep.subr.bf16.mxu0 0
    %2847 = vmatpush1.bf16.msra.mxu0 0
    %2848 = vmatprep.subr.bf16.mxu0 0
    %2849 = vmatpush1.bf16.msra.mxu0 0
    %2850 = vmatprep.subr.bf16.mxu0 0
    %2851 = vmatpush1.bf16.msra.mxu0 0
    %2852 = vmatprep.subr.bf16.mxu0 0
    %2853 = vmatpush1.bf16.msra.mxu0 0
    %2854 = vmatprep.subr.bf16.mxu0 0
    %2855 = vmatpush1.bf16.msra.mxu0 0
    %2856 = vmatprep.subr.bf16.mxu0 0
    %2857 = vmatpush1.bf16.msra.mxu0 0
    %2858 = vmatprep.subr.bf16.mxu0 0
    %2859 = vmatpush1.bf16.msra.mxu0 0
    %2860 = vmatprep.subr.bf16.mxu0 0
    %2861 = vmatpush1.bf16.msra.mxu0 0
    %2862 = vmatprep.mubr.bf16.mxu0 0
    %2863 = vmatmul.mubr.bf16.gmra.mrb[0].mxu0 %v2772
    %v2864 = vpop.f32.mrb[0].mxu0
    %v2865 = vadd.f32 0.0, %v2864
    %v2866 = vpop.f32.mrb[0].mxu0
    %v2867 = vpop.f32.mrb[0].mxu0
    %v2868 = vadd.f32 0.0, %v2867
    %v2869 = vpop.f32.mrb[0].mxu0
    %2870 = vmatprep.mubr.bf16.mxu0 0
    %2871 = vmatmul.mubr.bf16.gmra.mrb[0].mxu0 %v2775
    %v2872 = vpop.f32.mrb[0].mxu0
    %v2873 = vadd.f32 0.0, %v2872
    %v2874 = vpop.f32.mrb[0].mxu0
    %v2875 = vpop.f32.mrb[0].mxu0
    %v2876 = vadd.f32 0.0, %v2875
    %v2877 = vpop.f32.mrb[0].mxu0
    %2878 = vdwg.mxu0
    %2883 = vrot.lane.b32.xlu0 %v2812, 96
    %v2884 = vpop.permute.xlu0 %2883
    %2885 = vrot.lane.b32.xlu0 %v2816, 96
    %v2886 = vpop.permute.xlu0 %2885
    %2887 = vrot.lane.b32.xlu0 %v2822, 96
    %v2888 = vpop.permute.xlu0 %2887
    %2889 = vrot.lane.b32.xlu0 %v2826, 96
    %v2890 = vpop.permute.xlu0 %2889
    %2895 = vrot.lane.b32.xlu0 %v2812, 64
    %v2896 = vpop.permute.xlu0 %2895
    %2897 = vrot.lane.b32.xlu0 %v2816, 64
    %v2898 = vpop.permute.xlu0 %2897
    %2899 = vrot.lane.b32.xlu0 %v2822, 64
    %v2900 = vpop.permute.xlu0 %2899
    %2901 = vrot.lane.b32.xlu0 %v2826, 64
    %v2902 = vpop.permute.xlu0 %2901
    %2907 = vrot.lane.b32.xlu0 %v2812, 32
    %v2908 = vpop.permute.xlu0 %2907
    %2909 = vrot.lane.b32.xlu0 %v2816, 32
    %v2910 = vpop.permute.xlu0 %2909
    %2911 = vrot.lane.b32.xlu0 %v2822, 32
    %v2912 = vpop.permute.xlu0 %2911
    %2913 = vrot.lane.b32.xlu0 %v2826, 32
    %v2914 = vpop.permute.xlu0 %2913
    %2923 = vrot.lane.b32.xlu0 %v2814, 96
    %v2924 = vpop.permute.xlu0 %2923
    %2925 = vrot.lane.b32.xlu0 %v2818, 96
    %v2926 = vpop.permute.xlu0 %2925
    %2927 = vrot.lane.b32.xlu0 %v2824, 96
    %v2928 = vpop.permute.xlu0 %2927
    %2929 = vrot.lane.b32.xlu0 %v2828, 96
    %v2930 = vpop.permute.xlu0 %2929
    %2935 = vrot.lane.b32.xlu0 %v2814, 64
    %v2936 = vpop.permute.xlu0 %2935
    %2937 = vrot.lane.b32.xlu0 %v2818, 64
    %v2938 = vpop.permute.xlu0 %2937
    %2939 = vrot.lane.b32.xlu0 %v2824, 64
    %v2940 = vpop.permute.xlu0 %2939
    %2941 = vrot.lane.b32.xlu0 %v2828, 64
    %v2942 = vpop.permute.xlu0 %2941
    %2947 = vrot.lane.b32.xlu0 %v2814, 32
    %v2948 = vpop.permute.xlu0 %2947
    %2949 = vrot.lane.b32.xlu0 %v2818, 32
    %v2950 = vpop.permute.xlu0 %2949
    %2951 = vrot.lane.b32.xlu0 %v2824, 32
    %v2952 = vpop.permute.xlu0 %2951
    %2953 = vrot.lane.b32.xlu0 %v2828, 32
    %v2954 = vpop.permute.xlu0 %2953
    %v2959 = vpack.c.bf16 %v2816, %v2812
    %v2960 = vpack.c.bf16 %v2826, %v2822
    %v2961 = vpack.c.bf16 %v2886, %v2884
    %v2962 = vpack.c.bf16 %v2890, %v2888
    %v2963 = vpack.c.bf16 %v2898, %v2896
    %v2964 = vpack.c.bf16 %v2902, %v2900
    %v2965 = vpack.c.bf16 %v2910, %v2908
    %v2966 = vpack.c.bf16 %v2914, %v2912
    %v2967 = vpack.c.bf16 %v2818, %v2814
    %v2968 = vpack.c.bf16 %v2828, %v2824
    %v2969 = vpack.c.bf16 %v2926, %v2924
    %v2970 = vpack.c.bf16 %v2930, %v2928
    %v2971 = vpack.c.bf16 %v2938, %v2936
    %v2972 = vpack.c.bf16 %v2942, %v2940
    %v2973 = vpack.c.bf16 %v2950, %v2948
    %v2974 = vpack.c.bf16 %v2954, %v2952
    %v2975 = vpack.c.bf16 %v2868, %v2865
    %v2976 = vpack.c.bf16 %v2876, %v2873
    %2977 = vmatprep.subr.bf16.mxu0 0
    %2978 = vmatpush1.bf16.msra.mxu0 %v2959
    %2979 = vmatprep.subr.bf16.mxu0 0
    %2980 = vmatpush1.bf16.msra.mxu0 %v2960
    %2981 = vmatprep.subr.bf16.mxu0 0
    %2982 = vmatpush1.bf16.msra.mxu0 %v2961
    %2983 = vmatprep.subr.bf16.mxu0 0
    %2984 = vmatpush1.bf16.msra.mxu0 %v2962
    %2985 = vmatprep.subr.bf16.mxu0 0
    %2986 = vmatpush1.bf16.msra.mxu0 %v2963
    %2987 = vmatprep.subr.bf16.mxu0 0
    %2988 = vmatpush1.bf16.msra.mxu0 %v2964
    %2989 = vmatprep.subr.bf16.mxu0 0
    %2990 = vmatpush1.bf16.msra.mxu0 %v2965
    %2991 = vmatprep.subr.bf16.mxu0 0
    %2992 = vmatpush1.bf16.msra.mxu0 %v2966
    %2993 = vmatprep.subr.bf16.mxu0 0
    %2994 = vmatpush1.bf16.msra.mxu0 %v2967
    %2995 = vmatprep.subr.bf16.mxu0 0
    %2996 = vmatpush1.bf16.msra.mxu0 %v2968
    %2997 = vmatprep.subr.bf16.mxu0 0
    %2998 = vmatpush1.bf16.msra.mxu0 %v2969
    %2999 = vmatprep.subr.bf16.mxu0 0
    %3000 = vmatpush1.bf16.msra.mxu0 %v2970
    %3001 = vmatprep.subr.bf16.mxu0 0
    %3002 = vmatpush1.bf16.msra.mxu0 %v2971
    %3003 = vmatprep.subr.bf16.mxu0 0
    %3004 = vmatpush1.bf16.msra.mxu0 %v2972
    %3005 = vmatprep.subr.bf16.mxu0 0
    %3006 = vmatpush1.bf16.msra.mxu0 %v2973
    %3007 = vmatprep.subr.bf16.mxu0 0
    %3008 = vmatpush1.bf16.msra.mxu0 %v2974
    %3009 = vmatprep.mubr.bf16.mxu0 %v2240
    %3010 = vmatmul.mubr.bf16.gmra.mrb[0].mxu0 %v2239
    %v3011 = vpop.f32.mrb[0].mxu0
    %v3012 = vadd.f32 0.0, %v3011
    %v3013 = vpop.f32.mrb[0].mxu0
    %v3014 = vpop.f32.mrb[0].mxu0
    %v3015 = vadd.f32 0.0, %v3014
    %v3016 = vpop.f32.mrb[0].mxu0
    %3017 = vmatprep.mubr.bf16.mxu0 %v2243
    %3018 = vmatmul.mubr.bf16.gmra.mrb[0].mxu0 %v2242
    %v3019 = vpop.f32.mrb[0].mxu0
    %v3020 = vadd.f32 0.0, %v3019
    %v3021 = vpop.f32.mrb[0].mxu0
    %v3022 = vpop.f32.mrb[0].mxu0
    %v3023 = vadd.f32 0.0, %v3022
    %v3024 = vpop.f32.mrb[0].mxu0
    %3025 = vdwg.mxu0
    %3026 = vmatprep.subr.bf16.mxu0 0
    %3027 = vmatpush1.bf16.msra.mxu0 %v2975
    %3028 = vmatprep.subr.bf16.mxu0 0
    %3029 = vmatpush1.bf16.msra.mxu0 %v2976
    %3030 = vmatprep.subr.bf16.mxu0 0
    %3031 = vmatpush1.bf16.msra.mxu0 0
    %3032 = vmatprep.subr.bf16.mxu0 0
    %3033 = vmatpush1.bf16.msra.mxu0 0
    %3034 = vmatprep.subr.bf16.mxu0 0
    %3035 = vmatpush1.bf16.msra.mxu0 0
    %3036 = vmatprep.subr.bf16.mxu0 0
    %3037 = vmatpush1.bf16.msra.mxu0 0
    %3038 = vmatprep.subr.bf16.mxu0 0
    %3039 = vmatpush1.bf16.msra.mxu0 0
    %3040 = vmatprep.subr.bf16.mxu0 0
    %3041 = vmatpush1.bf16.msra.mxu0 0
    %3042 = vmatprep.subr.bf16.mxu0 0
    %3043 = vmatpush1.bf16.msra.mxu0 0
    %3044 = vmatprep.subr.bf16.mxu0 0
    %3045 = vmatpush1.bf16.msra.mxu0 0
    %3046 = vmatprep.subr.bf16.mxu0 0
    %3047 = vmatpush1.bf16.msra.mxu0 0
    %3048 = vmatprep.subr.bf16.mxu0 0
    %3049 = vmatpush1.bf16.msra.mxu0 0
    %3050 = vmatprep.subr.bf16.mxu0 0
    %3051 = vmatpush1.bf16.msra.mxu0 0
    %3052 = vmatprep.subr.bf16.mxu0 0
    %3053 = vmatpush1.bf16.msra.mxu0 0
    %3054 = vmatprep.subr.bf16.mxu0 0
    %3055 = vmatpush1.bf16.msra.mxu0 0
    %3056 = vmatprep.subr.bf16.mxu0 0
    %3057 = vmatpush1.bf16.msra.mxu0 0
    %3058 = vmatprep.mubr.bf16.mxu0 0
    %3059 = vmatmul.mubr.bf16.gmra.mrb[0].mxu0 %v2250
    %v3060 = vpop.f32.mrb[0].mxu0
    %v3061 = vadd.f32 %v3012, %v3060
    %v3062 = vpop.f32.mrb[0].mxu0
    %v3063 = vpop.f32.mrb[0].mxu0
    %v3064 = vadd.f32 %v3015, %v3063
    %v3065 = vpop.f32.mrb[0].mxu0
    %3066 = vmatprep.mubr.bf16.mxu0 0
    %3067 = vmatmul.mubr.bf16.gmra.mrb[0].mxu0 %v2253
    %v3068 = vpop.f32.mrb[0].mxu0
    %v3069 = vadd.f32 %v3020, %v3068
    %v3070 = vpop.f32.mrb[0].mxu0
    %v3071 = vpop.f32.mrb[0].mxu0
    %v3072 = vadd.f32 %v3023, %v3071
    %v3073 = vpop.f32.mrb[0].mxu0
    %3074 = vdwg.mxu0
    %v3075 = vsel %vm430, %v3061, 0.0
    %v3076 = vsel %vm430, %v3064, 0.0
    %v3077 = vadd.f32 %v3075, %v3076
    %v3078 = vsel %vm430, %v3069, 0.0
    %v3079 = vadd.f32 %v3077, %v3078
    %v3080 = vsel %vm430, %v3072, 0.0
    %v3081 = vadd.f32 %v3079, %v3080
    %v3082 = vrot.slane %v3081, 4
    %v3083 = vadd.f32 %v3081, %v3082
    %v3084 = vrot.slane %v3083, 2
    %v3085 = vadd.f32 %v3083, %v3084
    %v3086 = vrot.slane %v3085, 1
    %v3087 = vadd.f32 %v3085, %v3086
    %v3088 = vmul.f32 %v3061, %v3061
    %v3089 = vmul.f32 %v3064, %v3064
    %v3090 = vmul.f32 %v3069, %v3069
    %v3091 = vmul.f32 %v3072, %v3072
    %v3092 = vsel %vm430, %v3088, 0.0
    %v3093 = vsel %vm430, %v3089, 0.0
    %v3094 = vadd.f32 %v3092, %v3093
    %v3095 = vsel %vm430, %v3090, 0.0
    %v3096 = vadd.f32 %v3094, %v3095
    %v3097 = vsel %vm430, %v3091, 0.0
    %v3098 = vadd.f32 %v3096, %v3097
    %v3099 = vrot.slane %v3098, 4
    %v3100 = vadd.f32 %v3098, %v3099
    %v3101 = vrot.slane %v3100, 2
    %v3102 = vadd.f32 %v3100, %v3101
    %v3103 = vrot.slane %v3102, 1
    %v3104 = vadd.f32 %v3102, %v3103
    %v3105 = vmul.f32 %v3087, 0.03125
    %v3106 = vmul.f32 %v3104, 0.03125
    %v3107 = vmul.f32 %v3105, %v3105
    %v3108 = vsub.f32 %v3106, %v3107
    %v3109 = vmax.f32 %v3108, 0.0
    %v3110 = vadd.f32 %v3109, 1e-05
    %v3111 = vrsqrt.pop %v3110
    %v3112 = vmul.f32 %v39, %v3111
    %v3113 = vmul.f32 %v3105, %v3112
    %v3115 = vrot.slane %v3113, 7
    %v3117 = vsub.f32 %v39, %v3115
    %v3118 = vlaneseq
    %v3119 = vshrl.u32 %v3118, 7
    %v3120 = vsub.s32 0, %v3119
    %v3121 = vrot.slane %v3112, %v3120
    %v3122 = vmul.f32 %v3061, %v3121
    %v3123 = vmul.f32 %v3064, %v3121
    %v3124 = vmul.f32 %v3069, %v3121
    %v3125 = vmul.f32 %v3072, %v3121
    %v3126 = vlaneseq
    %v3127 = vshrl.u32 %v3126, 7
    %v3128 = vsub.s32 1, %v3127
    %v3129 = vrot.slane %v3117, %v3128
    %v3130 = vadd.f32 %v3122, %v3129
    %v3131 = vadd.f32 %v3123, %v3129
    %v3132 = vadd.f32 %v3124, %v3129
    %v3133 = vadd.f32 %v3125, %v3129
    %v3134 = vmax.f32 %v3130, 0.0
    %v3135 = vmax.f32 %v3131, 0.0
    %v3136 = vmax.f32 %v3132, 0.0
    %v3137 = vmax.f32 %v3133, 0.0
    %s3138 = scalar_lea.vmem %s7, 32
    %v3139 = vld [vmem:[%s3138] sm:$0xf]
    %v3140 = vld [vmem:[%s3138 + $0x4] sm:$0xf]
    %v3141 = vld [vmem:[%s3138 + $0x8] sm:$0xf]
    %v3142 = vld [vmem:[%s3138 + $0xc] sm:$0xf]
    %v3143 = vpack.c.bf16 %v3135, %v3134
    %v3144 = vpack.c.bf16 %v3137, %v3136
    %v3149 = vunpack.c.l.b16 %v3139
    %v3150 = vunpack.c.l.b16 %v3140
    %v3151 = vunpack.c.l.b16 %v3141
    %v3152 = vunpack.c.l.b16 %v3142
    %v3153 = vpack.c.b16 %v3150, %v3149
    %v3154 = vpack.c.b16 %v3152, %v3151
    %v3158 = vsel %vm430, %v3143, 0
    %v3161 = vsel %vm430, %v3144, 0
    %3163 = vmatprep.subr.bf16.mxu0 0
    %3164 = vmatpush1.bf16.msra.mxu0 %v3153
    %3165 = vmatprep.subr.bf16.mxu0 0
    %3166 = vmatpush1.bf16.msra.mxu0 %v3154
    %3167 = vmatprep.subr.bf16.mxu0 0
    %3168 = vmatpush1.bf16.msra.mxu0 0
    %3169 = vmatprep.subr.bf16.mxu0 0
    %3170 = vmatpush1.bf16.msra.mxu0 0
    %3171 = vmatprep.subr.bf16.mxu0 0
    %3172 = vmatpush1.bf16.msra.mxu0 0
    %3173 = vmatprep.subr.bf16.mxu0 0
    %3174 = vmatpush1.bf16.msra.mxu0 0
    %3175 = vmatprep.subr.bf16.mxu0 0
    %3176 = vmatpush1.bf16.msra.mxu0 0
    %3177 = vmatprep.subr.bf16.mxu0 0
    %3178 = vmatpush1.bf16.msra.mxu0 0
    %3179 = vmatprep.subr.bf16.mxu0 0
    %3180 = vmatpush1.bf16.msra.mxu0 0
    %3181 = vmatprep.subr.bf16.mxu0 0
    %3182 = vmatpush1.bf16.msra.mxu0 0
    %3183 = vmatprep.subr.bf16.mxu0 0
    %3184 = vmatpush1.bf16.msra.mxu0 0
    %3185 = vmatprep.subr.bf16.mxu0 0
    %3186 = vmatpush1.bf16.msra.mxu0 0
    %3187 = vmatprep.subr.bf16.mxu0 0
    %3188 = vmatpush1.bf16.msra.mxu0 0
    %3189 = vmatprep.subr.bf16.mxu0 0
    %3190 = vmatpush1.bf16.msra.mxu0 0
    %3191 = vmatprep.subr.bf16.mxu0 0
    %3192 = vmatpush1.bf16.msra.mxu0 0
    %3193 = vmatprep.subr.bf16.mxu0 0
    %3194 = vmatpush1.bf16.msra.mxu0 0
    %3195 = vmatprep.mubr.bf16.mxu0 0
    %3196 = vmatmul.mubr.bf16.gmra.mrb[0].mxu0 %v3158
    %v3197 = vpop.f32.mrb[0].mxu0
    %v3198 = vadd.f32 0.0, %v3197
    %v3199 = vpop.f32.mrb[0].mxu0
    %v3200 = vpop.f32.mrb[0].mxu0
    %v3201 = vadd.f32 0.0, %v3200
    %v3202 = vpop.f32.mrb[0].mxu0
    %3203 = vmatprep.mubr.bf16.mxu0 0
    %3204 = vmatmul.mubr.bf16.gmra.mrb[0].mxu0 %v3161
    %v3205 = vpop.f32.mrb[0].mxu0
    %v3206 = vadd.f32 0.0, %v3205
    %v3207 = vpop.f32.mrb[0].mxu0
    %v3208 = vpop.f32.mrb[0].mxu0
    %v3209 = vadd.f32 0.0, %v3208
    %v3210 = vpop.f32.mrb[0].mxu0
    %3211 = vdwg.mxu0
    %v3212 = vadd.f32 %v3198, %v3201
    %v3213 = vadd.f32 %v3212, %v3206
    %v3214 = vadd.f32 %v3213, %v3209
    %v3215 = vrot.slane %v3214, 4
    %v3216 = vadd.f32 %v3214, %v3215
    %v3217 = vrot.slane %v3216, 2
    %v3218 = vadd.f32 %v3216, %v3217
    %v3219 = vrot.slane %v3218, 1
    %v3220 = vadd.f32 %v3218, %v3219
    %v3221 = vmul.f32 %v3198, %v3198
    %v3222 = vmul.f32 %v3201, %v3201
    %v3223 = vmul.f32 %v3206, %v3206
    %v3224 = vmul.f32 %v3209, %v3209
    %v3225 = vadd.f32 %v3221, %v3222
    %v3226 = vadd.f32 %v3225, %v3223
    %v3227 = vadd.f32 %v3226, %v3224
    %v3228 = vrot.slane %v3227, 4
    %v3229 = vadd.f32 %v3227, %v3228
    %v3230 = vrot.slane %v3229, 2
    %v3231 = vadd.f32 %v3229, %v3230
    %v3232 = vrot.slane %v3231, 1
    %v3233 = vadd.f32 %v3231, %v3232
    %v3234 = vmul.f32 %v3220, 0.03125
    %v3235 = vmul.f32 %v3233, 0.03125
    %v3236 = vmul.f32 %v3234, %v3234
    %v3237 = vsub.f32 %v3235, %v3236
    %v3238 = vmax.f32 %v3237, 0.0
    %v3239 = vadd.f32 %v3238, 1e-05
    %v3240 = vrsqrt.pop %v3239
    %v3241 = vmul.f32 %v39, %v3240
    %v3242 = vmul.f32 %v3234, %v3241
    %v3244 = vrot.slane %v3242, 7
    %v3246 = vsub.f32 %v39, %v3244
    %v3247 = vlaneseq
    %v3248 = vshrl.u32 %v3247, 7
    %v3249 = vsub.s32 2, %v3248
    %v3250 = vrot.slane %v3241, %v3249
    %v3251 = vmul.f32 %v3198, %v3250
    %v3252 = vmul.f32 %v3201, %v3250
    %v3253 = vmul.f32 %v3206, %v3250
    %v3254 = vmul.f32 %v3209, %v3250
    %v3255 = vlaneseq
    %v3256 = vshrl.u32 %v3255, 7
    %v3257 = vsub.s32 3, %v3256
    %v3258 = vrot.slane %v3246, %v3257
    %v3259 = vadd.f32 %v3251, %v3258
    %v3260 = vadd.f32 %v3252, %v3258
    %v3261 = vadd.f32 %v3253, %v3258
    %v3262 = vadd.f32 %v3254, %v3258
    %v3263 = vadd.f32 %v3259, %v2545
    %v3264 = vadd.f32 %v3260, %v2546
    %v3265 = vadd.f32 %v3261, %v2547
    %v3266 = vadd.f32 %v3262, %v2548
    %v3267 = vmax.f32 %v3263, 0.0
    %v3268 = vmax.f32 %v3264, 0.0
    %v3269 = vmax.f32 %v3265, 0.0
    %v3270 = vmax.f32 %v3266, 0.0
    %v3271 = vld [vmem:[%s3] sm:$0x1]
    %v3272 = vpack.c.bf16 %v3268, %v3267
    %v3273 = vpack.c.bf16 %v3270, %v3269
    %v3275 = vsel %vm430, %v3271, 0
    %3277 = vmatprep.subr.bf16.mxu0 0
    %3278 = vmatpush1.bf16.msra.mxu0 %v3272
    %3279 = vmatprep.subr.bf16.mxu0 0
    %3280 = vmatpush1.bf16.msra.mxu0 %v3273
    %3281 = vmatprep.subr.bf16.mxu0 0
    %3282 = vmatpush1.bf16.msra.mxu0 0
    %3283 = vmatprep.subr.bf16.mxu0 0
    %3284 = vmatpush1.bf16.msra.mxu0 0
    %3285 = vmatprep.subr.bf16.mxu0 0
    %3286 = vmatpush1.bf16.msra.mxu0 0
    %3287 = vmatprep.subr.bf16.mxu0 0
    %3288 = vmatpush1.bf16.msra.mxu0 0
    %3289 = vmatprep.subr.bf16.mxu0 0
    %3290 = vmatpush1.bf16.msra.mxu0 0
    %3291 = vmatprep.subr.bf16.mxu0 0
    %3292 = vmatpush1.bf16.msra.mxu0 0
    %3293 = vmatprep.subr.bf16.mxu0 0
    %3294 = vmatpush1.bf16.msra.mxu0 0
    %3295 = vmatprep.subr.bf16.mxu0 0
    %3296 = vmatpush1.bf16.msra.mxu0 0
    %3297 = vmatprep.subr.bf16.mxu0 0
    %3298 = vmatpush1.bf16.msra.mxu0 0
    %3299 = vmatprep.subr.bf16.mxu0 0
    %3300 = vmatpush1.bf16.msra.mxu0 0
    %3301 = vmatprep.subr.bf16.mxu0 0
    %3302 = vmatpush1.bf16.msra.mxu0 0
    %3303 = vmatprep.subr.bf16.mxu0 0
    %3304 = vmatpush1.bf16.msra.mxu0 0
    %3305 = vmatprep.subr.bf16.mxu0 0
    %3306 = vmatpush1.bf16.msra.mxu0 0
    %3307 = vmatprep.subr.bf16.mxu0 0
    %3308 = vmatpush1.bf16.msra.mxu0 0
    %3309 = vmatprep.mubr.bf16.mxu0 0
    %3310 = vmatmul.mubr.bf16.gmra.mrb[0].mxu0 %v3275
    %v3311 = vpop.f32.mrb[0].mxu0
    %v3312 = vadd.f32 0.0, %v3311
    %v3313 = vpop.f32.mrb[0].mxu0
    %v3314 = vpop.f32.mrb[0].mxu0
    %v3315 = vpop.f32.mrb[0].mxu0
    %3316 = vdwg.mxu0
    %v3317 = vld [vmem:[%s8] sm:$0xf]
    %v3318 = vld [vmem:[%s8 + $0x4] sm:$0xf]
    %v3319 = vld [vmem:[%s8 + $0x8] sm:$0xf]
    %v3320 = vld [vmem:[%s8 + $0xc] sm:$0xf]
    %v3321 = vld [vmem:[%s8 + $0x10] sm:$0xf]
    %v3322 = vld [vmem:[%s8 + $0x14] sm:$0xf]
    %v3323 = vld [vmem:[%s8 + $0x18] sm:$0xf]
    %v3324 = vld [vmem:[%s8 + $0x1c] sm:$0xf]
    %v3325 = vld [vmem:[%s8 + $0x20] sm:$0xf]
    %v3326 = vld [vmem:[%s8 + $0x24] sm:$0xf]
    %v3327 = vld [vmem:[%s8 + $0x28] sm:$0xf]
    %v3328 = vld [vmem:[%s8 + $0x2c] sm:$0xf]
    %v3329 = vld [vmem:[%s8 + $0x30] sm:$0xf]
    %v3330 = vld [vmem:[%s8 + $0x34] sm:$0xf]
    %v3331 = vld [vmem:[%s8 + $0x38] sm:$0xf]
    %v3332 = vld [vmem:[%s8 + $0x3c] sm:$0xf]
    %v3333 = vpack.c.bf16 %v3312, %v3312
    %v3334 = vlaneseq
    %v3335 = vshrl.u32 %v3334, 7
    %v3336 = vsub.s32 4, %v3335
    %v3337 = vrot.slane %v39, %v3336
    %v3354 = vunpack.c.l.b16 %v3317
    %v3355 = vunpack.c.l.b16 %v3318
    %v3356 = vunpack.c.l.b16 %v3319
    %v3357 = vunpack.c.l.b16 %v3320
    %v3358 = vunpack.c.l.b16 %v3321
    %v3359 = vunpack.c.l.b16 %v3322
    %v3360 = vunpack.c.l.b16 %v3323
    %v3361 = vunpack.c.l.b16 %v3324
    %v3362 = vunpack.c.l.b16 %v3325
    %v3363 = vunpack.c.l.b16 %v3326
    %v3364 = vunpack.c.l.b16 %v3327
    %v3365 = vunpack.c.l.b16 %v3328
    %v3366 = vunpack.c.l.b16 %v3329
    %v3367 = vunpack.c.l.b16 %v3330
    %v3368 = vunpack.c.l.b16 %v3331
    %v3369 = vunpack.c.l.b16 %v3332
    %v3370 = vpack.c.b16 %v3355, %v3354
    %v3371 = vpack.c.b16 %v3357, %v3356
    %v3372 = vpack.c.b16 %v3359, %v3358
    %v3373 = vpack.c.b16 %v3361, %v3360
    %v3374 = vpack.c.b16 %v3363, %v3362
    %v3375 = vpack.c.b16 %v3365, %v3364
    %v3376 = vpack.c.b16 %v3367, %v3366
    %v3377 = vpack.c.b16 %v3369, %v3368
    %3386 = vmatprep.subr.bf16.mxu0 0
    %3387 = vmatpush1.bf16.msra.mxu0 %v3370
    %3388 = vmatprep.subr.bf16.mxu0 0
    %3389 = vmatpush1.bf16.msra.mxu0 %v3371
    %3390 = vmatprep.subr.bf16.mxu0 0
    %3391 = vmatpush1.bf16.msra.mxu0 %v3372
    %3392 = vmatprep.subr.bf16.mxu0 0
    %3393 = vmatpush1.bf16.msra.mxu0 %v3373
    %3394 = vmatprep.subr.bf16.mxu0 0
    %3395 = vmatpush1.bf16.msra.mxu0 %v3374
    %3396 = vmatprep.subr.bf16.mxu0 0
    %3397 = vmatpush1.bf16.msra.mxu0 %v3375
    %3398 = vmatprep.subr.bf16.mxu0 0
    %3399 = vmatpush1.bf16.msra.mxu0 %v3376
    %3400 = vmatprep.subr.bf16.mxu0 0
    %3401 = vmatpush1.bf16.msra.mxu0 %v3377
    %3402 = vmatprep.subr.bf16.mxu0 0
    %3403 = vmatpush1.bf16.msra.mxu0 0
    %3404 = vmatprep.subr.bf16.mxu0 0
    %3405 = vmatpush1.bf16.msra.mxu0 0
    %3406 = vmatprep.subr.bf16.mxu0 0
    %3407 = vmatpush1.bf16.msra.mxu0 0
    %3408 = vmatprep.subr.bf16.mxu0 0
    %3409 = vmatpush1.bf16.msra.mxu0 0
    %3410 = vmatprep.subr.bf16.mxu0 0
    %3411 = vmatpush1.bf16.msra.mxu0 0
    %3412 = vmatprep.subr.bf16.mxu0 0
    %3413 = vmatpush1.bf16.msra.mxu0 0
    %3414 = vmatprep.subr.bf16.mxu0 0
    %3415 = vmatpush1.bf16.msra.mxu0 0
    %3416 = vmatprep.subr.bf16.mxu0 0
    %3417 = vmatpush1.bf16.msra.mxu0 0
    %3418 = vmatprep.mubr.bf16.mxu0 0
    %3419 = vmatmul.mubr.bf16.gmra.mrb[0].mxu0 %v3333
    %v3420 = vpop.f32.mrb[0].mxu0
    %v3421 = vadd.f32 %v3337, %v3420
    %v3422 = vpop.f32.mrb[0].mxu0
    %v3423 = vpop.f32.mrb[0].mxu0
    %v3424 = vpop.f32.mrb[0].mxu0
    %3425 = vdwg.mxu0
    %vm3426 = vcmask 58368
    %3427 = vst.msk [vmem:[#allocation2] sm:$0x3] %vm3426, %v3421
    // Predicated region
    $region42: #{small_resnet50_cutted_forward.1} parent=1 // pred_check
      _
    $region43: #{small_resnet50_cutted_forward.1} parent=1 // pred_check_branch
      %3429 = sbr.rel (0) target = $region45
    $region44: #{small_resnet50_cutted_forward.1} parent=1 // pred_region
      %s3431 = ssub.s32 32, 32
      %3432 = vsyncadd [#allocation3], %s3431
      %s3434 = sshll.u32 [#allocation2], 4
      %s3435 = int_to_ptr.vmem [resolvable:$true] %s3434
      %3437 = dma.vmem_to_hbm [thread:$0]  %s3435, 32, %s10, [#allocation3]
    $region45: #{small_resnet50_cutted_forward.1} parent=1 // pred_fallthru
      _
    // Predicated region
    $region46: #{small_resnet50_cutted_forward.1} parent=1 // pred_check
      _
    $region47: #{small_resnet50_cutted_forward.1} parent=1 // pred_check_branch
      %3439 = sbr.rel (0) target = $region49
    $region48: #{small_resnet50_cutted_forward.1} parent=1 // pred_region
      %3440 = dma.done [#allocation3], 32
    $region49: #{small_resnet50_cutted_forward.1} parent=1 // pred_fallthru
      _
    %3441 = vsyncpa [#allocation3], 1

</llo_original>
